<compile_context>
chip_gen: v7x
topology: tpu7x:2x2x1
jax: 0.10.0
libtpu: 0.0.40
codegen_flags: <defaults>
</compile_context>

<pallas_src>
import functools

import jax
import jax.numpy as jnp
from jax import lax
from jax.experimental import pallas as pl
from jax.experimental.pallas import tpu as pltpu

LANE = 128                       # vreg lane width
ROW_TILE = 16                    # batch-tile row granularity (bf16 sublane pack)
VMEM_CAP_BYTES = 48 * 1024 * 1024  # budget cap, re-derived for v7x (64 MiB/TC)


def _round_up(n, m):
    return ((n + m - 1) // m) * m


def _pad2d(a, rows, cols, dtype=None):
    a = jnp.pad(a, ((0, rows - a.shape[0]), (0, cols - a.shape[1])))
    return a if dtype is None else a.astype(dtype)


# ---------------------------------------------------------------------------
# Fused forward kernel (one batch tile per grid step).
# ---------------------------------------------------------------------------
def kac_fused_kernel(
    x_ref, zg_ref,                          # bf16 inputs
    we1, be1, we2, be2, we3, be3,           # encoder
    wd1, bd1, wd2, bd2, wd3, bd3,           # decoder
    ws1, bs1, ws2, bs2, ws3, bs3,           # fusion MLP (W1 row-stacked, K=2*hp)
    c_ref, c_sq_ref,                        # cluster layer + ||c||^2 (tail=1e30)
    slab_ref, q_ref,                        # outputs: [x_hat|z_a|s] bf16, q f32
    cat_ref,                                # bf16 scratch (tb, 2*hp)
    *, v, dp, hp,
):
    f32 = jnp.float32
    bf16 = jnp.bfloat16

    def dense(h, w_ref, b_ref):
        # bf16 operands on the MXU, f32 accumulation, f32 bias add.
        return jnp.dot(h.astype(bf16), w_ref[...],
                       preferred_element_type=f32) + b_ref[...]

    # --- encoder: x -> H -> 2H -> H -----------------------------------------
    h = jax.nn.sigmoid(dense(x_ref[...], we1, be1))
    h = jax.nn.sigmoid(dense(h, we2, be2))
    z_a = dense(h, we3, be3)                       # f32 (tb, hp)
    slab_ref[:, dp:dp + hp] = z_a.astype(slab_ref.dtype)

    # --- decoder: H -> 2H -> H -> x_dim --------------------------------------
    h = jax.nn.sigmoid(dense(z_a, wd1, bd1))
    h = jax.nn.sigmoid(dense(h, wd2, bd2))
    slab_ref[:, :dp] = dense(h, wd3, bd3).astype(slab_ref.dtype)

    # --- fusion MLP on cat([z_a, z_g]): 2H -> H -> 2H -> H --------------------
    # Concat built in a bf16 VMEM scratch (two lane-aligned stores) so the
    # first layer runs as ONE K=2*hp dot (fills 256-deep v6e/v7x MXUs).
    cat_ref[:, :hp] = z_a.astype(bf16)
    cat_ref[:, hp:] = zg_ref[...]
    h = jax.nn.sigmoid(
        jnp.dot(cat_ref[...], ws1[...], preferred_element_type=f32) + bs1[...])
    h = jax.nn.sigmoid(dense(h, ws2, bs2))
    s = dense(h, ws3, bs3)                         # f32 (tb, hp)
    slab_ref[:, dp + hp:] = s.astype(slab_ref.dtype)

    # --- Student-t soft assignment (f32) --------------------------------------
    # ||s - c||^2 = ||s||^2 + ||c||^2 - 2 s.c ; padded cluster columns carry
    # ||c||^2 = 1e30 so their q underflows to ~0 before normalization.
    s_sq = jnp.sum(s * s, axis=1, keepdims=True)                     # (tb, 1)
    cross = lax.dot_general(s, c_ref[...],                           # (tb, kp)
                            dimension_numbers=(((1,), (1,)), ((), ())),
                            preferred_element_type=f32)
    d2 = jnp.maximum(s_sq + c_sq_ref[...] - 2.0 * cross, 0.0)
    q = 1.0 / (1.0 + d2 / v)
    exponent = (v + 1.0) / 2.0
    if exponent != 1.0:            # default v=1.0: pow is a no-op -> skip it
        q = q ** exponent
    denom = jnp.sum(q, axis=1, keepdims=True)
    q_ref[...] = q * pl.reciprocal(denom, approx=True)


# ---------------------------------------------------------------------------
# Wrapper: pad to lane-dense shapes, tile the batch, call the fused kernel.
# ---------------------------------------------------------------------------
def kac_forward(params, x, z_g, v=1.0, batch_tile=512):
    n, x_dim = x.shape
    h_dim = z_g.shape[1]
    k = params["cluster_layer"].shape[0]

    f32 = jnp.float32
    bf16 = jnp.bfloat16

    dp = _round_up(x_dim, LANE)
    hp = _round_up(h_dim, LANE)
    h2p = _round_up(2 * h_dim, LANE)
    kp = _round_up(k, LANE)
    slab_w = dp + 2 * hp                     # [x_hat | z_a | s]

    def wpad(w, rows, cols):                 # weights -> bf16, zero-padded
        return _pad2d(w, rows, cols, bf16)

    def bpad(b, cols):                       # biases stay f32
        return _pad2d(b, 1, cols, f32)

    (we1, be1) = params["enc1"]
    (we2, be2) = params["enc2"]
    (we3, be3) = params["enc3"]
    (wd1, bd1) = params["dec1"]
    (wd2, bd2) = params["dec2"]
    (wd3, bd3) = params["dec3"]
    (ws1, bs1) = params["s1"]
    (ws2, bs2) = params["s2"]
    (ws3, bs3) = params["s3"]
    cl = params["cluster_layer"].astype(f32)

    # Row-stacked first fusion-layer weight: rows [0:hp] act on padded z_a,
    # rows [hp:2hp] on padded z_g (matches the kernel's concat scratch layout).
    ws1_packed = jnp.concatenate(
        [wpad(ws1[:h_dim], hp, hp), wpad(ws1[h_dim:], hp, hp)], axis=0)

    # ||c||^2 with the padded tail set to 1e30 (bakes the cluster mask in).
    c_sq = jnp.sum(cl * cl, axis=1)[None, :]
    c_sq_p = jnp.pad(c_sq, ((0, 0), (0, kp - k)), constant_values=1e30)

    weight_args = (
        wpad(we1, dp, hp), bpad(be1, hp),
        wpad(we2, hp, h2p), bpad(be2, h2p),
        wpad(we3, h2p, hp), bpad(be3, hp),
        wpad(wd1, hp, h2p), bpad(bd1, h2p),
        wpad(wd2, h2p, hp), bpad(bd2, hp),
        wpad(wd3, hp, dp), bpad(bd3, dp),
        ws1_packed, bpad(bs1, hp),
        wpad(ws2, hp, h2p), bpad(bs2, h2p),
        wpad(ws3, h2p, hp), bpad(bs3, hp),
        _pad2d(cl, kp, hp, f32),
        c_sq_p,
    )
    weight_bytes = sum(int(a.size) * a.dtype.itemsize for a in weight_args)

    # --- batch tile: big (fewer grid steps), but >=2 steps when n allows so the
    # "parallel" batch axis shards across both v7x TensorCores, and small enough
    # that the explicit VMEM budget stays under the cap.
    tb = min(_round_up(batch_tile, ROW_TILE),
             max(ROW_TILE, _round_up(-(-n // 2), ROW_TILE)))

    def vmem_budget(t):
        in_b = t * dp * 2 + t * hp * 2                 # bf16 input tiles
        out_b = t * slab_w * 2 + t * kp * 4            # bf16 slab + f32 q tiles
        scratch_b = t * (2 * hp) * 2                   # bf16 concat scratch
        interm_b = 6 * t * max(dp, h2p, kp) * 4        # live f32 intermediates
        return 2 * (in_b + out_b) + weight_bytes + scratch_b + interm_b

    while tb > ROW_TILE and vmem_budget(tb) > VMEM_CAP_BYTES:
        tb = max(ROW_TILE, _round_up(tb // 2, ROW_TILE))

    npad = _round_up(n, tb)
    vmem_limit = int(min(max(vmem_budget(tb) + (4 << 20), 32 << 20), 56 << 20))

    # Inputs shipped in bf16 (they are cast to bf16 before every matmul anyway).
    x_p = _pad2d(x, npad, dp, bf16)
    zg_p = _pad2d(z_g, npad, hp, bf16)

    grid = (npad // tb,)
    out_specs = [
        pl.BlockSpec((tb, slab_w), lambda i: (i, 0)),
        pl.BlockSpec((tb, kp), lambda i: (i, 0)),
    ]
    out_shape = [
        jax.ShapeDtypeStruct((npad, slab_w), bf16),
        jax.ShapeDtypeStruct((npad, kp), f32),
    ]

    def build_call(single_buffer_weights):
        if single_buffer_weights:
            # Constant-index weight blocks: single-buffered, no second copy.
            weight_specs = [
                pl.BlockSpec(a.shape, lambda i: (0, 0),
                             pipeline_mode=pl.Buffered(1))
                for a in weight_args
            ]
        else:
            weight_specs = [pl.BlockSpec(a.shape, lambda i: (0, 0))
                            for a in weight_args]
        in_specs = (
            [pl.BlockSpec((tb, dp), lambda i: (i, 0)),
             pl.BlockSpec((tb, hp), lambda i: (i, 0))]
            + weight_specs
        )
        return pl.pallas_call(
            functools.partial(kac_fused_kernel, v=v, dp=dp, hp=hp),
            grid=grid,
            in_specs=in_specs,
            out_specs=out_specs,
            out_shape=out_shape,
            scratch_shapes=[pltpu.VMEM((tb, 2 * hp), bf16)],
            compiler_params=pltpu.CompilerParams(
                dimension_semantics=("parallel",),
                vmem_limit_bytes=vmem_limit),
        )

    try:
        slab, q_p = build_call(True)(x_p, zg_p, *weight_args)
    except Exception:
        # Fallback: default double-buffered weight specs (always supported).
        slab, q_p = build_call(False)(x_p, zg_p, *weight_args)

    x_hat = slab[:n, :x_dim].astype(f32)
    z_a = slab[:n, dp:dp + h_dim].astype(f32)
    s = slab[:n, dp + hp:dp + hp + h_dim].astype(f32)
    q = q_p[:n, :k]
    return x_hat, z_a, z_g, s, q


# ---------------------------------------------------------------------------
# Parameter construction (deterministic, in-script).  Weights are stored as
# (in, out) = W^T of the PyTorch nn.Linear layout so matmuls are plain x @ W.
# ---------------------------------------------------------------------------
def make_linear(key, in_dim, out_dim):
    kw, kb = jax.random.split(key)
    scale = 1.0 / jnp.sqrt(jnp.float32(in_dim))
    w = jax.random.uniform(kw, (in_dim, out_dim), jnp.float32, -scale, scale)
    b = jax.random.uniform(kb, (1, out_dim), jnp.float32, -scale, scale)
    return w, b


def init_kac_params(key, x_dim, out_dim, n_cluster):
    keys = jax.random.split(key, 10)
    params = {
        # AE_encoder: x_dim -> out_dim -> 2*out_dim -> out_dim
        "enc1": make_linear(keys[0], x_dim, out_dim),
        "enc2": make_linear(keys[1], out_dim, 2 * out_dim),
        "enc3": make_linear(keys[2], 2 * out_dim, out_dim),
        # AE_decoder: out_dim -> 2*out_dim -> out_dim -> x_dim
        "dec1": make_linear(keys[3], out_dim, 2 * out_dim),
        "dec2": make_linear(keys[4], 2 * out_dim, out_dim),
        "dec3": make_linear(keys[5], out_dim, x_dim),
        # MLP_fusion: 2*out_dim -> out_dim -> 2*out_dim -> out_dim
        "s1": make_linear(keys[6], 2 * out_dim, out_dim),
        "s2": make_linear(keys[7], out_dim, 2 * out_dim),
        "s3": make_linear(keys[8], 2 * out_dim, out_dim),
    }
    # xavier_normal_ init of cluster_layer (n_cluster, out_dim)
    std = jnp.sqrt(2.0 / (n_cluster + out_dim))
    params["cluster_layer"] = std * jax.random.normal(
        keys[9], (n_cluster, out_dim), jnp.float32)
    return params


# ---------------------------------------------------------------------------
# Pure-JAX reference (same math; mirrors the bf16-operand / f32-accum matmul
# recipe so the comparison isolates kernel correctness, not dtype choice).
# ---------------------------------------------------------------------------
def _ref_forward(params, x, z_g, v=1.0):
    bf16 = jnp.bfloat16

    def dense(h, wb):
        w, b = wb
        return jnp.dot(h.astype(bf16), w.astype(bf16),
                       preferred_element_type=jnp.float32) + b

    def mlp3(h, p1, p2, p3):
        h = jax.nn.sigmoid(dense(h, p1))
        h = jax.nn.sigmoid(dense(h, p2))
        return dense(h, p3)

    z_a = mlp3(x, params["enc1"], params["enc2"], params["enc3"])
    x_hat = mlp3(z_a, params["dec1"], params["dec2"], params["dec3"])
    s = mlp3(jnp.concatenate([z_a, z_g], axis=1),
             params["s1"], params["s2"], params["s3"])
    c = params["cluster_layer"]
    d2 = jnp.sum((s[:, None, :] - c[None, :, :]) ** 2, axis=2)
    q = 1.0 / (1.0 + d2 / v)
    q = q ** ((v + 1.0) / 2.0)
    q = q / jnp.sum(q, axis=1, keepdims=True)
    return x_hat, z_a, z_g, s, q


if __name__ == "__main__":
    batch = 8
    x_dim = 16
    out_dim = 32      # args.out_dim
    n_cluster = 4

    key = jax.random.PRNGKey(0)
    k_params, k_x, k_zg = jax.random.split(key, 3)
    params = init_kac_params(k_params, x_dim, out_dim, n_cluster)

    x = jax.random.normal(k_x, (batch, x_dim), jnp.float32)
    z_g = jax.random.normal(k_zg, (batch, out_dim), jnp.float32)

    outs = kac_forward(params, x, z_g)
    outs = jax.block_until_ready(outs)

    refs = _ref_forward(params, x, z_g)
    # Tolerance covers bf16 matmul accumulation-order differences, the bf16
    # output slab rounding, and the EUP approx reciprocal in the q row-norm.
    for o, r in zip(outs, refs):
        assert o.shape == r.shape, (o.shape, r.shape)
        assert jnp.allclose(o, r, atol=1e-2, rtol=1e-2)

    print("KERNEL_OK")
</pallas_src>

<mosaic_0001>
module attributes {stable_mosaic.version = 11 : i64} {
  func.func @kac_fused_kernel(%arg0: i32, %arg1: memref<16x128xbf16, #tpu.memory_space<vmem>>, %arg2: memref<16x128xbf16, #tpu.memory_space<vmem>>, %arg3: memref<128x128xbf16, #tpu.memory_space<vmem>>, %arg4: memref<1x128xf32, #tpu.memory_space<vmem>>, %arg5: memref<128x128xbf16, #tpu.memory_space<vmem>>, %arg6: memref<1x128xf32, #tpu.memory_space<vmem>>, %arg7: memref<128x128xbf16, #tpu.memory_space<vmem>>, %arg8: memref<1x128xf32, #tpu.memory_space<vmem>>, %arg9: memref<128x128xbf16, #tpu.memory_space<vmem>>, %arg10: memref<1x128xf32, #tpu.memory_space<vmem>>, %arg11: memref<128x128xbf16, #tpu.memory_space<vmem>>, %arg12: memref<1x128xf32, #tpu.memory_space<vmem>>, %arg13: memref<128x128xbf16, #tpu.memory_space<vmem>>, %arg14: memref<1x128xf32, #tpu.memory_space<vmem>>, %arg15: memref<256x128xbf16, #tpu.memory_space<vmem>>, %arg16: memref<1x128xf32, #tpu.memory_space<vmem>>, %arg17: memref<128x128xbf16, #tpu.memory_space<vmem>>, %arg18: memref<1x128xf32, #tpu.memory_space<vmem>>, %arg19: memref<128x128xbf16, #tpu.memory_space<vmem>>, %arg20: memref<1x128xf32, #tpu.memory_space<vmem>>, %arg21: memref<128x128xf32, #tpu.memory_space<vmem>>, %arg22: memref<1x128xf32, #tpu.memory_space<vmem>>, %arg23: memref<16x384xbf16, #tpu.memory_space<vmem>>, %arg24: memref<16x128xf32, #tpu.memory_space<vmem>>, %arg25: memref<16x256xbf16, #tpu.memory_space<vmem>>) attributes {dimension_semantics = [#tpu.dimension_semantics<parallel>], iteration_bounds = array<i64: 1>, scalar_prefetch = 0 : i64, scratch_operands = 1 : i64, tpu.core_type = #tpu.core_type<tc>, window_params = [{transform_indices = @transform_0, window_bounds = array<i64: 16, 128>}, {transform_indices = @transform_1, window_bounds = array<i64: 16, 128>}, {pipeline_mode = #tpu.pipeline_mode<synchronous>, transform_indices = @transform_2, window_bounds = array<i64: 128, 128>}, {pipeline_mode = #tpu.pipeline_mode<synchronous>, transform_indices = @transform_3, window_bounds = array<i64: 1, 128>}, {pipeline_mode = #tpu.pipeline_mode<synchronous>, transform_indices = @transform_4, window_bounds = array<i64: 128, 128>}, {pipeline_mode = #tpu.pipeline_mode<synchronous>, transform_indices = @transform_5, window_bounds = array<i64: 1, 128>}, {pipeline_mode = #tpu.pipeline_mode<synchronous>, transform_indices = @transform_6, window_bounds = array<i64: 128, 128>}, {pipeline_mode = #tpu.pipeline_mode<synchronous>, transform_indices = @transform_7, window_bounds = array<i64: 1, 128>}, {pipeline_mode = #tpu.pipeline_mode<synchronous>, transform_indices = @transform_8, window_bounds = array<i64: 128, 128>}, {pipeline_mode = #tpu.pipeline_mode<synchronous>, transform_indices = @transform_9, window_bounds = array<i64: 1, 128>}, {pipeline_mode = #tpu.pipeline_mode<synchronous>, transform_indices = @transform_10, window_bounds = array<i64: 128, 128>}, {pipeline_mode = #tpu.pipeline_mode<synchronous>, transform_indices = @transform_11, window_bounds = array<i64: 1, 128>}, {pipeline_mode = #tpu.pipeline_mode<synchronous>, transform_indices = @transform_12, window_bounds = array<i64: 128, 128>}, {pipeline_mode = #tpu.pipeline_mode<synchronous>, transform_indices = @transform_13, window_bounds = array<i64: 1, 128>}, {pipeline_mode = #tpu.pipeline_mode<synchronous>, transform_indices = @transform_14, window_bounds = array<i64: 256, 128>}, {pipeline_mode = #tpu.pipeline_mode<synchronous>, transform_indices = @transform_15, window_bounds = array<i64: 1, 128>}, {pipeline_mode = #tpu.pipeline_mode<synchronous>, transform_indices = @transform_16, window_bounds = array<i64: 128, 128>}, {pipeline_mode = #tpu.pipeline_mode<synchronous>, transform_indices = @transform_17, window_bounds = array<i64: 1, 128>}, {pipeline_mode = #tpu.pipeline_mode<synchronous>, transform_indices = @transform_18, window_bounds = array<i64: 128, 128>}, {pipeline_mode = #tpu.pipeline_mode<synchronous>, transform_indices = @transform_19, window_bounds = array<i64: 1, 128>}, {pipeline_mode = #tpu.pipeline_mode<synchronous>, transform_indices = @transform_20, window_bounds = array<i64: 128, 128>}, {pipeline_mode = #tpu.pipeline_mode<synchronous>, transform_indices = @transform_21, window_bounds = array<i64: 1, 128>}, {transform_indices = @transform_22, window_bounds = array<i64: 16, 384>}, {transform_indices = @transform_23, window_bounds = array<i64: 16, 128>}]} {
    %c0 = arith.constant 0 : index
    %c0_0 = arith.constant 0 : index
    %0 = vector.load %arg1[%c0, %c0_0] : memref<16x128xbf16, #tpu.memory_space<vmem>>, vector<16x128xbf16>
    %c0_1 = arith.constant 0 : index
    %c0_2 = arith.constant 0 : index
    %1 = vector.load %arg3[%c0_1, %c0_2] : memref<128x128xbf16, #tpu.memory_space<vmem>>, vector<128x128xbf16>
    %cst = arith.constant dense<0.000000e+00> : vector<16x128xf32>
    %2 = tpu.matmul %0, %1, %cst {dimension_numbers = #tpu.dot_dimension_numbers<[1], [0], [0], [1], [0, 0, 1, 1], [], []>} : vector<16x128xbf16>, vector<128x128xbf16>, vector<16x128xf32> -> vector<16x128xf32>
    %c0_3 = arith.constant 0 : index
    %c0_4 = arith.constant 0 : index
    %3 = vector.load %arg4[%c0_3, %c0_4] : memref<1x128xf32, #tpu.memory_space<vmem>>, vector<1x128xf32>
    %4 = vector.broadcast %3 : vector<1x128xf32> to vector<16x128xf32>
    %5 = arith.addf %2, %4 : vector<16x128xf32>
    %6 = arith.negf %5 : vector<16x128xf32>
    %7 = math.exp %6 : vector<16x128xf32>
    %cst_5 = arith.constant 1.000000e+00 : f32
    %8 = vector.broadcast %cst_5 : f32 to vector<16x128xf32>
    %9 = arith.addf %8, %7 : vector<16x128xf32>
    %10 = arith.divf %8, %9 : vector<16x128xf32>
    %11 = arith.truncf %10 : vector<16x128xf32> to vector<16x128xbf16>
    %c0_6 = arith.constant 0 : index
    %c0_7 = arith.constant 0 : index
    %12 = vector.load %arg5[%c0_6, %c0_7] : memref<128x128xbf16, #tpu.memory_space<vmem>>, vector<128x128xbf16>
    %cst_8 = arith.constant dense<0.000000e+00> : vector<16x128xf32>
    %13 = tpu.matmul %11, %12, %cst_8 {dimension_numbers = #tpu.dot_dimension_numbers<[1], [0], [0], [1], [0, 0, 1, 1], [], []>} : vector<16x128xbf16>, vector<128x128xbf16>, vector<16x128xf32> -> vector<16x128xf32>
    %c0_9 = arith.constant 0 : index
    %c0_10 = arith.constant 0 : index
    %14 = vector.load %arg6[%c0_9, %c0_10] : memref<1x128xf32, #tpu.memory_space<vmem>>, vector<1x128xf32>
    %15 = vector.broadcast %14 : vector<1x128xf32> to vector<16x128xf32>
    %16 = arith.addf %13, %15 : vector<16x128xf32>
    %17 = arith.negf %16 : vector<16x128xf32>
    %18 = math.exp %17 : vector<16x128xf32>
    %cst_11 = arith.constant 1.000000e+00 : f32
    %19 = vector.broadcast %cst_11 : f32 to vector<16x128xf32>
    %20 = arith.addf %19, %18 : vector<16x128xf32>
    %21 = arith.divf %19, %20 : vector<16x128xf32>
    %22 = arith.truncf %21 : vector<16x128xf32> to vector<16x128xbf16>
    %c0_12 = arith.constant 0 : index
    %c0_13 = arith.constant 0 : index
    %23 = vector.load %arg7[%c0_12, %c0_13] : memref<128x128xbf16, #tpu.memory_space<vmem>>, vector<128x128xbf16>
    %cst_14 = arith.constant dense<0.000000e+00> : vector<16x128xf32>
    %24 = tpu.matmul %22, %23, %cst_14 {dimension_numbers = #tpu.dot_dimension_numbers<[1], [0], [0], [1], [0, 0, 1, 1], [], []>} : vector<16x128xbf16>, vector<128x128xbf16>, vector<16x128xf32> -> vector<16x128xf32>
    %c0_15 = arith.constant 0 : index
    %c0_16 = arith.constant 0 : index
    %25 = vector.load %arg8[%c0_15, %c0_16] : memref<1x128xf32, #tpu.memory_space<vmem>>, vector<1x128xf32>
    %26 = vector.broadcast %25 : vector<1x128xf32> to vector<16x128xf32>
    %27 = arith.addf %24, %26 : vector<16x128xf32>
    %28 = arith.truncf %27 : vector<16x128xf32> to vector<16x128xbf16>
    %c0_17 = arith.constant 0 : index
    %c128 = arith.constant 128 : index
    %29 = vector.load %arg23[%c0_17, %c128] : memref<16x384xbf16, #tpu.memory_space<vmem>>, vector<16x128xbf16>
    tpu.vector_store %arg23[%c0_17, %c128], %28 {strides = array<i32>} : memref<16x384xbf16, #tpu.memory_space<vmem>>, vector<16x128xbf16>,
    %30 = arith.truncf %27 : vector<16x128xf32> to vector<16x128xbf16>
    %c0_18 = arith.constant 0 : index
    %c0_19 = arith.constant 0 : index
    %31 = vector.load %arg9[%c0_18, %c0_19] : memref<128x128xbf16, #tpu.memory_space<vmem>>, vector<128x128xbf16>
    %cst_20 = arith.constant dense<0.000000e+00> : vector<16x128xf32>
    %32 = tpu.matmul %30, %31, %cst_20 {dimension_numbers = #tpu.dot_dimension_numbers<[1], [0], [0], [1], [0, 0, 1, 1], [], []>} : vector<16x128xbf16>, vector<128x128xbf16>, vector<16x128xf32> -> vector<16x128xf32>
    %c0_21 = arith.constant 0 : index
    %c0_22 = arith.constant 0 : index
    %33 = vector.load %arg10[%c0_21, %c0_22] : memref<1x128xf32, #tpu.memory_space<vmem>>, vector<1x128xf32>
    %34 = vector.broadcast %33 : vector<1x128xf32> to vector<16x128xf32>
    %35 = arith.addf %32, %34 : vector<16x128xf32>
    %36 = arith.negf %35 : vector<16x128xf32>
    %37 = math.exp %36 : vector<16x128xf32>
    %cst_23 = arith.constant 1.000000e+00 : f32
    %38 = vector.broadcast %cst_23 : f32 to vector<16x128xf32>
    %39 = arith.addf %38, %37 : vector<16x128xf32>
    %40 = arith.divf %38, %39 : vector<16x128xf32>
    %41 = arith.truncf %40 : vector<16x128xf32> to vector<16x128xbf16>
    %c0_24 = arith.constant 0 : index
    %c0_25 = arith.constant 0 : index
    %42 = vector.load %arg11[%c0_24, %c0_25] : memref<128x128xbf16, #tpu.memory_space<vmem>>, vector<128x128xbf16>
    %cst_26 = arith.constant dense<0.000000e+00> : vector<16x128xf32>
    %43 = tpu.matmul %41, %42, %cst_26 {dimension_numbers = #tpu.dot_dimension_numbers<[1], [0], [0], [1], [0, 0, 1, 1], [], []>} : vector<16x128xbf16>, vector<128x128xbf16>, vector<16x128xf32> -> vector<16x128xf32>
    %c0_27 = arith.constant 0 : index
    %c0_28 = arith.constant 0 : index
    %44 = vector.load %arg12[%c0_27, %c0_28] : memref<1x128xf32, #tpu.memory_space<vmem>>, vector<1x128xf32>
    %45 = vector.broadcast %44 : vector<1x128xf32> to vector<16x128xf32>
    %46 = arith.addf %43, %45 : vector<16x128xf32>
    %47 = arith.negf %46 : vector<16x128xf32>
    %48 = math.exp %47 : vector<16x128xf32>
    %cst_29 = arith.constant 1.000000e+00 : f32
    %49 = vector.broadcast %cst_29 : f32 to vector<16x128xf32>
    %50 = arith.addf %49, %48 : vector<16x128xf32>
    %51 = arith.divf %49, %50 : vector<16x128xf32>
    %52 = arith.truncf %51 : vector<16x128xf32> to vector<16x128xbf16>
    %c0_30 = arith.constant 0 : index
    %c0_31 = arith.constant 0 : index
    %53 = vector.load %arg13[%c0_30, %c0_31] : memref<128x128xbf16, #tpu.memory_space<vmem>>, vector<128x128xbf16>
    %cst_32 = arith.constant dense<0.000000e+00> : vector<16x128xf32>
    %54 = tpu.matmul %52, %53, %cst_32 {dimension_numbers = #tpu.dot_dimension_numbers<[1], [0], [0], [1], [0, 0, 1, 1], [], []>} : vector<16x128xbf16>, vector<128x128xbf16>, vector<16x128xf32> -> vector<16x128xf32>
    %c0_33 = arith.constant 0 : index
    %c0_34 = arith.constant 0 : index
    %55 = vector.load %arg14[%c0_33, %c0_34] : memref<1x128xf32, #tpu.memory_space<vmem>>, vector<1x128xf32>
    %56 = vector.broadcast %55 : vector<1x128xf32> to vector<16x128xf32>
    %57 = arith.addf %54, %56 : vector<16x128xf32>
    %58 = arith.truncf %57 : vector<16x128xf32> to vector<16x128xbf16>
    %c0_35 = arith.constant 0 : index
    %c0_36 = arith.constant 0 : index
    %59 = vector.load %arg23[%c0_35, %c0_36] : memref<16x384xbf16, #tpu.memory_space<vmem>>, vector<16x128xbf16>
    tpu.vector_store %arg23[%c0_35, %c0_36], %58 {strides = array<i32>} : memref<16x384xbf16, #tpu.memory_space<vmem>>, vector<16x128xbf16>,
    %60 = arith.truncf %27 : vector<16x128xf32> to vector<16x128xbf16>
    %c0_37 = arith.constant 0 : index
    %c0_38 = arith.constant 0 : index
    %61 = vector.load %arg25[%c0_37, %c0_38] : memref<16x256xbf16, #tpu.memory_space<vmem>>, vector<16x128xbf16>
    tpu.vector_store %arg25[%c0_37, %c0_38], %60 {strides = array<i32>} : memref<16x256xbf16, #tpu.memory_space<vmem>>, vector<16x128xbf16>,
    %c0_39 = arith.constant 0 : index
    %c0_40 = arith.constant 0 : index
    %62 = vector.load %arg2[%c0_39, %c0_40] : memref<16x128xbf16, #tpu.memory_space<vmem>>, vector<16x128xbf16>
    %c0_41 = arith.constant 0 : index
    %c128_42 = arith.constant 128 : index
    %63 = vector.load %arg25[%c0_41, %c128_42] : memref<16x256xbf16, #tpu.memory_space<vmem>>, vector<16x128xbf16>
    tpu.vector_store %arg25[%c0_41, %c128_42], %62 {strides = array<i32>} : memref<16x256xbf16, #tpu.memory_space<vmem>>, vector<16x128xbf16>,
    %c0_43 = arith.constant 0 : index
    %c0_44 = arith.constant 0 : index
    %64 = vector.load %arg25[%c0_43, %c0_44] : memref<16x256xbf16, #tpu.memory_space<vmem>>, vector<16x256xbf16>
    %c0_45 = arith.constant 0 : index
    %c0_46 = arith.constant 0 : index
    %65 = vector.load %arg15[%c0_45, %c0_46] : memref<256x128xbf16, #tpu.memory_space<vmem>>, vector<256x128xbf16>
    %cst_47 = arith.constant dense<0.000000e+00> : vector<16x128xf32>
    %66 = tpu.matmul %64, %65, %cst_47 {dimension_numbers = #tpu.dot_dimension_numbers<[1], [0], [0], [1], [0, 0, 1, 1], [], []>} : vector<16x256xbf16>, vector<256x128xbf16>, vector<16x128xf32> -> vector<16x128xf32>
    %c0_48 = arith.constant 0 : index
    %c0_49 = arith.constant 0 : index
    %67 = vector.load %arg16[%c0_48, %c0_49] : memref<1x128xf32, #tpu.memory_space<vmem>>, vector<1x128xf32>
    %68 = vector.broadcast %67 : vector<1x128xf32> to vector<16x128xf32>
    %69 = arith.addf %66, %68 : vector<16x128xf32>
    %70 = arith.negf %69 : vector<16x128xf32>
    %71 = math.exp %70 : vector<16x128xf32>
    %cst_50 = arith.constant 1.000000e+00 : f32
    %72 = vector.broadcast %cst_50 : f32 to vector<16x128xf32>
    %73 = arith.addf %72, %71 : vector<16x128xf32>
    %74 = arith.divf %72, %73 : vector<16x128xf32>
    %75 = arith.truncf %74 : vector<16x128xf32> to vector<16x128xbf16>
    %c0_51 = arith.constant 0 : index
    %c0_52 = arith.constant 0 : index
    %76 = vector.load %arg17[%c0_51, %c0_52] : memref<128x128xbf16, #tpu.memory_space<vmem>>, vector<128x128xbf16>
    %cst_53 = arith.constant dense<0.000000e+00> : vector<16x128xf32>
    %77 = tpu.matmul %75, %76, %cst_53 {dimension_numbers = #tpu.dot_dimension_numbers<[1], [0], [0], [1], [0, 0, 1, 1], [], []>} : vector<16x128xbf16>, vector<128x128xbf16>, vector<16x128xf32> -> vector<16x128xf32>
    %c0_54 = arith.constant 0 : index
    %c0_55 = arith.constant 0 : index
    %78 = vector.load %arg18[%c0_54, %c0_55] : memref<1x128xf32, #tpu.memory_space<vmem>>, vector<1x128xf32>
    %79 = vector.broadcast %78 : vector<1x128xf32> to vector<16x128xf32>
    %80 = arith.addf %77, %79 : vector<16x128xf32>
    %81 = arith.negf %80 : vector<16x128xf32>
    %82 = math.exp %81 : vector<16x128xf32>
    %cst_56 = arith.constant 1.000000e+00 : f32
    %83 = vector.broadcast %cst_56 : f32 to vector<16x128xf32>
    %84 = arith.addf %83, %82 : vector<16x128xf32>
    %85 = arith.divf %83, %84 : vector<16x128xf32>
    %86 = arith.truncf %85 : vector<16x128xf32> to vector<16x128xbf16>
    %c0_57 = arith.constant 0 : index
    %c0_58 = arith.constant 0 : index
    %87 = vector.load %arg19[%c0_57, %c0_58] : memref<128x128xbf16, #tpu.memory_space<vmem>>, vector<128x128xbf16>
    %cst_59 = arith.constant dense<0.000000e+00> : vector<16x128xf32>
    %88 = tpu.matmul %86, %87, %cst_59 {dimension_numbers = #tpu.dot_dimension_numbers<[1], [0], [0], [1], [0, 0, 1, 1], [], []>} : vector<16x128xbf16>, vector<128x128xbf16>, vector<16x128xf32> -> vector<16x128xf32>
    %c0_60 = arith.constant 0 : index
    %c0_61 = arith.constant 0 : index
    %89 = vector.load %arg20[%c0_60, %c0_61] : memref<1x128xf32, #tpu.memory_space<vmem>>, vector<1x128xf32>
    %90 = vector.broadcast %89 : vector<1x128xf32> to vector<16x128xf32>
    %91 = arith.addf %88, %90 : vector<16x128xf32>
    %92 = arith.truncf %91 : vector<16x128xf32> to vector<16x128xbf16>
    %c0_62 = arith.constant 0 : index
    %c256 = arith.constant 256 : index
    %93 = vector.load %arg23[%c0_62, %c256] : memref<16x384xbf16, #tpu.memory_space<vmem>>, vector<16x128xbf16>
    tpu.vector_store %arg23[%c0_62, %c256], %92 {strides = array<i32>} : memref<16x384xbf16, #tpu.memory_space<vmem>>, vector<16x128xbf16>,
    %94 = arith.mulf %91, %91 : vector<16x128xf32>
    %cst_63 = arith.constant dense<0.000000e+00> : vector<16xf32>
    %95 = vector.multi_reduction <add>, %94, %cst_63 [1] : vector<16x128xf32> to vector<16xf32>
    %96 = vector.shape_cast %95 : vector<16xf32> to vector<16x1xf32>
    %c0_64 = arith.constant 0 : index
    %c0_65 = arith.constant 0 : index
    %97 = vector.load %arg21[%c0_64, %c0_65] : memref<128x128xf32, #tpu.memory_space<vmem>>, vector<128x128xf32>
    %cst_66 = arith.constant dense<0.000000e+00> : vector<16x128xf32>
    %98 = tpu.matmul %91, %97, %cst_66 {dimension_numbers = #tpu.dot_dimension_numbers<[1], [1], [0], [0], [0, 0, 1, 0], [], []>} : vector<16x128xf32>, vector<128x128xf32>, vector<16x128xf32> -> vector<16x128xf32>
    %c0_67 = arith.constant 0 : index
    %c0_68 = arith.constant 0 : index
    %99 = vector.load %arg22[%c0_67, %c0_68] : memref<1x128xf32, #tpu.memory_space<vmem>>, vector<1x128xf32>
    %100 = vector.broadcast %96 : vector<16x1xf32> to vector<16x128xf32>
    %101 = vector.broadcast %99 : vector<1x128xf32> to vector<16x128xf32>
    %102 = arith.addf %100, %101 : vector<16x128xf32>
    %cst_69 = arith.constant 2.000000e+00 : f32
    %103 = vector.broadcast %cst_69 : f32 to vector<16x128xf32>
    %104 = arith.mulf %103, %98 : vector<16x128xf32>
    %105 = arith.subf %102, %104 : vector<16x128xf32>
    %cst_70 = arith.constant 0.000000e+00 : f32
    %106 = vector.broadcast %cst_70 : f32 to vector<16x128xf32>
    %107 = arith.maximumf %105, %106 : vector<16x128xf32>
    %cst_71 = arith.constant 1.000000e+00 : f32
    %108 = vector.broadcast %cst_71 : f32 to vector<16x128xf32>
    %109 = arith.divf %107, %108 : vector<16x128xf32>
    %cst_72 = arith.constant 1.000000e+00 : f32
    %110 = vector.broadcast %cst_72 : f32 to vector<16x128xf32>
    %111 = arith.addf %110, %109 : vector<16x128xf32>
    %cst_73 = arith.constant 1.000000e+00 : f32
    %112 = vector.broadcast %cst_73 : f32 to vector<16x128xf32>
    %113 = arith.divf %112, %111 : vector<16x128xf32>
    %cst_74 = arith.constant dense<0.000000e+00> : vector<16xf32>
    %114 = vector.multi_reduction <add>, %113, %cst_74 [1] : vector<16x128xf32> to vector<16xf32>
    %115 = vector.shape_cast %114 : vector<16xf32> to vector<16x1xf32>
    %116 = tpu.reciprocal %115 {approx = true} : vector<16x1xf32> -> vector<16x1xf32>
    %117 = vector.broadcast %116 : vector<16x1xf32> to vector<16x128xf32>
    %118 = arith.mulf %113, %117 : vector<16x128xf32>
    %c0_75 = arith.constant 0 : index
    %c0_76 = arith.constant 0 : index
    %119 = vector.load %arg24[%c0_75, %c0_76] : memref<16x128xf32, #tpu.memory_space<vmem>>, vector<16x128xf32>
    tpu.vector_store %arg24[%c0_75, %c0_76], %118 {strides = array<i32>} : memref<16x128xf32, #tpu.memory_space<vmem>>, vector<16x128xf32>,
    return
  }
  func.func @transform_0(%arg0: i32) -> (i32, i32) {
    %c0_i32 = arith.constant 0 : i32
    %c0_i32_0 = arith.constant 0 : i32
    return %arg0, %c0_i32 : i32, i32
  }
  func.func @transform_1(%arg0: i32) -> (i32, i32) {
    %c0_i32 = arith.constant 0 : i32
    %c0_i32_0 = arith.constant 0 : i32
    return %arg0, %c0_i32 : i32, i32
  }
  func.func @transform_2(%arg0: i32) -> (i32, i32) {
    %c0_i32 = arith.constant 0 : i32
    %c0_i32_0 = arith.constant 0 : i32
    %c0_i32_1 = arith.constant 0 : i32
    return %c0_i32, %c0_i32_0 : i32, i32
  }
  func.func @transform_3(%arg0: i32) -> (i32, i32) {
    %c0_i32 = arith.constant 0 : i32
    %c0_i32_0 = arith.constant 0 : i32
    %c0_i32_1 = arith.constant 0 : i32
    return %c0_i32, %c0_i32_0 : i32, i32
  }
  func.func @transform_4(%arg0: i32) -> (i32, i32) {
    %c0_i32 = arith.constant 0 : i32
    %c0_i32_0 = arith.constant 0 : i32
    %c0_i32_1 = arith.constant 0 : i32
    return %c0_i32, %c0_i32_0 : i32, i32
  }
  func.func @transform_5(%arg0: i32) -> (i32, i32) {
    %c0_i32 = arith.constant 0 : i32
    %c0_i32_0 = arith.constant 0 : i32
    %c0_i32_1 = arith.constant 0 : i32
    return %c0_i32, %c0_i32_0 : i32, i32
  }
  func.func @transform_6(%arg0: i32) -> (i32, i32) {
    %c0_i32 = arith.constant 0 : i32
    %c0_i32_0 = arith.constant 0 : i32
    %c0_i32_1 = arith.constant 0 : i32
    return %c0_i32, %c0_i32_0 : i32, i32
  }
  func.func @transform_7(%arg0: i32) -> (i32, i32) {
    %c0_i32 = arith.constant 0 : i32
    %c0_i32_0 = arith.constant 0 : i32
    %c0_i32_1 = arith.constant 0 : i32
    return %c0_i32, %c0_i32_0 : i32, i32
  }
  func.func @transform_8(%arg0: i32) -> (i32, i32) {
    %c0_i32 = arith.constant 0 : i32
    %c0_i32_0 = arith.constant 0 : i32
    %c0_i32_1 = arith.constant 0 : i32
    return %c0_i32, %c0_i32_0 : i32, i32
  }
  func.func @transform_9(%arg0: i32) -> (i32, i32) {
    %c0_i32 = arith.constant 0 : i32
    %c0_i32_0 = arith.constant 0 : i32
    %c0_i32_1 = arith.constant 0 : i32
    return %c0_i32, %c0_i32_0 : i32, i32
  }
  func.func @transform_10(%arg0: i32) -> (i32, i32) {
    %c0_i32 = arith.constant 0 : i32
    %c0_i32_0 = arith.constant 0 : i32
    %c0_i32_1 = arith.constant 0 : i32
    return %c0_i32, %c0_i32_0 : i32, i32
  }
  func.func @transform_11(%arg0: i32) -> (i32, i32) {
    %c0_i32 = arith.constant 0 : i32
    %c0_i32_0 = arith.constant 0 : i32
    %c0_i32_1 = arith.constant 0 : i32
    return %c0_i32, %c0_i32_0 : i32, i32
  }
  func.func @transform_12(%arg0: i32) -> (i32, i32) {
    %c0_i32 = arith.constant 0 : i32
    %c0_i32_0 = arith.constant 0 : i32
    %c0_i32_1 = arith.constant 0 : i32
    return %c0_i32, %c0_i32_0 : i32, i32
  }
  func.func @transform_13(%arg0: i32) -> (i32, i32) {
    %c0_i32 = arith.constant 0 : i32
    %c0_i32_0 = arith.constant 0 : i32
    %c0_i32_1 = arith.constant 0 : i32
    return %c0_i32, %c0_i32_0 : i32, i32
  }
  func.func @transform_14(%arg0: i32) -> (i32, i32) {
    %c0_i32 = arith.constant 0 : i32
    %c0_i32_0 = arith.constant 0 : i32
    %c0_i32_1 = arith.constant 0 : i32
    return %c0_i32, %c0_i32_0 : i32, i32
  }
  func.func @transform_15(%arg0: i32) -> (i32, i32) {
    %c0_i32 = arith.constant 0 : i32
    %c0_i32_0 = arith.constant 0 : i32
    %c0_i32_1 = arith.constant 0 : i32
    return %c0_i32, %c0_i32_0 : i32, i32
  }
  func.func @transform_16(%arg0: i32) -> (i32, i32) {
    %c0_i32 = arith.constant 0 : i32
    %c0_i32_0 = arith.constant 0 : i32
    %c0_i32_1 = arith.constant 0 : i32
    return %c0_i32, %c0_i32_0 : i32, i32
  }
  func.func @transform_17(%arg0: i32) -> (i32, i32) {
    %c0_i32 = arith.constant 0 : i32
    %c0_i32_0 = arith.constant 0 : i32
    %c0_i32_1 = arith.constant 0 : i32
    return %c0_i32, %c0_i32_0 : i32, i32
  }
  func.func @transform_18(%arg0: i32) -> (i32, i32) {
    %c0_i32 = arith.constant 0 : i32
    %c0_i32_0 = arith.constant 0 : i32
    %c0_i32_1 = arith.constant 0 : i32
    return %c0_i32, %c0_i32_0 : i32, i32
  }
  func.func @transform_19(%arg0: i32) -> (i32, i32) {
    %c0_i32 = arith.constant 0 : i32
    %c0_i32_0 = arith.constant 0 : i32
    %c0_i32_1 = arith.constant 0 : i32
    return %c0_i32, %c0_i32_0 : i32, i32
  }
  func.func @transform_20(%arg0: i32) -> (i32, i32) {
    %c0_i32 = arith.constant 0 : i32
    %c0_i32_0 = arith.constant 0 : i32
    %c0_i32_1 = arith.constant 0 : i32
    return %c0_i32, %c0_i32_0 : i32, i32
  }
  func.func @transform_21(%arg0: i32) -> (i32, i32) {
    %c0_i32 = arith.constant 0 : i32
    %c0_i32_0 = arith.constant 0 : i32
    %c0_i32_1 = arith.constant 0 : i32
    return %c0_i32, %c0_i32_0 : i32, i32
  }
  func.func @transform_22(%arg0: i32) -> (i32, i32) {
    %c0_i32 = arith.constant 0 : i32
    %c0_i32_0 = arith.constant 0 : i32
    return %arg0, %c0_i32 : i32, i32
  }
  func.func @transform_23(%arg0: i32) -> (i32, i32) {
    %c0_i32 = arith.constant 0 : i32
    %c0_i32_0 = arith.constant 0 : i32
    return %arg0, %c0_i32 : i32, i32
  }
}

module attributes {stable_mosaic.version = 11 : i64} {
  func.func @kac_fused_kernel(%arg0: i32, %arg1: memref<16x128xbf16, #tpu.memory_space<vmem>>, %arg2: memref<16x128xbf16, #tpu.memory_space<vmem>>, %arg3: memref<128x128xbf16, #tpu.memory_space<vmem>>, %arg4: memref<1x128xf32, #tpu.memory_space<vmem>>, %arg5: memref<128x128xbf16, #tpu.memory_space<vmem>>, %arg6: memref<1x128xf32, #tpu.memory_space<vmem>>, %arg7: memref<128x128xbf16, #tpu.memory_space<vmem>>, %arg8: memref<1x128xf32, #tpu.memory_space<vmem>>, %arg9: memref<128x128xbf16, #tpu.memory_space<vmem>>, %arg10: memref<1x128xf32, #tpu.memory_space<vmem>>, %arg11: memref<128x128xbf16, #tpu.memory_space<vmem>>, %arg12: memref<1x128xf32, #tpu.memory_space<vmem>>, %arg13: memref<128x128xbf16, #tpu.memory_space<vmem>>, %arg14: memref<1x128xf32, #tpu.memory_space<vmem>>, %arg15: memref<256x128xbf16, #tpu.memory_space<vmem>>, %arg16: memref<1x128xf32, #tpu.memory_space<vmem>>, %arg17: memref<128x128xbf16, #tpu.memory_space<vmem>>, %arg18: memref<1x128xf32, #tpu.memory_space<vmem>>, %arg19: memref<128x128xbf16, #tpu.memory_space<vmem>>, %arg20: memref<1x128xf32, #tpu.memory_space<vmem>>, %arg21: memref<128x128xf32, #tpu.memory_space<vmem>>, %arg22: memref<1x128xf32, #tpu.memory_space<vmem>>, %arg23: memref<16x384xbf16, #tpu.memory_space<vmem>>, %arg24: memref<16x128xf32, #tpu.memory_space<vmem>>, %arg25: memref<16x256xbf16, #tpu.memory_space<vmem>>) attributes {dimension_semantics = [#tpu.dimension_semantics<parallel>], iteration_bounds = array<i64: 1>, scalar_prefetch = 0 : i64, scratch_operands = 1 : i64, tpu.core_type = #tpu.core_type<tc>, window_params = [{transform_indices = @transform_0, window_bounds = array<i64: 16, 128>}, {transform_indices = @transform_1, window_bounds = array<i64: 16, 128>}, {pipeline_mode = #tpu.pipeline_mode<synchronous>, transform_indices = @transform_2, window_bounds = array<i64: 128, 128>}, {pipeline_mode = #tpu.pipeline_mode<synchronous>, transform_indices = @transform_3, window_bounds = array<i64: 1, 128>}, {pipeline_mode = #tpu.pipeline_mode<synchronous>, transform_indices = @transform_4, window_bounds = array<i64: 128, 128>}, {pipeline_mode = #tpu.pipeline_mode<synchronous>, transform_indices = @transform_5, window_bounds = array<i64: 1, 128>}, {pipeline_mode = #tpu.pipeline_mode<synchronous>, transform_indices = @transform_6, window_bounds = array<i64: 128, 128>}, {pipeline_mode = #tpu.pipeline_mode<synchronous>, transform_indices = @transform_7, window_bounds = array<i64: 1, 128>}, {pipeline_mode = #tpu.pipeline_mode<synchronous>, transform_indices = @transform_8, window_bounds = array<i64: 128, 128>}, {pipeline_mode = #tpu.pipeline_mode<synchronous>, transform_indices = @transform_9, window_bounds = array<i64: 1, 128>}, {pipeline_mode = #tpu.pipeline_mode<synchronous>, transform_indices = @transform_10, window_bounds = array<i64: 128, 128>}, {pipeline_mode = #tpu.pipeline_mode<synchronous>, transform_indices = @transform_11, window_bounds = array<i64: 1, 128>}, {pipeline_mode = #tpu.pipeline_mode<synchronous>, transform_indices = @transform_12, window_bounds = array<i64: 128, 128>}, {pipeline_mode = #tpu.pipeline_mode<synchronous>, transform_indices = @transform_13, window_bounds = array<i64: 1, 128>}, {pipeline_mode = #tpu.pipeline_mode<synchronous>, transform_indices = @transform_14, window_bounds = array<i64: 256, 128>}, {pipeline_mode = #tpu.pipeline_mode<synchronous>, transform_indices = @transform_15, window_bounds = array<i64: 1, 128>}, {pipeline_mode = #tpu.pipeline_mode<synchronous>, transform_indices = @transform_16, window_bounds = array<i64: 128, 128>}, {pipeline_mode = #tpu.pipeline_mode<synchronous>, transform_indices = @transform_17, window_bounds = array<i64: 1, 128>}, {pipeline_mode = #tpu.pipeline_mode<synchronous>, transform_indices = @transform_18, window_bounds = array<i64: 128, 128>}, {pipeline_mode = #tpu.pipeline_mode<synchronous>, transform_indices = @transform_19, window_bounds = array<i64: 1, 128>}, {pipeline_mode = #tpu.pipeline_mode<synchronous>, transform_indices = @transform_20, window_bounds = array<i64: 128, 128>}, {pipeline_mode = #tpu.pipeline_mode<synchronous>, transform_indices = @transform_21, window_bounds = array<i64: 1, 128>}, {transform_indices = @transform_22, window_bounds = array<i64: 16, 384>}, {transform_indices = @transform_23, window_bounds = array<i64: 16, 128>}]} {
    %c0 = arith.constant 0 : index
    %c0_0 = arith.constant 0 : index
    %0 = vector.load %arg1[%c0, %c0_0] : memref<16x128xbf16, #tpu.memory_space<vmem>>, vector<16x128xbf16>
    %c0_1 = arith.constant 0 : index
    %c0_2 = arith.constant 0 : index
    %1 = vector.load %arg3[%c0_1, %c0_2] : memref<128x128xbf16, #tpu.memory_space<vmem>>, vector<128x128xbf16>
    %cst = arith.constant dense<0.000000e+00> : vector<16x128xf32>
    %2 = tpu.matmul %0, %1, %cst {dimension_numbers = #tpu.dot_dimension_numbers<[1], [0], [0], [1], [0, 0, 1, 1], [], []>} : vector<16x128xbf16>, vector<128x128xbf16>, vector<16x128xf32> -> vector<16x128xf32>
    %c0_3 = arith.constant 0 : index
    %c0_4 = arith.constant 0 : index
    %3 = vector.load %arg4[%c0_3, %c0_4] : memref<1x128xf32, #tpu.memory_space<vmem>>, vector<1x128xf32>
    %4 = vector.broadcast %3 : vector<1x128xf32> to vector<16x128xf32>
    %5 = arith.addf %2, %4 : vector<16x128xf32>
    %6 = arith.negf %5 : vector<16x128xf32>
    %7 = math.exp %6 : vector<16x128xf32>
    %cst_5 = arith.constant 1.000000e+00 : f32
    %8 = vector.broadcast %cst_5 : f32 to vector<16x128xf32>
    %9 = arith.addf %8, %7 : vector<16x128xf32>
    %10 = arith.divf %8, %9 : vector<16x128xf32>
    %11 = arith.truncf %10 : vector<16x128xf32> to vector<16x128xbf16>
    %c0_6 = arith.constant 0 : index
    %c0_7 = arith.constant 0 : index
    %12 = vector.load %arg5[%c0_6, %c0_7] : memref<128x128xbf16, #tpu.memory_space<vmem>>, vector<128x128xbf16>
    %cst_8 = arith.constant dense<0.000000e+00> : vector<16x128xf32>
    %13 = tpu.matmul %11, %12, %cst_8 {dimension_numbers = #tpu.dot_dimension_numbers<[1], [0], [0], [1], [0, 0, 1, 1], [], []>} : vector<16x128xbf16>, vector<128x128xbf16>, vector<16x128xf32> -> vector<16x128xf32>
    %c0_9 = arith.constant 0 : index
    %c0_10 = arith.constant 0 : index
    %14 = vector.load %arg6[%c0_9, %c0_10] : memref<1x128xf32, #tpu.memory_space<vmem>>, vector<1x128xf32>
    %15 = vector.broadcast %14 : vector<1x128xf32> to vector<16x128xf32>
    %16 = arith.addf %13, %15 : vector<16x128xf32>
    %17 = arith.negf %16 : vector<16x128xf32>
    %18 = math.exp %17 : vector<16x128xf32>
    %cst_11 = arith.constant 1.000000e+00 : f32
    %19 = vector.broadcast %cst_11 : f32 to vector<16x128xf32>
    %20 = arith.addf %19, %18 : vector<16x128xf32>
    %21 = arith.divf %19, %20 : vector<16x128xf32>
    %22 = arith.truncf %21 : vector<16x128xf32> to vector<16x128xbf16>
    %c0_12 = arith.constant 0 : index
    %c0_13 = arith.constant 0 : index
    %23 = vector.load %arg7[%c0_12, %c0_13] : memref<128x128xbf16, #tpu.memory_space<vmem>>, vector<128x128xbf16>
    %cst_14 = arith.constant dense<0.000000e+00> : vector<16x128xf32>
    %24 = tpu.matmul %22, %23, %cst_14 {dimension_numbers = #tpu.dot_dimension_numbers<[1], [0], [0], [1], [0, 0, 1, 1], [], []>} : vector<16x128xbf16>, vector<128x128xbf16>, vector<16x128xf32> -> vector<16x128xf32>
    %c0_15 = arith.constant 0 : index
    %c0_16 = arith.constant 0 : index
    %25 = vector.load %arg8[%c0_15, %c0_16] : memref<1x128xf32, #tpu.memory_space<vmem>>, vector<1x128xf32>
    %26 = vector.broadcast %25 : vector<1x128xf32> to vector<16x128xf32>
    %27 = arith.addf %24, %26 : vector<16x128xf32>
    %28 = arith.truncf %27 : vector<16x128xf32> to vector<16x128xbf16>
    %c0_17 = arith.constant 0 : index
    %c128 = arith.constant 128 : index
    %29 = vector.load %arg23[%c0_17, %c128] : memref<16x384xbf16, #tpu.memory_space<vmem>>, vector<16x128xbf16>
    tpu.vector_store %arg23[%c0_17, %c128], %28 {strides = array<i32>} : memref<16x384xbf16, #tpu.memory_space<vmem>>, vector<16x128xbf16>,
    %30 = arith.truncf %27 : vector<16x128xf32> to vector<16x128xbf16>
    %c0_18 = arith.constant 0 : index
    %c0_19 = arith.constant 0 : index
    %31 = vector.load %arg9[%c0_18, %c0_19] : memref<128x128xbf16, #tpu.memory_space<vmem>>, vector<128x128xbf16>
    %cst_20 = arith.constant dense<0.000000e+00> : vector<16x128xf32>
    %32 = tpu.matmul %30, %31, %cst_20 {dimension_numbers = #tpu.dot_dimension_numbers<[1], [0], [0], [1], [0, 0, 1, 1], [], []>} : vector<16x128xbf16>, vector<128x128xbf16>, vector<16x128xf32> -> vector<16x128xf32>
    %c0_21 = arith.constant 0 : index
    %c0_22 = arith.constant 0 : index
    %33 = vector.load %arg10[%c0_21, %c0_22] : memref<1x128xf32, #tpu.memory_space<vmem>>, vector<1x128xf32>
    %34 = vector.broadcast %33 : vector<1x128xf32> to vector<16x128xf32>
    %35 = arith.addf %32, %34 : vector<16x128xf32>
    %36 = arith.negf %35 : vector<16x128xf32>
    %37 = math.exp %36 : vector<16x128xf32>
    %cst_23 = arith.constant 1.000000e+00 : f32
    %38 = vector.broadcast %cst_23 : f32 to vector<16x128xf32>
    %39 = arith.addf %38, %37 : vector<16x128xf32>
    %40 = arith.divf %38, %39 : vector<16x128xf32>
    %41 = arith.truncf %40 : vector<16x128xf32> to vector<16x128xbf16>
    %c0_24 = arith.constant 0 : index
    %c0_25 = arith.constant 0 : index
    %42 = vector.load %arg11[%c0_24, %c0_25] : memref<128x128xbf16, #tpu.memory_space<vmem>>, vector<128x128xbf16>
    %cst_26 = arith.constant dense<0.000000e+00> : vector<16x128xf32>
    %43 = tpu.matmul %41, %42, %cst_26 {dimension_numbers = #tpu.dot_dimension_numbers<[1], [0], [0], [1], [0, 0, 1, 1], [], []>} : vector<16x128xbf16>, vector<128x128xbf16>, vector<16x128xf32> -> vector<16x128xf32>
    %c0_27 = arith.constant 0 : index
    %c0_28 = arith.constant 0 : index
    %44 = vector.load %arg12[%c0_27, %c0_28] : memref<1x128xf32, #tpu.memory_space<vmem>>, vector<1x128xf32>
    %45 = vector.broadcast %44 : vector<1x128xf32> to vector<16x128xf32>
    %46 = arith.addf %43, %45 : vector<16x128xf32>
    %47 = arith.negf %46 : vector<16x128xf32>
    %48 = math.exp %47 : vector<16x128xf32>
    %cst_29 = arith.constant 1.000000e+00 : f32
    %49 = vector.broadcast %cst_29 : f32 to vector<16x128xf32>
    %50 = arith.addf %49, %48 : vector<16x128xf32>
    %51 = arith.divf %49, %50 : vector<16x128xf32>
    %52 = arith.truncf %51 : vector<16x128xf32> to vector<16x128xbf16>
    %c0_30 = arith.constant 0 : index
    %c0_31 = arith.constant 0 : index
    %53 = vector.load %arg13[%c0_30, %c0_31] : memref<128x128xbf16, #tpu.memory_space<vmem>>, vector<128x128xbf16>
    %cst_32 = arith.constant dense<0.000000e+00> : vector<16x128xf32>
    %54 = tpu.matmul %52, %53, %cst_32 {dimension_numbers = #tpu.dot_dimension_numbers<[1], [0], [0], [1], [0, 0, 1, 1], [], []>} : vector<16x128xbf16>, vector<128x128xbf16>, vector<16x128xf32> -> vector<16x128xf32>
    %c0_33 = arith.constant 0 : index
    %c0_34 = arith.constant 0 : index
    %55 = vector.load %arg14[%c0_33, %c0_34] : memref<1x128xf32, #tpu.memory_space<vmem>>, vector<1x128xf32>
    %56 = vector.broadcast %55 : vector<1x128xf32> to vector<16x128xf32>
    %57 = arith.addf %54, %56 : vector<16x128xf32>
    %58 = arith.truncf %57 : vector<16x128xf32> to vector<16x128xbf16>
    %c0_35 = arith.constant 0 : index
    %c0_36 = arith.constant 0 : index
    %59 = vector.load %arg23[%c0_35, %c0_36] : memref<16x384xbf16, #tpu.memory_space<vmem>>, vector<16x128xbf16>
    tpu.vector_store %arg23[%c0_35, %c0_36], %58 {strides = array<i32>} : memref<16x384xbf16, #tpu.memory_space<vmem>>, vector<16x128xbf16>,
    %60 = arith.truncf %27 : vector<16x128xf32> to vector<16x128xbf16>
    %c0_37 = arith.constant 0 : index
    %c0_38 = arith.constant 0 : index
    %61 = vector.load %arg25[%c0_37, %c0_38] : memref<16x256xbf16, #tpu.memory_space<vmem>>, vector<16x128xbf16>
    tpu.vector_store %arg25[%c0_37, %c0_38], %60 {strides = array<i32>} : memref<16x256xbf16, #tpu.memory_space<vmem>>, vector<16x128xbf16>,
    %c0_39 = arith.constant 0 : index
    %c0_40 = arith.constant 0 : index
    %62 = vector.load %arg2[%c0_39, %c0_40] : memref<16x128xbf16, #tpu.memory_space<vmem>>, vector<16x128xbf16>
    %c0_41 = arith.constant 0 : index
    %c128_42 = arith.constant 128 : index
    %63 = vector.load %arg25[%c0_41, %c128_42] : memref<16x256xbf16, #tpu.memory_space<vmem>>, vector<16x128xbf16>
    tpu.vector_store %arg25[%c0_41, %c128_42], %62 {strides = array<i32>} : memref<16x256xbf16, #tpu.memory_space<vmem>>, vector<16x128xbf16>,
    %c0_43 = arith.constant 0 : index
    %c0_44 = arith.constant 0 : index
    %64 = vector.load %arg25[%c0_43, %c0_44] : memref<16x256xbf16, #tpu.memory_space<vmem>>, vector<16x256xbf16>
    %c0_45 = arith.constant 0 : index
    %c0_46 = arith.constant 0 : index
    %65 = vector.load %arg15[%c0_45, %c0_46] : memref<256x128xbf16, #tpu.memory_space<vmem>>, vector<256x128xbf16>
    %cst_47 = arith.constant dense<0.000000e+00> : vector<16x128xf32>
    %66 = tpu.matmul %64, %65, %cst_47 {dimension_numbers = #tpu.dot_dimension_numbers<[1], [0], [0], [1], [0, 0, 1, 1], [], []>} : vector<16x256xbf16>, vector<256x128xbf16>, vector<16x128xf32> -> vector<16x128xf32>
    %c0_48 = arith.constant 0 : index
    %c0_49 = arith.constant 0 : index
    %67 = vector.load %arg16[%c0_48, %c0_49] : memref<1x128xf32, #tpu.memory_space<vmem>>, vector<1x128xf32>
    %68 = vector.broadcast %67 : vector<1x128xf32> to vector<16x128xf32>
    %69 = arith.addf %66, %68 : vector<16x128xf32>
    %70 = arith.negf %69 : vector<16x128xf32>
    %71 = math.exp %70 : vector<16x128xf32>
    %cst_50 = arith.constant 1.000000e+00 : f32
    %72 = vector.broadcast %cst_50 : f32 to vector<16x128xf32>
    %73 = arith.addf %72, %71 : vector<16x128xf32>
    %74 = arith.divf %72, %73 : vector<16x128xf32>
    %75 = arith.truncf %74 : vector<16x128xf32> to vector<16x128xbf16>
    %c0_51 = arith.constant 0 : index
    %c0_52 = arith.constant 0 : index
    %76 = vector.load %arg17[%c0_51, %c0_52] : memref<128x128xbf16, #tpu.memory_space<vmem>>, vector<128x128xbf16>
    %cst_53 = arith.constant dense<0.000000e+00> : vector<16x128xf32>
    %77 = tpu.matmul %75, %76, %cst_53 {dimension_numbers = #tpu.dot_dimension_numbers<[1], [0], [0], [1], [0, 0, 1, 1], [], []>} : vector<16x128xbf16>, vector<128x128xbf16>, vector<16x128xf32> -> vector<16x128xf32>
    %c0_54 = arith.constant 0 : index
    %c0_55 = arith.constant 0 : index
    %78 = vector.load %arg18[%c0_54, %c0_55] : memref<1x128xf32, #tpu.memory_space<vmem>>, vector<1x128xf32>
    %79 = vector.broadcast %78 : vector<1x128xf32> to vector<16x128xf32>
    %80 = arith.addf %77, %79 : vector<16x128xf32>
    %81 = arith.negf %80 : vector<16x128xf32>
    %82 = math.exp %81 : vector<16x128xf32>
    %cst_56 = arith.constant 1.000000e+00 : f32
    %83 = vector.broadcast %cst_56 : f32 to vector<16x128xf32>
    %84 = arith.addf %83, %82 : vector<16x128xf32>
    %85 = arith.divf %83, %84 : vector<16x128xf32>
    %86 = arith.truncf %85 : vector<16x128xf32> to vector<16x128xbf16>
    %c0_57 = arith.constant 0 : index
    %c0_58 = arith.constant 0 : index
    %87 = vector.load %arg19[%c0_57, %c0_58] : memref<128x128xbf16, #tpu.memory_space<vmem>>, vector<128x128xbf16>
    %cst_59 = arith.constant dense<0.000000e+00> : vector<16x128xf32>
    %88 = tpu.matmul %86, %87, %cst_59 {dimension_numbers = #tpu.dot_dimension_numbers<[1], [0], [0], [1], [0, 0, 1, 1], [], []>} : vector<16x128xbf16>, vector<128x128xbf16>, vector<16x128xf32> -> vector<16x128xf32>
    %c0_60 = arith.constant 0 : index
    %c0_61 = arith.constant 0 : index
    %89 = vector.load %arg20[%c0_60, %c0_61] : memref<1x128xf32, #tpu.memory_space<vmem>>, vector<1x128xf32>
    %90 = vector.broadcast %89 : vector<1x128xf32> to vector<16x128xf32>
    %91 = arith.addf %88, %90 : vector<16x128xf32>
    %92 = arith.truncf %91 : vector<16x128xf32> to vector<16x128xbf16>
    %c0_62 = arith.constant 0 : index
    %c256 = arith.constant 256 : index
    %93 = vector.load %arg23[%c0_62, %c256] : memref<16x384xbf16, #tpu.memory_space<vmem>>, vector<16x128xbf16>
    tpu.vector_store %arg23[%c0_62, %c256], %92 {strides = array<i32>} : memref<16x384xbf16, #tpu.memory_space<vmem>>, vector<16x128xbf16>,
    %94 = arith.mulf %91, %91 : vector<16x128xf32>
    %cst_63 = arith.constant dense<0.000000e+00> : vector<16xf32>
    %95 = vector.multi_reduction <add>, %94, %cst_63 [1] : vector<16x128xf32> to vector<16xf32>
    %96 = vector.shape_cast %95 : vector<16xf32> to vector<16x1xf32>
    %c0_64 = arith.constant 0 : index
    %c0_65 = arith.constant 0 : index
    %97 = vector.load %arg21[%c0_64, %c0_65] : memref<128x128xf32, #tpu.memory_space<vmem>>, vector<128x128xf32>
    %cst_66 = arith.constant dense<0.000000e+00> : vector<16x128xf32>
    %98 = tpu.matmul %91, %97, %cst_66 {dimension_numbers = #tpu.dot_dimension_numbers<[1], [1], [0], [0], [0, 0, 1, 0], [], []>} : vector<16x128xf32>, vector<128x128xf32>, vector<16x128xf32> -> vector<16x128xf32>
    %c0_67 = arith.constant 0 : index
    %c0_68 = arith.constant 0 : index
    %99 = vector.load %arg22[%c0_67, %c0_68] : memref<1x128xf32, #tpu.memory_space<vmem>>, vector<1x128xf32>
    %100 = vector.broadcast %96 : vector<16x1xf32> to vector<16x128xf32>
    %101 = vector.broadcast %99 : vector<1x128xf32> to vector<16x128xf32>
    %102 = arith.addf %100, %101 : vector<16x128xf32>
    %cst_69 = arith.constant 2.000000e+00 : f32
    %103 = vector.broadcast %cst_69 : f32 to vector<16x128xf32>
    %104 = arith.mulf %103, %98 : vector<16x128xf32>
    %105 = arith.subf %102, %104 : vector<16x128xf32>
    %cst_70 = arith.constant 0.000000e+00 : f32
    %106 = vector.broadcast %cst_70 : f32 to vector<16x128xf32>
    %107 = arith.maximumf %105, %106 : vector<16x128xf32>
    %cst_71 = arith.constant 1.000000e+00 : f32
    %108 = vector.broadcast %cst_71 : f32 to vector<16x128xf32>
    %109 = arith.divf %107, %108 : vector<16x128xf32>
    %cst_72 = arith.constant 1.000000e+00 : f32
    %110 = vector.broadcast %cst_72 : f32 to vector<16x128xf32>
    %111 = arith.addf %110, %109 : vector<16x128xf32>
    %cst_73 = arith.constant 1.000000e+00 : f32
    %112 = vector.broadcast %cst_73 : f32 to vector<16x128xf32>
    %113 = arith.divf %112, %111 : vector<16x128xf32>
    %cst_74 = arith.constant dense<0.000000e+00> : vector<16xf32>
    %114 = vector.multi_reduction <add>, %113, %cst_74 [1] : vector<16x128xf32> to vector<16xf32>
    %115 = vector.shape_cast %114 : vector<16xf32> to vector<16x1xf32>
    %116 = tpu.reciprocal %115 {approx = true} : vector<16x1xf32> -> vector<16x1xf32>
    %117 = vector.broadcast %116 : vector<16x1xf32> to vector<16x128xf32>
    %118 = arith.mulf %113, %117 : vector<16x128xf32>
    %c0_75 = arith.constant 0 : index
    %c0_76 = arith.constant 0 : index
    %119 = vector.load %arg24[%c0_75, %c0_76] : memref<16x128xf32, #tpu.memory_space<vmem>>, vector<16x128xf32>
    tpu.vector_store %arg24[%c0_75, %c0_76], %118 {strides = array<i32>} : memref<16x128xf32, #tpu.memory_space<vmem>>, vector<16x128xf32>,
    return
  }
  func.func @transform_0(%arg0: i32) -> (i32, i32) {
    %c0_i32 = arith.constant 0 : i32
    %c0_i32_0 = arith.constant 0 : i32
    return %arg0, %c0_i32 : i32, i32
  }
  func.func @transform_1(%arg0: i32) -> (i32, i32) {
    %c0_i32 = arith.constant 0 : i32
    %c0_i32_0 = arith.constant 0 : i32
    return %arg0, %c0_i32 : i32, i32
  }
  func.func @transform_2(%arg0: i32) -> (i32, i32) {
    %c0_i32 = arith.constant 0 : i32
    %c0_i32_0 = arith.constant 0 : i32
    %c0_i32_1 = arith.constant 0 : i32
    return %c0_i32, %c0_i32_0 : i32, i32
  }
  func.func @transform_3(%arg0: i32) -> (i32, i32) {
    %c0_i32 = arith.constant 0 : i32
    %c0_i32_0 = arith.constant 0 : i32
    %c0_i32_1 = arith.constant 0 : i32
    return %c0_i32, %c0_i32_0 : i32, i32
  }
  func.func @transform_4(%arg0: i32) -> (i32, i32) {
    %c0_i32 = arith.constant 0 : i32
    %c0_i32_0 = arith.constant 0 : i32
    %c0_i32_1 = arith.constant 0 : i32
    return %c0_i32, %c0_i32_0 : i32, i32
  }
  func.func @transform_5(%arg0: i32) -> (i32, i32) {
    %c0_i32 = arith.constant 0 : i32
    %c0_i32_0 = arith.constant 0 : i32
    %c0_i32_1 = arith.constant 0 : i32
    return %c0_i32, %c0_i32_0 : i32, i32
  }
  func.func @transform_6(%arg0: i32) -> (i32, i32) {
    %c0_i32 = arith.constant 0 : i32
    %c0_i32_0 = arith.constant 0 : i32
    %c0_i32_1 = arith.constant 0 : i32
    return %c0_i32, %c0_i32_0 : i32, i32
  }
  func.func @transform_7(%arg0: i32) -> (i32, i32) {
    %c0_i32 = arith.constant 0 : i32
    %c0_i32_0 = arith.constant 0 : i32
    %c0_i32_1 = arith.constant 0 : i32
    return %c0_i32, %c0_i32_0 : i32, i32
  }
  func.func @transform_8(%arg0: i32) -> (i32, i32) {
    %c0_i32 = arith.constant 0 : i32
    %c0_i32_0 = arith.constant 0 : i32
    %c0_i32_1 = arith.constant 0 : i32
    return %c0_i32, %c0_i32_0 : i32, i32
  }
  func.func @transform_9(%arg0: i32) -> (i32, i32) {
    %c0_i32 = arith.constant 0 : i32
    %c0_i32_0 = arith.constant 0 : i32
    %c0_i32_1 = arith.constant 0 : i32
    return %c0_i32, %c0_i32_0 : i32, i32
  }
  func.func @transform_10(%arg0: i32) -> (i32, i32) {
    %c0_i32 = arith.constant 0 : i32
    %c0_i32_0 = arith.constant 0 : i32
    %c0_i32_1 = arith.constant 0 : i32
    return %c0_i32, %c0_i32_0 : i32, i32
  }
  func.func @transform_11(%arg0: i32) -> (i32, i32) {
    %c0_i32 = arith.constant 0 : i32
    %c0_i32_0 = arith.constant 0 : i32
    %c0_i32_1 = arith.constant 0 : i32
    return %c0_i32, %c0_i32_0 : i32, i32
  }
  func.func @transform_12(%arg0: i32) -> (i32, i32) {
    %c0_i32 = arith.constant 0 : i32
    %c0_i32_0 = arith.constant 0 : i32
    %c0_i32_1 = arith.constant 0 : i32
    return %c0_i32, %c0_i32_0 : i32, i32
  }
  func.func @transform_13(%arg0: i32) -> (i32, i32) {
    %c0_i32 = arith.constant 0 : i32
    %c0_i32_0 = arith.constant 0 : i32
    %c0_i32_1 = arith.constant 0 : i32
    return %c0_i32, %c0_i32_0 : i32, i32
  }
  func.func @transform_14(%arg0: i32) -> (i32, i32) {
    %c0_i32 = arith.constant 0 : i32
    %c0_i32_0 = arith.constant 0 : i32
    %c0_i32_1 = arith.constant 0 : i32
    return %c0_i32, %c0_i32_0 : i32, i32
  }
  func.func @transform_15(%arg0: i32) -> (i32, i32) {
    %c0_i32 = arith.constant 0 : i32
    %c0_i32_0 = arith.constant 0 : i32
    %c0_i32_1 = arith.constant 0 : i32
    return %c0_i32, %c0_i32_0 : i32, i32
  }
  func.func @transform_16(%arg0: i32) -> (i32, i32) {
    %c0_i32 = arith.constant 0 : i32
    %c0_i32_0 = arith.constant 0 : i32
    %c0_i32_1 = arith.constant 0 : i32
    return %c0_i32, %c0_i32_0 : i32, i32
  }
  func.func @transform_17(%arg0: i32) -> (i32, i32) {
    %c0_i32 = arith.constant 0 : i32
    %c0_i32_0 = arith.constant 0 : i32
    %c0_i32_1 = arith.constant 0 : i32
    return %c0_i32, %c0_i32_0 : i32, i32
  }
  func.func @transform_18(%arg0: i32) -> (i32, i32) {
    %c0_i32 = arith.constant 0 : i32
    %c0_i32_0 = arith.constant 0 : i32
    %c0_i32_1 = arith.constant 0 : i32
    return %c0_i32, %c0_i32_0 : i32, i32
  }
  func.func @transform_19(%arg0: i32) -> (i32, i32) {
    %c0_i32 = arith.constant 0 : i32
    %c0_i32_0 = arith.constant 0 : i32
    %c0_i32_1 = arith.constant 0 : i32
    return %c0_i32, %c0_i32_0 : i32, i32
  }
  func.func @transform_20(%arg0: i32) -> (i32, i32) {
    %c0_i32 = arith.constant 0 : i32
    %c0_i32_0 = arith.constant 0 : i32
    %c0_i32_1 = arith.constant 0 : i32
    return %c0_i32, %c0_i32_0 : i32, i32
  }
  func.func @transform_21(%arg0: i32) -> (i32, i32) {
    %c0_i32 = arith.constant 0 : i32
    %c0_i32_0 = arith.constant 0 : i32
    %c0_i32_1 = arith.constant 0 : i32
    return %c0_i32, %c0_i32_0 : i32, i32
  }
  func.func @transform_22(%arg0: i32) -> (i32, i32) {
    %c0_i32 = arith.constant 0 : i32
    %c0_i32_0 = arith.constant 0 : i32
    return %arg0, %c0_i32 : i32, i32
  }
  func.func @transform_23(%arg0: i32) -> (i32, i32) {
    %c0_i32 = arith.constant 0 : i32
    %c0_i32_0 = arith.constant 0 : i32
    return %arg0, %c0_i32 : i32, i32
  }
}

</mosaic_0001>

<llo_original>
// kernel: tpu_custom_call.1
$region0: #{tpu_custom_call.1}
  #allocation0 [shape = 'u32[]', space=smem, size = 0x4, offset = 0x4, fixed_abs, tag = 'smem constant byte address 0x4 - core index']
  #allocation1 [shape = 'u32[144,128]{1,0:T(1,128)}', space=vmem, size = 0x12000, scoped, tag = 'internal scratch']
  #allocation2 [shape = 'bf16[16,256]{1,0:T(16,128)(2,1)}', space=vmem, size = 0x2000, scoped, tag = 'scratch operand']
  %s0 = inlined_call_operand.hbm [shape: bf16[16,128], index: 0, kind: input, shape index: {}]
  %s1 = inlined_call_operand.hbm [shape: bf16[16,128], index: 1, kind: input, shape index: {}]
  %s2 = inlined_call_operand.hbm [shape: bf16[128,128], index: 2, kind: input, shape index: {}]
  %s3 = inlined_call_operand.vmem [shape: f32[1,128], index: 3, kind: input, shape index: {}]
  %s4 = inlined_call_operand.hbm [shape: bf16[128,128], index: 4, kind: input, shape index: {}]
  %s5 = inlined_call_operand.vmem [shape: f32[1,128], index: 5, kind: input, shape index: {}]
  %s6 = inlined_call_operand.hbm [shape: bf16[128,128], index: 6, kind: input, shape index: {}]
  %s7 = inlined_call_operand.vmem [shape: f32[1,128], index: 7, kind: input, shape index: {}]
  %s8 = inlined_call_operand.hbm [shape: bf16[128,128], index: 8, kind: input, shape index: {}]
  %s9 = inlined_call_operand.vmem [shape: f32[1,128], index: 9, kind: input, shape index: {}]
  %s10 = inlined_call_operand.hbm [shape: bf16[128,128], index: 10, kind: input, shape index: {}]
  %s11 = inlined_call_operand.hbm [shape: f32[1,128], index: 11, kind: input, shape index: {}]
  %s12 = inlined_call_operand.hbm [shape: bf16[128,128], index: 12, kind: input, shape index: {}]
  %s13 = inlined_call_operand.hbm [shape: f32[1,128], index: 13, kind: input, shape index: {}]
  %s14 = inlined_call_operand.hbm [shape: bf16[256,128], index: 14, kind: input, shape index: {}]
  %s15 = inlined_call_operand.hbm [shape: f32[1,128], index: 15, kind: input, shape index: {}]
  %s16 = inlined_call_operand.hbm [shape: bf16[128,128], index: 16, kind: input, shape index: {}]
  %s17 = inlined_call_operand.hbm [shape: f32[1,128], index: 17, kind: input, shape index: {}]
  %s18 = inlined_call_operand.vmem [shape: bf16[128,128], index: 18, kind: input, shape index: {}]
  %s19 = inlined_call_operand.vmem [shape: f32[1,128], index: 19, kind: input, shape index: {}]
  %s20 = inlined_call_operand.hbm [shape: f32[128,128], index: 20, kind: input, shape index: {}]
  %s21 = inlined_call_operand.vmem [shape: f32[1,128], index: 21, kind: input, shape index: {}]
  %s22 = inlined_call_operand.hbm [shape: bf16[16,384], index: 22, kind: output, shape index: {0}]
  %s23 = inlined_call_operand.hbm [shape: f32[16,128], index: 23, kind: output, shape index: {1}]
  %24 = xla_tuple %s22, %s23
  %s25 = sld [smem:[#allocation0]]
  $region166: #{tpu_custom_call.1} parent=0
    _
  %s27 = ssub.s32 1, %s25
  %s28 = scalar_select 0, %s27, %s25
  $region1: #{tpu_custom_call.1} parent=0
    #allocation3 [shape = 'u8[4096]{0}', space=vmem, size = 0x1000, scoped, tag = 'input window, operand 0, single buffered']
    #allocation4 [shape = 's32[1]{0}', space=sflag, size = 0x4, scoped, tag = 'scoped memory for tpu_custom_call.1']
    #allocation5 [shape = 's32[1]{0}', space=sflag, size = 0x4, scoped, tag = 'scoped memory for tpu_custom_call.1']
    #allocation6 [shape = 'u8[4096]{0}', space=vmem, size = 0x1000, scoped, tag = 'input window, operand 1, single buffered']
    #allocation7 [shape = 's32[1]{0}', space=sflag, size = 0x4, scoped, tag = 'scoped memory for tpu_custom_call.1']
    #allocation8 [shape = 'u8[32768]{0}', space=vmem, size = 0x8000, scoped, tag = 'input window, operand 2, single buffered']
    #allocation9 [shape = 'u8[32768]{0}', space=vmem, size = 0x8000, scoped, tag = 'input window, operand 4, single buffered']
    #allocation10 [shape = 's32[1]{0}', space=sflag, size = 0x4, scoped, tag = 'scoped memory for tpu_custom_call.1']
    #allocation11 [shape = 'u8[32768]{0}', space=vmem, size = 0x8000, scoped, tag = 'input window, operand 6, single buffered']
    #allocation12 [shape = 'u8[32768]{0}', space=vmem, size = 0x8000, scoped, tag = 'input window, operand 8, single buffered']
    #allocation13 [shape = 's32[1]{0}', space=sflag, size = 0x4, scoped, tag = 'scoped memory for tpu_custom_call.1']
    #allocation14 [shape = 'u8[32768]{0}', space=vmem, size = 0x8000, scoped, tag = 'input window, operand 10, single buffered']
    #allocation15 [shape = 'u8[512]{0}', space=vmem, size = 0x400, scoped, tag = 'input window, operand 11, single buffered']
    #allocation16 [shape = 's32[1]{0}', space=sflag, size = 0x4, scoped, tag = 'scoped memory for tpu_custom_call.1']
    #allocation17 [shape = 'u8[32768]{0}', space=vmem, size = 0x8000, scoped, tag = 'input window, operand 12, single buffered']
    #allocation18 [shape = 'u8[512]{0}', space=vmem, size = 0x400, scoped, tag = 'input window, operand 13, single buffered']
    #allocation19 [shape = 's32[1]{0}', space=sflag, size = 0x4, scoped, tag = 'scoped memory for tpu_custom_call.1']
    #allocation20 [shape = 'u8[65536]{0}', space=vmem, size = 0x10000, scoped, tag = 'input window, operand 14, single buffered']
    #allocation21 [shape = 'u8[512]{0}', space=vmem, size = 0x400, scoped, tag = 'input window, operand 15, single buffered']
    #allocation22 [shape = 's32[1]{0}', space=sflag, size = 0x4, scoped, tag = 'scoped memory for tpu_custom_call.1']
    #allocation23 [shape = 'u8[32768]{0}', space=vmem, size = 0x8000, scoped, tag = 'input window, operand 16, single buffered']
    #allocation24 [shape = 'u8[512]{0}', space=vmem, size = 0x400, scoped, tag = 'input window, operand 17, single buffered']
    #allocation25 [shape = 's32[1]{0}', space=sflag, size = 0x4, scoped, tag = 'scoped memory for tpu_custom_call.1']
    #allocation26 [shape = 'u8[65536]{0}', space=vmem, size = 0x10000, scoped, tag = 'input window, operand 20, single buffered']
    #allocation27 [shape = 'u8[12288]{0}', space=vmem, size = 0x3000, scoped, tag = 'output window, operand 0, single buffered']
    #allocation28 [shape = 'u8[8192]{0}', space=vmem, size = 0x2000, scoped, tag = 'output window, operand 1, single buffered']
    #allocation29 [shape = 's32[1]{0}', space=sflag, size = 0x4, scoped, tag = 'scoped memory for tpu_custom_call.1']
    %29 = vsyncpa [#allocation4], 0
    %30 = vsyncpa [#allocation7], 0
    %31 = vsyncpa [#allocation10], 0
    %32 = vsyncpa [#allocation13], 0
    %33 = vsyncpa [#allocation16], 0
    %34 = vsyncpa [#allocation19], 0
    %35 = vsyncpa [#allocation22], 0
    %36 = vsyncpa [#allocation25], 0
    %37 = vsyncpa [#allocation5], 0
    %38 = vsyncpa [#allocation29], 0
    // Predicated region
    $region2: #{tpu_custom_call.1} parent=1 // pred_check
      _
    $region3: #{tpu_custom_call.1} parent=1 // pred_check_branch
      %40 = sbr.rel (0) target = $region5
    $region4: #{tpu_custom_call.1} parent=1 // pred_region
      %s42 = ssub.s32 128, 128
      %43 = vsyncadd [#allocation4], %s42
      %s44 = sshll.u32 [#allocation3], 4
      %s45 = int_to_ptr.vmem [resolvable:$true] %s44
      %50 = dma.hbm_to_vmem [thread:$0]  %s0, 128, %s45, [#allocation4], 64, 64, 4
    $region5: #{tpu_custom_call.1} parent=1 // pred_fallthru
      _
    // Predicated region
    $region6: #{tpu_custom_call.1} parent=1 // pred_check
      _
    $region7: #{tpu_custom_call.1} parent=1 // pred_check_branch
      %52 = sbr.rel (0) target = $region9
    $region8: #{tpu_custom_call.1} parent=1 // pred_region
      %s54 = ssub.s32 128, 128
      %55 = vsyncadd [#allocation7], %s54
      %s56 = sshll.u32 [#allocation6], 4
      %s57 = int_to_ptr.vmem [resolvable:$true] %s56
      %62 = dma.hbm_to_vmem [thread:$0]  %s1, 128, %s57, [#allocation7], 64, 64, 4
    $region9: #{tpu_custom_call.1} parent=1 // pred_fallthru
      _
    // Predicated region
    $region10: #{tpu_custom_call.1} parent=1 // pred_check
      _
    $region11: #{tpu_custom_call.1} parent=1 // pred_check_branch
      %64 = sbr.rel (0) target = $region13
    $region12: #{tpu_custom_call.1} parent=1 // pred_region
      %s66 = ssub.s32 1024, 1024
      %67 = vsyncadd [#allocation7], %s66
      %s68 = sshll.u32 [#allocation8], 4
      %s69 = int_to_ptr.vmem [resolvable:$true] %s68
      %74 = dma.hbm_to_vmem [thread:$0]  %s2, 1024, %s69, [#allocation7], 64, 64, 4
    $region13: #{tpu_custom_call.1} parent=1 // pred_fallthru
      _
    // Predicated region
    $region14: #{tpu_custom_call.1} parent=1 // pred_check
      _
    $region15: #{tpu_custom_call.1} parent=1 // pred_check_branch
      %76 = sbr.rel (0) target = $region17
    $region16: #{tpu_custom_call.1} parent=1 // pred_region
      _
    $region17: #{tpu_custom_call.1} parent=1 // pred_fallthru
      _
    // Predicated region
    $region18: #{tpu_custom_call.1} parent=1 // pred_check
      _
    $region19: #{tpu_custom_call.1} parent=1 // pred_check_branch
      %78 = sbr.rel (0) target = $region21
    $region20: #{tpu_custom_call.1} parent=1 // pred_region
      %s80 = ssub.s32 1024, 1024
      %81 = vsyncadd [#allocation10], %s80
      %s82 = sshll.u32 [#allocation9], 4
      %s83 = int_to_ptr.vmem [resolvable:$true] %s82
      %88 = dma.hbm_to_vmem [thread:$0]  %s4, 1024, %s83, [#allocation10], 64, 64, 4
    $region21: #{tpu_custom_call.1} parent=1 // pred_fallthru
      _
    // Predicated region
    $region22: #{tpu_custom_call.1} parent=1 // pred_check
      _
    $region23: #{tpu_custom_call.1} parent=1 // pred_check_branch
      %90 = sbr.rel (0) target = $region25
    $region24: #{tpu_custom_call.1} parent=1 // pred_region
      _
    $region25: #{tpu_custom_call.1} parent=1 // pred_fallthru
      _
    // Predicated region
    $region26: #{tpu_custom_call.1} parent=1 // pred_check
      _
    $region27: #{tpu_custom_call.1} parent=1 // pred_check_branch
      %92 = sbr.rel (0) target = $region29
    $region28: #{tpu_custom_call.1} parent=1 // pred_region
      %s94 = ssub.s32 1024, 1024
      %95 = vsyncadd [#allocation10], %s94
      %s96 = sshll.u32 [#allocation11], 4
      %s97 = int_to_ptr.vmem [resolvable:$true] %s96
      %102 = dma.hbm_to_vmem [thread:$0]  %s6, 1024, %s97, [#allocation10], 64, 64, 4
    $region29: #{tpu_custom_call.1} parent=1 // pred_fallthru
      _
    // Predicated region
    $region30: #{tpu_custom_call.1} parent=1 // pred_check
      _
    $region31: #{tpu_custom_call.1} parent=1 // pred_check_branch
      %104 = sbr.rel (0) target = $region33
    $region32: #{tpu_custom_call.1} parent=1 // pred_region
      _
    $region33: #{tpu_custom_call.1} parent=1 // pred_fallthru
      _
    // Predicated region
    $region34: #{tpu_custom_call.1} parent=1 // pred_check
      _
    $region35: #{tpu_custom_call.1} parent=1 // pred_check_branch
      %106 = sbr.rel (0) target = $region37
    $region36: #{tpu_custom_call.1} parent=1 // pred_region
      %s108 = ssub.s32 1024, 1024
      %109 = vsyncadd [#allocation13], %s108
      %s110 = sshll.u32 [#allocation12], 4
      %s111 = int_to_ptr.vmem [resolvable:$true] %s110
      %116 = dma.hbm_to_vmem [thread:$0]  %s8, 1024, %s111, [#allocation13], 64, 64, 4
    $region37: #{tpu_custom_call.1} parent=1 // pred_fallthru
      _
    // Predicated region
    $region38: #{tpu_custom_call.1} parent=1 // pred_check
      _
    $region39: #{tpu_custom_call.1} parent=1 // pred_check_branch
      %118 = sbr.rel (0) target = $region41
    $region40: #{tpu_custom_call.1} parent=1 // pred_region
      _
    $region41: #{tpu_custom_call.1} parent=1 // pred_fallthru
      _
    // Predicated region
    $region42: #{tpu_custom_call.1} parent=1 // pred_check
      _
    $region43: #{tpu_custom_call.1} parent=1 // pred_check_branch
      %120 = sbr.rel (0) target = $region45
    $region44: #{tpu_custom_call.1} parent=1 // pred_region
      %s122 = ssub.s32 1024, 1024
      %123 = vsyncadd [#allocation13], %s122
      %s124 = sshll.u32 [#allocation14], 4
      %s125 = int_to_ptr.vmem [resolvable:$true] %s124
      %130 = dma.hbm_to_vmem [thread:$0]  %s10, 1024, %s125, [#allocation13], 64, 64, 4
    $region45: #{tpu_custom_call.1} parent=1 // pred_fallthru
      _
    // Predicated region
    $region46: #{tpu_custom_call.1} parent=1 // pred_check
      _
    $region47: #{tpu_custom_call.1} parent=1 // pred_check_branch
      %132 = sbr.rel (0) target = $region49
    $region48: #{tpu_custom_call.1} parent=1 // pred_region
      %s134 = ssub.s32 16, 16
      %135 = vsyncadd [#allocation16], %s134
      %s137 = sshll.u32 [#allocation15], 4
      %s138 = int_to_ptr.vmem [resolvable:$true] %s137
      %140 = dma.hbm_to_vmem [thread:$0]  %s11, 16, %s138, [#allocation16]
    $region49: #{tpu_custom_call.1} parent=1 // pred_fallthru
      _
    // Predicated region
    $region50: #{tpu_custom_call.1} parent=1 // pred_check
      _
    $region51: #{tpu_custom_call.1} parent=1 // pred_check_branch
      %142 = sbr.rel (0) target = $region53
    $region52: #{tpu_custom_call.1} parent=1 // pred_region
      %s144 = ssub.s32 1024, 1024
      %145 = vsyncadd [#allocation16], %s144
      %s146 = sshll.u32 [#allocation17], 4
      %s147 = int_to_ptr.vmem [resolvable:$true] %s146
      %152 = dma.hbm_to_vmem [thread:$0]  %s12, 1024, %s147, [#allocation16], 64, 64, 4
    $region53: #{tpu_custom_call.1} parent=1 // pred_fallthru
      _
    // Predicated region
    $region54: #{tpu_custom_call.1} parent=1 // pred_check
      _
    $region55: #{tpu_custom_call.1} parent=1 // pred_check_branch
      %154 = sbr.rel (0) target = $region57
    $region56: #{tpu_custom_call.1} parent=1 // pred_region
      %s156 = ssub.s32 16, 16
      %157 = vsyncadd [#allocation19], %s156
      %s159 = sshll.u32 [#allocation18], 4
      %s160 = int_to_ptr.vmem [resolvable:$true] %s159
      %162 = dma.hbm_to_vmem [thread:$0]  %s13, 16, %s160, [#allocation19]
    $region57: #{tpu_custom_call.1} parent=1 // pred_fallthru
      _
    // Predicated region
    $region58: #{tpu_custom_call.1} parent=1 // pred_check
      _
    $region59: #{tpu_custom_call.1} parent=1 // pred_check_branch
      %164 = sbr.rel (0) target = $region61
    $region60: #{tpu_custom_call.1} parent=1 // pred_region
      %s166 = ssub.s32 2048, 2048
      %167 = vsyncadd [#allocation19], %s166
      %s168 = sshll.u32 [#allocation20], 4
      %s169 = int_to_ptr.vmem [resolvable:$true] %s168
      %174 = dma.hbm_to_vmem [thread:$0]  %s14, 2048, %s169, [#allocation19], 64, 64, 4
    $region61: #{tpu_custom_call.1} parent=1 // pred_fallthru
      _
    // Predicated region
    $region62: #{tpu_custom_call.1} parent=1 // pred_check
      _
    $region63: #{tpu_custom_call.1} parent=1 // pred_check_branch
      %176 = sbr.rel (0) target = $region65
    $region64: #{tpu_custom_call.1} parent=1 // pred_region
      %s178 = ssub.s32 16, 16
      %179 = vsyncadd [#allocation22], %s178
      %s181 = sshll.u32 [#allocation21], 4
      %s182 = int_to_ptr.vmem [resolvable:$true] %s181
      %184 = dma.hbm_to_vmem [thread:$0]  %s15, 16, %s182, [#allocation22]
    $region65: #{tpu_custom_call.1} parent=1 // pred_fallthru
      _
    // Predicated region
    $region66: #{tpu_custom_call.1} parent=1 // pred_check
      _
    $region67: #{tpu_custom_call.1} parent=1 // pred_check_branch
      %186 = sbr.rel (0) target = $region69
    $region68: #{tpu_custom_call.1} parent=1 // pred_region
      %s188 = ssub.s32 1024, 1024
      %189 = vsyncadd [#allocation22], %s188
      %s190 = sshll.u32 [#allocation23], 4
      %s191 = int_to_ptr.vmem [resolvable:$true] %s190
      %196 = dma.hbm_to_vmem [thread:$0]  %s16, 1024, %s191, [#allocation22], 64, 64, 4
    $region69: #{tpu_custom_call.1} parent=1 // pred_fallthru
      _
    // Predicated region
    $region70: #{tpu_custom_call.1} parent=1 // pred_check
      _
    $region71: #{tpu_custom_call.1} parent=1 // pred_check_branch
      %198 = sbr.rel (0) target = $region73
    $region72: #{tpu_custom_call.1} parent=1 // pred_region
      %s200 = ssub.s32 16, 16
      %201 = vsyncadd [#allocation25], %s200
      %s203 = sshll.u32 [#allocation24], 4
      %s204 = int_to_ptr.vmem [resolvable:$true] %s203
      %206 = dma.hbm_to_vmem [thread:$0]  %s17, 16, %s204, [#allocation25]
    $region73: #{tpu_custom_call.1} parent=1 // pred_fallthru
      _
    // Predicated region
    $region74: #{tpu_custom_call.1} parent=1 // pred_check
      _
    $region75: #{tpu_custom_call.1} parent=1 // pred_check_branch
      %208 = sbr.rel (0) target = $region77
    $region76: #{tpu_custom_call.1} parent=1 // pred_region
      _
    $region77: #{tpu_custom_call.1} parent=1 // pred_fallthru
      _
    // Predicated region
    $region78: #{tpu_custom_call.1} parent=1 // pred_check
      _
    $region79: #{tpu_custom_call.1} parent=1 // pred_check_branch
      %210 = sbr.rel (0) target = $region81
    $region80: #{tpu_custom_call.1} parent=1 // pred_region
      _
    $region81: #{tpu_custom_call.1} parent=1 // pred_fallthru
      _
    // Predicated region
    $region82: #{tpu_custom_call.1} parent=1 // pred_check
      _
    $region83: #{tpu_custom_call.1} parent=1 // pred_check_branch
      %212 = sbr.rel (0) target = $region85
    $region84: #{tpu_custom_call.1} parent=1 // pred_region
      %s214 = ssub.s32 2048, 2048
      %215 = vsyncadd [#allocation25], %s214
      %s216 = sshll.u32 [#allocation26], 4
      %s217 = int_to_ptr.vmem [resolvable:$true] %s216
      %222 = dma.hbm_to_vmem [thread:$0]  %s20, 2048, %s217, [#allocation25], 128, 128, 8
    $region85: #{tpu_custom_call.1} parent=1 // pred_fallthru
      _
    // Predicated region
    $region86: #{tpu_custom_call.1} parent=1 // pred_check
      _
    $region87: #{tpu_custom_call.1} parent=1 // pred_check_branch
      %224 = sbr.rel (0) target = $region89
    $region88: #{tpu_custom_call.1} parent=1 // pred_region
      _
    $region89: #{tpu_custom_call.1} parent=1 // pred_fallthru
      _
    // Predicated region
    $region90: #{tpu_custom_call.1} parent=1 // pred_check
      _
    $region91: #{tpu_custom_call.1} parent=1 // pred_check_branch
      %226 = sbr.rel (0) target = $region93
    $region92: #{tpu_custom_call.1} parent=1 // pred_region
      %227 = dma.done [#allocation4], 128
    $region93: #{tpu_custom_call.1} parent=1 // pred_fallthru
      _
    // Predicated region
    $region94: #{tpu_custom_call.1} parent=1 // pred_check
      _
    $region95: #{tpu_custom_call.1} parent=1 // pred_check_branch
      %229 = sbr.rel (0) target = $region97
    $region96: #{tpu_custom_call.1} parent=1 // pred_region
      %230 = dma.done [#allocation7], 128
    $region97: #{tpu_custom_call.1} parent=1 // pred_fallthru
      _
    // Predicated region
    $region98: #{tpu_custom_call.1} parent=1 // pred_check
      _
    $region99: #{tpu_custom_call.1} parent=1 // pred_check_branch
      %232 = sbr.rel (0) target = $region101
    $region100: #{tpu_custom_call.1} parent=1 // pred_region
      %233 = dma.done [#allocation7], 1024
    $region101: #{tpu_custom_call.1} parent=1 // pred_fallthru
      _
    // Predicated region
    $region102: #{tpu_custom_call.1} parent=1 // pred_check
      _
    $region103: #{tpu_custom_call.1} parent=1 // pred_check_branch
      %235 = sbr.rel (0) target = $region105
    $region104: #{tpu_custom_call.1} parent=1 // pred_region
      %236 = dma.done [#allocation10], 1024
    $region105: #{tpu_custom_call.1} parent=1 // pred_fallthru
      _
    // Predicated region
    $region106: #{tpu_custom_call.1} parent=1 // pred_check
      _
    $region107: #{tpu_custom_call.1} parent=1 // pred_check_branch
      %238 = sbr.rel (0) target = $region109
    $region108: #{tpu_custom_call.1} parent=1 // pred_region
      %239 = dma.done [#allocation10], 1024
    $region109: #{tpu_custom_call.1} parent=1 // pred_fallthru
      _
    // Predicated region
    $region110: #{tpu_custom_call.1} parent=1 // pred_check
      _
    $region111: #{tpu_custom_call.1} parent=1 // pred_check_branch
      %241 = sbr.rel (0) target = $region113
    $region112: #{tpu_custom_call.1} parent=1 // pred_region
      %242 = dma.done [#allocation13], 1024
    $region113: #{tpu_custom_call.1} parent=1 // pred_fallthru
      _
    // Predicated region
    $region114: #{tpu_custom_call.1} parent=1 // pred_check
      _
    $region115: #{tpu_custom_call.1} parent=1 // pred_check_branch
      %244 = sbr.rel (0) target = $region117
    $region116: #{tpu_custom_call.1} parent=1 // pred_region
      %245 = dma.done [#allocation13], 1024
    $region117: #{tpu_custom_call.1} parent=1 // pred_fallthru
      _
    // Predicated region
    $region118: #{tpu_custom_call.1} parent=1 // pred_check
      _
    $region119: #{tpu_custom_call.1} parent=1 // pred_check_branch
      %247 = sbr.rel (0) target = $region121
    $region120: #{tpu_custom_call.1} parent=1 // pred_region
      %248 = dma.done [#allocation16], 16
    $region121: #{tpu_custom_call.1} parent=1 // pred_fallthru
      _
    // Predicated region
    $region122: #{tpu_custom_call.1} parent=1 // pred_check
      _
    $region123: #{tpu_custom_call.1} parent=1 // pred_check_branch
      %250 = sbr.rel (0) target = $region125
    $region124: #{tpu_custom_call.1} parent=1 // pred_region
      %251 = dma.done [#allocation16], 1024
    $region125: #{tpu_custom_call.1} parent=1 // pred_fallthru
      _
    // Predicated region
    $region126: #{tpu_custom_call.1} parent=1 // pred_check
      _
    $region127: #{tpu_custom_call.1} parent=1 // pred_check_branch
      %253 = sbr.rel (0) target = $region129
    $region128: #{tpu_custom_call.1} parent=1 // pred_region
      %254 = dma.done [#allocation19], 16
    $region129: #{tpu_custom_call.1} parent=1 // pred_fallthru
      _
    // Predicated region
    $region130: #{tpu_custom_call.1} parent=1 // pred_check
      _
    $region131: #{tpu_custom_call.1} parent=1 // pred_check_branch
      %256 = sbr.rel (0) target = $region133
    $region132: #{tpu_custom_call.1} parent=1 // pred_region
      %257 = dma.done [#allocation19], 2048
    $region133: #{tpu_custom_call.1} parent=1 // pred_fallthru
      _
    // Predicated region
    $region134: #{tpu_custom_call.1} parent=1 // pred_check
      _
    $region135: #{tpu_custom_call.1} parent=1 // pred_check_branch
      %259 = sbr.rel (0) target = $region137
    $region136: #{tpu_custom_call.1} parent=1 // pred_region
      %260 = dma.done [#allocation22], 16
    $region137: #{tpu_custom_call.1} parent=1 // pred_fallthru
      _
    // Predicated region
    $region138: #{tpu_custom_call.1} parent=1 // pred_check
      _
    $region139: #{tpu_custom_call.1} parent=1 // pred_check_branch
      %262 = sbr.rel (0) target = $region141
    $region140: #{tpu_custom_call.1} parent=1 // pred_region
      %263 = dma.done [#allocation22], 1024
    $region141: #{tpu_custom_call.1} parent=1 // pred_fallthru
      _
    // Predicated region
    $region142: #{tpu_custom_call.1} parent=1 // pred_check
      _
    $region143: #{tpu_custom_call.1} parent=1 // pred_check_branch
      %265 = sbr.rel (0) target = $region145
    $region144: #{tpu_custom_call.1} parent=1 // pred_region
      %266 = dma.done [#allocation25], 16
    $region145: #{tpu_custom_call.1} parent=1 // pred_fallthru
      _
    // Predicated region
    $region146: #{tpu_custom_call.1} parent=1 // pred_check
      _
    $region147: #{tpu_custom_call.1} parent=1 // pred_check_branch
      %268 = sbr.rel (0) target = $region149
    $region148: #{tpu_custom_call.1} parent=1 // pred_region
      %269 = dma.done [#allocation25], 2048
    $region149: #{tpu_custom_call.1} parent=1 // pred_fallthru
      _
    %v271 = vld [vmem:[#allocation3] sm:$0xf]
    %v272 = vld [vmem:[#allocation3 + $0x4] sm:$0xf]
    %v273 = vld [vmem:[#allocation8] sm:$0xf]
    %v274 = vld [vmem:[#allocation8 + $0x4] sm:$0xf]
    %v275 = vld [vmem:[#allocation8 + $0x8] sm:$0xf]
    %v276 = vld [vmem:[#allocation8 + $0xc] sm:$0xf]
    %v277 = vld [vmem:[#allocation8 + $0x10] sm:$0xf]
    %v278 = vld [vmem:[#allocation8 + $0x14] sm:$0xf]
    %v279 = vld [vmem:[#allocation8 + $0x18] sm:$0xf]
    %v280 = vld [vmem:[#allocation8 + $0x1c] sm:$0xf]
    %v281 = vld [vmem:[#allocation8 + $0x20] sm:$0xf]
    %v282 = vld [vmem:[#allocation8 + $0x24] sm:$0xf]
    %v283 = vld [vmem:[#allocation8 + $0x28] sm:$0xf]
    %v284 = vld [vmem:[#allocation8 + $0x2c] sm:$0xf]
    %v285 = vld [vmem:[#allocation8 + $0x30] sm:$0xf]
    %v286 = vld [vmem:[#allocation8 + $0x34] sm:$0xf]
    %v287 = vld [vmem:[#allocation8 + $0x38] sm:$0xf]
    %v288 = vld [vmem:[#allocation8 + $0x3c] sm:$0xf]
    %v289 = vld [vmem:[%s3] sm:$0x1]
    %v291 = vlaneseq
    %v292 = vshrl.u32 %v291, 7
    %v293 = vsub.s32 0, %v292
    %v294 = vrot.slane %v289, %v293
    %v298 = vunpack.c.l.b16 %v271
    %v299 = vunpack.c.l.b16 %v272
    %v300 = vpack.c.b16 %v299, %v298
    %v318 = vunpack.c.l.b16 %v273
    %v319 = vunpack.c.l.b16 %v274
    %v320 = vunpack.c.l.b16 %v275
    %v321 = vunpack.c.l.b16 %v276
    %v322 = vunpack.c.l.b16 %v277
    %v323 = vunpack.c.l.b16 %v278
    %v324 = vunpack.c.l.b16 %v279
    %v325 = vunpack.c.l.b16 %v280
    %v326 = vunpack.c.l.b16 %v281
    %v327 = vunpack.c.l.b16 %v282
    %v328 = vunpack.c.l.b16 %v283
    %v329 = vunpack.c.l.b16 %v284
    %v330 = vunpack.c.l.b16 %v285
    %v331 = vunpack.c.l.b16 %v286
    %v332 = vunpack.c.l.b16 %v287
    %v333 = vunpack.c.l.b16 %v288
    %v334 = vpack.c.b16 %v319, %v318
    %v335 = vpack.c.b16 %v321, %v320
    %v336 = vpack.c.b16 %v323, %v322
    %v337 = vpack.c.b16 %v325, %v324
    %v338 = vpack.c.b16 %v327, %v326
    %v339 = vpack.c.b16 %v329, %v328
    %v340 = vpack.c.b16 %v331, %v330
    %v341 = vpack.c.b16 %v333, %v332
    %350 = vmatprep.subr.bf16.mxu0 0
    %351 = vmatpush1.bf16.msra.mxu0 %v334
    %352 = vmatprep.subr.bf16.mxu0 0
    %353 = vmatpush1.bf16.msra.mxu0 %v335
    %354 = vmatprep.subr.bf16.mxu0 0
    %355 = vmatpush1.bf16.msra.mxu0 %v336
    %356 = vmatprep.subr.bf16.mxu0 0
    %357 = vmatpush1.bf16.msra.mxu0 %v337
    %358 = vmatprep.subr.bf16.mxu0 0
    %359 = vmatpush1.bf16.msra.mxu0 %v338
    %360 = vmatprep.subr.bf16.mxu0 0
    %361 = vmatpush1.bf16.msra.mxu0 %v339
    %362 = vmatprep.subr.bf16.mxu0 0
    %363 = vmatpush1.bf16.msra.mxu0 %v340
    %364 = vmatprep.subr.bf16.mxu0 0
    %365 = vmatpush1.bf16.msra.mxu0 %v341
    %366 = vmatprep.subr.bf16.mxu0 0
    %367 = vmatpush1.bf16.msra.mxu0 0
    %368 = vmatprep.subr.bf16.mxu0 0
    %369 = vmatpush1.bf16.msra.mxu0 0
    %370 = vmatprep.subr.bf16.mxu0 0
    %371 = vmatpush1.bf16.msra.mxu0 0
    %372 = vmatprep.subr.bf16.mxu0 0
    %373 = vmatpush1.bf16.msra.mxu0 0
    %374 = vmatprep.subr.bf16.mxu0 0
    %375 = vmatpush1.bf16.msra.mxu0 0
    %376 = vmatprep.subr.bf16.mxu0 0
    %377 = vmatpush1.bf16.msra.mxu0 0
    %378 = vmatprep.subr.bf16.mxu0 0
    %379 = vmatpush1.bf16.msra.mxu0 0
    %380 = vmatprep.subr.bf16.mxu0 0
    %381 = vmatpush1.bf16.msra.mxu0 0
    %382 = vmatprep.mubr.bf16.mxu0 0
    %383 = vmatmul.mubr.bf16.gmra.mrb[0].mxu0 %v300
    %v384 = vpop.f32.mrb[0].mxu0
    %v385 = vadd.f32 %v294, %v384
    %v386 = vpop.f32.mrb[0].mxu0
    %v387 = vpop.f32.mrb[0].mxu0
    %v388 = vadd.f32 %v294, %v387
    %v389 = vpop.f32.mrb[0].mxu0
    %390 = vdwg.mxu0
    %v391 = vxor.u32 %v385, 2147483648
    %v392 = vxor.u32 %v388, 2147483648
    %v393 = vmul.f32 %v391, 1.442695
    %v394 = vpow.pop %v393
    %v395 = vmul.f32 %v392, 1.442695
    %v396 = vpow.pop %v395
    %v397 = vadd.f32 %v394, 1.0
    %v398 = vadd.f32 %v396, 1.0
    %v399 = vrcp.pop %v397
    %v400 = vmul.f32 1.0, %v399
    %v401 = vrcp.pop %v398
    %v402 = vmul.f32 1.0, %v401
    %v403 = vpack.c.bf16 %v402, %v400
    %v404 = vld [vmem:[#allocation9] sm:$0xf]
    %v405 = vld [vmem:[#allocation9 + $0x4] sm:$0xf]
    %v406 = vld [vmem:[#allocation9 + $0x8] sm:$0xf]
    %v407 = vld [vmem:[#allocation9 + $0xc] sm:$0xf]
    %v408 = vld [vmem:[#allocation9 + $0x10] sm:$0xf]
    %v409 = vld [vmem:[#allocation9 + $0x14] sm:$0xf]
    %v410 = vld [vmem:[#allocation9 + $0x18] sm:$0xf]
    %v411 = vld [vmem:[#allocation9 + $0x1c] sm:$0xf]
    %v412 = vld [vmem:[#allocation9 + $0x20] sm:$0xf]
    %v413 = vld [vmem:[#allocation9 + $0x24] sm:$0xf]
    %v414 = vld [vmem:[#allocation9 + $0x28] sm:$0xf]
    %v415 = vld [vmem:[#allocation9 + $0x2c] sm:$0xf]
    %v416 = vld [vmem:[#allocation9 + $0x30] sm:$0xf]
    %v417 = vld [vmem:[#allocation9 + $0x34] sm:$0xf]
    %v418 = vld [vmem:[#allocation9 + $0x38] sm:$0xf]
    %v419 = vld [vmem:[#allocation9 + $0x3c] sm:$0xf]
    %v420 = vld [vmem:[%s5] sm:$0x1]
    %v422 = vlaneseq
    %v423 = vshrl.u32 %v422, 7
    %v424 = vsub.s32 0, %v423
    %v425 = vrot.slane %v420, %v424
    %v443 = vunpack.c.l.b16 %v404
    %v444 = vunpack.c.l.b16 %v405
    %v445 = vunpack.c.l.b16 %v406
    %v446 = vunpack.c.l.b16 %v407
    %v447 = vunpack.c.l.b16 %v408
    %v448 = vunpack.c.l.b16 %v409
    %v449 = vunpack.c.l.b16 %v410
    %v450 = vunpack.c.l.b16 %v411
    %v451 = vunpack.c.l.b16 %v412
    %v452 = vunpack.c.l.b16 %v413
    %v453 = vunpack.c.l.b16 %v414
    %v454 = vunpack.c.l.b16 %v415
    %v455 = vunpack.c.l.b16 %v416
    %v456 = vunpack.c.l.b16 %v417
    %v457 = vunpack.c.l.b16 %v418
    %v458 = vunpack.c.l.b16 %v419
    %v459 = vpack.c.b16 %v444, %v443
    %v460 = vpack.c.b16 %v446, %v445
    %v461 = vpack.c.b16 %v448, %v447
    %v462 = vpack.c.b16 %v450, %v449
    %v463 = vpack.c.b16 %v452, %v451
    %v464 = vpack.c.b16 %v454, %v453
    %v465 = vpack.c.b16 %v456, %v455
    %v466 = vpack.c.b16 %v458, %v457
    %475 = vmatprep.subr.bf16.mxu0 0
    %476 = vmatpush1.bf16.msra.mxu0 %v459
    %477 = vmatprep.subr.bf16.mxu0 0
    %478 = vmatpush1.bf16.msra.mxu0 %v460
    %479 = vmatprep.subr.bf16.mxu0 0
    %480 = vmatpush1.bf16.msra.mxu0 %v461
    %481 = vmatprep.subr.bf16.mxu0 0
    %482 = vmatpush1.bf16.msra.mxu0 %v462
    %483 = vmatprep.subr.bf16.mxu0 0
    %484 = vmatpush1.bf16.msra.mxu0 %v463
    %485 = vmatprep.subr.bf16.mxu0 0
    %486 = vmatpush1.bf16.msra.mxu0 %v464
    %487 = vmatprep.subr.bf16.mxu0 0
    %488 = vmatpush1.bf16.msra.mxu0 %v465
    %489 = vmatprep.subr.bf16.mxu0 0
    %490 = vmatpush1.bf16.msra.mxu0 %v466
    %491 = vmatprep.subr.bf16.mxu0 0
    %492 = vmatpush1.bf16.msra.mxu0 0
    %493 = vmatprep.subr.bf16.mxu0 0
    %494 = vmatpush1.bf16.msra.mxu0 0
    %495 = vmatprep.subr.bf16.mxu0 0
    %496 = vmatpush1.bf16.msra.mxu0 0
    %497 = vmatprep.subr.bf16.mxu0 0
    %498 = vmatpush1.bf16.msra.mxu0 0
    %499 = vmatprep.subr.bf16.mxu0 0
    %500 = vmatpush1.bf16.msra.mxu0 0
    %501 = vmatprep.subr.bf16.mxu0 0
    %502 = vmatpush1.bf16.msra.mxu0 0
    %503 = vmatprep.subr.bf16.mxu0 0
    %504 = vmatpush1.bf16.msra.mxu0 0
    %505 = vmatprep.subr.bf16.mxu0 0
    %506 = vmatpush1.bf16.msra.mxu0 0
    %507 = vmatprep.mubr.bf16.mxu0 0
    %508 = vmatmul.mubr.bf16.gmra.mrb[0].mxu0 %v403
    %v509 = vpop.f32.mrb[0].mxu0
    %v510 = vadd.f32 %v425, %v509
    %v511 = vpop.f32.mrb[0].mxu0
    %v512 = vpop.f32.mrb[0].mxu0
    %v513 = vadd.f32 %v425, %v512
    %v514 = vpop.f32.mrb[0].mxu0
    %515 = vdwg.mxu0
    %v516 = vxor.u32 %v510, 2147483648
    %v517 = vxor.u32 %v513, 2147483648
    %v518 = vmul.f32 %v516, 1.442695
    %v519 = vpow.pop %v518
    %v520 = vmul.f32 %v517, 1.442695
    %v521 = vpow.pop %v520
    %v522 = vadd.f32 %v519, 1.0
    %v523 = vadd.f32 %v521, 1.0
    %v524 = vrcp.pop %v522
    %v525 = vmul.f32 1.0, %v524
    %v526 = vrcp.pop %v523
    %v527 = vmul.f32 1.0, %v526
    %v528 = vpack.c.bf16 %v527, %v525
    %v529 = vld [vmem:[#allocation11] sm:$0xf]
    %v530 = vld [vmem:[#allocation11 + $0x4] sm:$0xf]
    %v531 = vld [vmem:[#allocation11 + $0x8] sm:$0xf]
    %v532 = vld [vmem:[#allocation11 + $0xc] sm:$0xf]
    %v533 = vld [vmem:[#allocation11 + $0x10] sm:$0xf]
    %v534 = vld [vmem:[#allocation11 + $0x14] sm:$0xf]
    %v535 = vld [vmem:[#allocation11 + $0x18] sm:$0xf]
    %v536 = vld [vmem:[#allocation11 + $0x1c] sm:$0xf]
    %v537 = vld [vmem:[#allocation11 + $0x20] sm:$0xf]
    %v538 = vld [vmem:[#allocation11 + $0x24] sm:$0xf]
    %v539 = vld [vmem:[#allocation11 + $0x28] sm:$0xf]
    %v540 = vld [vmem:[#allocation11 + $0x2c] sm:$0xf]
    %v541 = vld [vmem:[#allocation11 + $0x30] sm:$0xf]
    %v542 = vld [vmem:[#allocation11 + $0x34] sm:$0xf]
    %v543 = vld [vmem:[#allocation11 + $0x38] sm:$0xf]
    %v544 = vld [vmem:[#allocation11 + $0x3c] sm:$0xf]
    %v545 = vld [vmem:[%s7] sm:$0x1]
    %v547 = vlaneseq
    %v548 = vshrl.u32 %v547, 7
    %v549 = vsub.s32 0, %v548
    %v550 = vrot.slane %v545, %v549
    %v568 = vunpack.c.l.b16 %v529
    %v569 = vunpack.c.l.b16 %v530
    %v570 = vunpack.c.l.b16 %v531
    %v571 = vunpack.c.l.b16 %v532
    %v572 = vunpack.c.l.b16 %v533
    %v573 = vunpack.c.l.b16 %v534
    %v574 = vunpack.c.l.b16 %v535
    %v575 = vunpack.c.l.b16 %v536
    %v576 = vunpack.c.l.b16 %v537
    %v577 = vunpack.c.l.b16 %v538
    %v578 = vunpack.c.l.b16 %v539
    %v579 = vunpack.c.l.b16 %v540
    %v580 = vunpack.c.l.b16 %v541
    %v581 = vunpack.c.l.b16 %v542
    %v582 = vunpack.c.l.b16 %v543
    %v583 = vunpack.c.l.b16 %v544
    %v584 = vpack.c.b16 %v569, %v568
    %v585 = vpack.c.b16 %v571, %v570
    %v586 = vpack.c.b16 %v573, %v572
    %v587 = vpack.c.b16 %v575, %v574
    %v588 = vpack.c.b16 %v577, %v576
    %v589 = vpack.c.b16 %v579, %v578
    %v590 = vpack.c.b16 %v581, %v580
    %v591 = vpack.c.b16 %v583, %v582
    %600 = vmatprep.subr.bf16.mxu0 0
    %601 = vmatpush1.bf16.msra.mxu0 %v584
    %602 = vmatprep.subr.bf16.mxu0 0
    %603 = vmatpush1.bf16.msra.mxu0 %v585
    %604 = vmatprep.subr.bf16.mxu0 0
    %605 = vmatpush1.bf16.msra.mxu0 %v586
    %606 = vmatprep.subr.bf16.mxu0 0
    %607 = vmatpush1.bf16.msra.mxu0 %v587
    %608 = vmatprep.subr.bf16.mxu0 0
    %609 = vmatpush1.bf16.msra.mxu0 %v588
    %610 = vmatprep.subr.bf16.mxu0 0
    %611 = vmatpush1.bf16.msra.mxu0 %v589
    %612 = vmatprep.subr.bf16.mxu0 0
    %613 = vmatpush1.bf16.msra.mxu0 %v590
    %614 = vmatprep.subr.bf16.mxu0 0
    %615 = vmatpush1.bf16.msra.mxu0 %v591
    %616 = vmatprep.subr.bf16.mxu0 0
    %617 = vmatpush1.bf16.msra.mxu0 0
    %618 = vmatprep.subr.bf16.mxu0 0
    %619 = vmatpush1.bf16.msra.mxu0 0
    %620 = vmatprep.subr.bf16.mxu0 0
    %621 = vmatpush1.bf16.msra.mxu0 0
    %622 = vmatprep.subr.bf16.mxu0 0
    %623 = vmatpush1.bf16.msra.mxu0 0
    %624 = vmatprep.subr.bf16.mxu0 0
    %625 = vmatpush1.bf16.msra.mxu0 0
    %626 = vmatprep.subr.bf16.mxu0 0
    %627 = vmatpush1.bf16.msra.mxu0 0
    %628 = vmatprep.subr.bf16.mxu0 0
    %629 = vmatpush1.bf16.msra.mxu0 0
    %630 = vmatprep.subr.bf16.mxu0 0
    %631 = vmatpush1.bf16.msra.mxu0 0
    %632 = vmatprep.mubr.bf16.mxu0 0
    %633 = vmatmul.mubr.bf16.gmra.mrb[0].mxu0 %v528
    %v634 = vpop.f32.mrb[0].mxu0
    %v635 = vadd.f32 %v550, %v634
    %v636 = vpop.f32.mrb[0].mxu0
    %v637 = vpop.f32.mrb[0].mxu0
    %v638 = vadd.f32 %v550, %v637
    %v639 = vpop.f32.mrb[0].mxu0
    %640 = vdwg.mxu0
    %v641 = vpack.c.bf16 %v638, %v635
    %v643 = vunpack.c.l.b16 %v641
    %v644 = vunpack.c.h.b16 %v641
    %v645 = vpack.c.b16 %v643, %v643
    %v646 = vpack.c.b16 %v644, %v644
    %649 = vst [vmem:[#allocation27 + $0x4] sm:$0xf] %v645
    %650 = vst [vmem:[#allocation27 + $0x10] sm:$0xf] %v646
    %v651 = vld [vmem:[#allocation12] sm:$0xf]
    %v652 = vld [vmem:[#allocation12 + $0x4] sm:$0xf]
    %v653 = vld [vmem:[#allocation12 + $0x8] sm:$0xf]
    %v654 = vld [vmem:[#allocation12 + $0xc] sm:$0xf]
    %v655 = vld [vmem:[#allocation12 + $0x10] sm:$0xf]
    %v656 = vld [vmem:[#allocation12 + $0x14] sm:$0xf]
    %v657 = vld [vmem:[#allocation12 + $0x18] sm:$0xf]
    %v658 = vld [vmem:[#allocation12 + $0x1c] sm:$0xf]
    %v659 = vld [vmem:[#allocation12 + $0x20] sm:$0xf]
    %v660 = vld [vmem:[#allocation12 + $0x24] sm:$0xf]
    %v661 = vld [vmem:[#allocation12 + $0x28] sm:$0xf]
    %v662 = vld [vmem:[#allocation12 + $0x2c] sm:$0xf]
    %v663 = vld [vmem:[#allocation12 + $0x30] sm:$0xf]
    %v664 = vld [vmem:[#allocation12 + $0x34] sm:$0xf]
    %v665 = vld [vmem:[#allocation12 + $0x38] sm:$0xf]
    %v666 = vld [vmem:[#allocation12 + $0x3c] sm:$0xf]
    %v667 = vld [vmem:[%s9] sm:$0x1]
    %v669 = vlaneseq
    %v670 = vshrl.u32 %v669, 7
    %v671 = vsub.s32 0, %v670
    %v672 = vrot.slane %v667, %v671
    %v690 = vunpack.c.l.b16 %v651
    %v691 = vunpack.c.l.b16 %v652
    %v692 = vunpack.c.l.b16 %v653
    %v693 = vunpack.c.l.b16 %v654
    %v694 = vunpack.c.l.b16 %v655
    %v695 = vunpack.c.l.b16 %v656
    %v696 = vunpack.c.l.b16 %v657
    %v697 = vunpack.c.l.b16 %v658
    %v698 = vunpack.c.l.b16 %v659
    %v699 = vunpack.c.l.b16 %v660
    %v700 = vunpack.c.l.b16 %v661
    %v701 = vunpack.c.l.b16 %v662
    %v702 = vunpack.c.l.b16 %v663
    %v703 = vunpack.c.l.b16 %v664
    %v704 = vunpack.c.l.b16 %v665
    %v705 = vunpack.c.l.b16 %v666
    %v706 = vpack.c.b16 %v691, %v690
    %v707 = vpack.c.b16 %v693, %v692
    %v708 = vpack.c.b16 %v695, %v694
    %v709 = vpack.c.b16 %v697, %v696
    %v710 = vpack.c.b16 %v699, %v698
    %v711 = vpack.c.b16 %v701, %v700
    %v712 = vpack.c.b16 %v703, %v702
    %v713 = vpack.c.b16 %v705, %v704
    %722 = vmatprep.subr.bf16.mxu0 0
    %723 = vmatpush1.bf16.msra.mxu0 %v706
    %724 = vmatprep.subr.bf16.mxu0 0
    %725 = vmatpush1.bf16.msra.mxu0 %v707
    %726 = vmatprep.subr.bf16.mxu0 0
    %727 = vmatpush1.bf16.msra.mxu0 %v708
    %728 = vmatprep.subr.bf16.mxu0 0
    %729 = vmatpush1.bf16.msra.mxu0 %v709
    %730 = vmatprep.subr.bf16.mxu0 0
    %731 = vmatpush1.bf16.msra.mxu0 %v710
    %732 = vmatprep.subr.bf16.mxu0 0
    %733 = vmatpush1.bf16.msra.mxu0 %v711
    %734 = vmatprep.subr.bf16.mxu0 0
    %735 = vmatpush1.bf16.msra.mxu0 %v712
    %736 = vmatprep.subr.bf16.mxu0 0
    %737 = vmatpush1.bf16.msra.mxu0 %v713
    %738 = vmatprep.subr.bf16.mxu0 0
    %739 = vmatpush1.bf16.msra.mxu0 0
    %740 = vmatprep.subr.bf16.mxu0 0
    %741 = vmatpush1.bf16.msra.mxu0 0
    %742 = vmatprep.subr.bf16.mxu0 0
    %743 = vmatpush1.bf16.msra.mxu0 0
    %744 = vmatprep.subr.bf16.mxu0 0
    %745 = vmatpush1.bf16.msra.mxu0 0
    %746 = vmatprep.subr.bf16.mxu0 0
    %747 = vmatpush1.bf16.msra.mxu0 0
    %748 = vmatprep.subr.bf16.mxu0 0
    %749 = vmatpush1.bf16.msra.mxu0 0
    %750 = vmatprep.subr.bf16.mxu0 0
    %751 = vmatpush1.bf16.msra.mxu0 0
    %752 = vmatprep.subr.bf16.mxu0 0
    %753 = vmatpush1.bf16.msra.mxu0 0
    %754 = vmatprep.mubr.bf16.mxu0 0
    %755 = vmatmul.mubr.bf16.gmra.mrb[0].mxu0 %v641
    %v756 = vpop.f32.mrb[0].mxu0
    %v757 = vadd.f32 %v672, %v756
    %v758 = vpop.f32.mrb[0].mxu0
    %v759 = vpop.f32.mrb[0].mxu0
    %v760 = vadd.f32 %v672, %v759
    %v761 = vpop.f32.mrb[0].mxu0
    %762 = vdwg.mxu0
    %v763 = vxor.u32 %v757, 2147483648
    %v764 = vxor.u32 %v760, 2147483648
    %v765 = vmul.f32 %v763, 1.442695
    %v766 = vpow.pop %v765
    %v767 = vmul.f32 %v764, 1.442695
    %v768 = vpow.pop %v767
    %v769 = vadd.f32 %v766, 1.0
    %v770 = vadd.f32 %v768, 1.0
    %v771 = vrcp.pop %v769
    %v772 = vmul.f32 1.0, %v771
    %v773 = vrcp.pop %v770
    %v774 = vmul.f32 1.0, %v773
    %v775 = vpack.c.bf16 %v774, %v772
    %v776 = vld [vmem:[#allocation14] sm:$0xf]
    %v777 = vld [vmem:[#allocation14 + $0x4] sm:$0xf]
    %v778 = vld [vmem:[#allocation14 + $0x8] sm:$0xf]
    %v779 = vld [vmem:[#allocation14 + $0xc] sm:$0xf]
    %v780 = vld [vmem:[#allocation14 + $0x10] sm:$0xf]
    %v781 = vld [vmem:[#allocation14 + $0x14] sm:$0xf]
    %v782 = vld [vmem:[#allocation14 + $0x18] sm:$0xf]
    %v783 = vld [vmem:[#allocation14 + $0x1c] sm:$0xf]
    %v784 = vld [vmem:[#allocation14 + $0x20] sm:$0xf]
    %v785 = vld [vmem:[#allocation14 + $0x24] sm:$0xf]
    %v786 = vld [vmem:[#allocation14 + $0x28] sm:$0xf]
    %v787 = vld [vmem:[#allocation14 + $0x2c] sm:$0xf]
    %v788 = vld [vmem:[#allocation14 + $0x30] sm:$0xf]
    %v789 = vld [vmem:[#allocation14 + $0x34] sm:$0xf]
    %v790 = vld [vmem:[#allocation14 + $0x38] sm:$0xf]
    %v791 = vld [vmem:[#allocation14 + $0x3c] sm:$0xf]
    %v792 = vld [vmem:[#allocation15] sm:$0x1]
    %v794 = vlaneseq
    %v795 = vshrl.u32 %v794, 7
    %v796 = vsub.s32 0, %v795
    %v797 = vrot.slane %v792, %v796
    %v815 = vunpack.c.l.b16 %v776
    %v816 = vunpack.c.l.b16 %v777
    %v817 = vunpack.c.l.b16 %v778
    %v818 = vunpack.c.l.b16 %v779
    %v819 = vunpack.c.l.b16 %v780
    %v820 = vunpack.c.l.b16 %v781
    %v821 = vunpack.c.l.b16 %v782
    %v822 = vunpack.c.l.b16 %v783
    %v823 = vunpack.c.l.b16 %v784
    %v824 = vunpack.c.l.b16 %v785
    %v825 = vunpack.c.l.b16 %v786
    %v826 = vunpack.c.l.b16 %v787
    %v827 = vunpack.c.l.b16 %v788
    %v828 = vunpack.c.l.b16 %v789
    %v829 = vunpack.c.l.b16 %v790
    %v830 = vunpack.c.l.b16 %v791
    %v831 = vpack.c.b16 %v816, %v815
    %v832 = vpack.c.b16 %v818, %v817
    %v833 = vpack.c.b16 %v820, %v819
    %v834 = vpack.c.b16 %v822, %v821
    %v835 = vpack.c.b16 %v824, %v823
    %v836 = vpack.c.b16 %v826, %v825
    %v837 = vpack.c.b16 %v828, %v827
    %v838 = vpack.c.b16 %v830, %v829
    %847 = vmatprep.subr.bf16.mxu0 0
    %848 = vmatpush1.bf16.msra.mxu0 %v831
    %849 = vmatprep.subr.bf16.mxu0 0
    %850 = vmatpush1.bf16.msra.mxu0 %v832
    %851 = vmatprep.subr.bf16.mxu0 0
    %852 = vmatpush1.bf16.msra.mxu0 %v833
    %853 = vmatprep.subr.bf16.mxu0 0
    %854 = vmatpush1.bf16.msra.mxu0 %v834
    %855 = vmatprep.subr.bf16.mxu0 0
    %856 = vmatpush1.bf16.msra.mxu0 %v835
    %857 = vmatprep.subr.bf16.mxu0 0
    %858 = vmatpush1.bf16.msra.mxu0 %v836
    %859 = vmatprep.subr.bf16.mxu0 0
    %860 = vmatpush1.bf16.msra.mxu0 %v837
    %861 = vmatprep.subr.bf16.mxu0 0
    %862 = vmatpush1.bf16.msra.mxu0 %v838
    %863 = vmatprep.subr.bf16.mxu0 0
    %864 = vmatpush1.bf16.msra.mxu0 0
    %865 = vmatprep.subr.bf16.mxu0 0
    %866 = vmatpush1.bf16.msra.mxu0 0
    %867 = vmatprep.subr.bf16.mxu0 0
    %868 = vmatpush1.bf16.msra.mxu0 0
    %869 = vmatprep.subr.bf16.mxu0 0
    %870 = vmatpush1.bf16.msra.mxu0 0
    %871 = vmatprep.subr.bf16.mxu0 0
    %872 = vmatpush1.bf16.msra.mxu0 0
    %873 = vmatprep.subr.bf16.mxu0 0
    %874 = vmatpush1.bf16.msra.mxu0 0
    %875 = vmatprep.subr.bf16.mxu0 0
    %876 = vmatpush1.bf16.msra.mxu0 0
    %877 = vmatprep.subr.bf16.mxu0 0
    %878 = vmatpush1.bf16.msra.mxu0 0
    %879 = vmatprep.mubr.bf16.mxu0 0
    %880 = vmatmul.mubr.bf16.gmra.mrb[0].mxu0 %v775
    %v881 = vpop.f32.mrb[0].mxu0
    %v882 = vadd.f32 %v797, %v881
    %v883 = vpop.f32.mrb[0].mxu0
    %v884 = vpop.f32.mrb[0].mxu0
    %v885 = vadd.f32 %v797, %v884
    %v886 = vpop.f32.mrb[0].mxu0
    %887 = vdwg.mxu0
    %v888 = vxor.u32 %v882, 2147483648
    %v889 = vxor.u32 %v885, 2147483648
    %v890 = vmul.f32 %v888, 1.442695
    %v891 = vpow.pop %v890
    %v892 = vmul.f32 %v889, 1.442695
    %v893 = vpow.pop %v892
    %v894 = vadd.f32 %v891, 1.0
    %v895 = vadd.f32 %v893, 1.0
    %v896 = vrcp.pop %v894
    %v897 = vmul.f32 1.0, %v896
    %v898 = vrcp.pop %v895
    %v899 = vmul.f32 1.0, %v898
    %v900 = vpack.c.bf16 %v899, %v897
    %v901 = vld [vmem:[#allocation17] sm:$0xf]
    %v902 = vld [vmem:[#allocation17 + $0x4] sm:$0xf]
    %v903 = vld [vmem:[#allocation17 + $0x8] sm:$0xf]
    %v904 = vld [vmem:[#allocation17 + $0xc] sm:$0xf]
    %v905 = vld [vmem:[#allocation17 + $0x10] sm:$0xf]
    %v906 = vld [vmem:[#allocation17 + $0x14] sm:$0xf]
    %v907 = vld [vmem:[#allocation17 + $0x18] sm:$0xf]
    %v908 = vld [vmem:[#allocation17 + $0x1c] sm:$0xf]
    %v909 = vld [vmem:[#allocation17 + $0x20] sm:$0xf]
    %v910 = vld [vmem:[#allocation17 + $0x24] sm:$0xf]
    %v911 = vld [vmem:[#allocation17 + $0x28] sm:$0xf]
    %v912 = vld [vmem:[#allocation17 + $0x2c] sm:$0xf]
    %v913 = vld [vmem:[#allocation17 + $0x30] sm:$0xf]
    %v914 = vld [vmem:[#allocation17 + $0x34] sm:$0xf]
    %v915 = vld [vmem:[#allocation17 + $0x38] sm:$0xf]
    %v916 = vld [vmem:[#allocation17 + $0x3c] sm:$0xf]
    %v917 = vld [vmem:[#allocation18] sm:$0x1]
    %v919 = vlaneseq
    %v920 = vshrl.u32 %v919, 7
    %v921 = vsub.s32 0, %v920
    %v922 = vrot.slane %v917, %v921
    %v940 = vunpack.c.l.b16 %v901
    %v941 = vunpack.c.l.b16 %v902
    %v942 = vunpack.c.l.b16 %v903
    %v943 = vunpack.c.l.b16 %v904
    %v944 = vunpack.c.l.b16 %v905
    %v945 = vunpack.c.l.b16 %v906
    %v946 = vunpack.c.l.b16 %v907
    %v947 = vunpack.c.l.b16 %v908
    %v948 = vunpack.c.l.b16 %v909
    %v949 = vunpack.c.l.b16 %v910
    %v950 = vunpack.c.l.b16 %v911
    %v951 = vunpack.c.l.b16 %v912
    %v952 = vunpack.c.l.b16 %v913
    %v953 = vunpack.c.l.b16 %v914
    %v954 = vunpack.c.l.b16 %v915
    %v955 = vunpack.c.l.b16 %v916
    %v956 = vpack.c.b16 %v941, %v940
    %v957 = vpack.c.b16 %v943, %v942
    %v958 = vpack.c.b16 %v945, %v944
    %v959 = vpack.c.b16 %v947, %v946
    %v960 = vpack.c.b16 %v949, %v948
    %v961 = vpack.c.b16 %v951, %v950
    %v962 = vpack.c.b16 %v953, %v952
    %v963 = vpack.c.b16 %v955, %v954
    %972 = vmatprep.subr.bf16.mxu0 0
    %973 = vmatpush1.bf16.msra.mxu0 %v956
    %974 = vmatprep.subr.bf16.mxu0 0
    %975 = vmatpush1.bf16.msra.mxu0 %v957
    %976 = vmatprep.subr.bf16.mxu0 0
    %977 = vmatpush1.bf16.msra.mxu0 %v958
    %978 = vmatprep.subr.bf16.mxu0 0
    %979 = vmatpush1.bf16.msra.mxu0 %v959
    %980 = vmatprep.subr.bf16.mxu0 0
    %981 = vmatpush1.bf16.msra.mxu0 %v960
    %982 = vmatprep.subr.bf16.mxu0 0
    %983 = vmatpush1.bf16.msra.mxu0 %v961
    %984 = vmatprep.subr.bf16.mxu0 0
    %985 = vmatpush1.bf16.msra.mxu0 %v962
    %986 = vmatprep.subr.bf16.mxu0 0
    %987 = vmatpush1.bf16.msra.mxu0 %v963
    %988 = vmatprep.subr.bf16.mxu0 0
    %989 = vmatpush1.bf16.msra.mxu0 0
    %990 = vmatprep.subr.bf16.mxu0 0
    %991 = vmatpush1.bf16.msra.mxu0 0
    %992 = vmatprep.subr.bf16.mxu0 0
    %993 = vmatpush1.bf16.msra.mxu0 0
    %994 = vmatprep.subr.bf16.mxu0 0
    %995 = vmatpush1.bf16.msra.mxu0 0
    %996 = vmatprep.subr.bf16.mxu0 0
    %997 = vmatpush1.bf16.msra.mxu0 0
    %998 = vmatprep.subr.bf16.mxu0 0
    %999 = vmatpush1.bf16.msra.mxu0 0
    %1000 = vmatprep.subr.bf16.mxu0 0
    %1001 = vmatpush1.bf16.msra.mxu0 0
    %1002 = vmatprep.subr.bf16.mxu0 0
    %1003 = vmatpush1.bf16.msra.mxu0 0
    %1004 = vmatprep.mubr.bf16.mxu0 0
    %1005 = vmatmul.mubr.bf16.gmra.mrb[0].mxu0 %v900
    %v1006 = vpop.f32.mrb[0].mxu0
    %v1007 = vadd.f32 %v922, %v1006
    %v1008 = vpop.f32.mrb[0].mxu0
    %v1009 = vpop.f32.mrb[0].mxu0
    %v1010 = vadd.f32 %v922, %v1009
    %v1011 = vpop.f32.mrb[0].mxu0
    %1012 = vdwg.mxu0
    %v1013 = vpack.c.bf16 %v1010, %v1007
    %v1015 = vunpack.c.l.b16 %v1013
    %v1016 = vunpack.c.h.b16 %v1013
    %v1017 = vpack.c.b16 %v1015, %v1015
    %v1018 = vpack.c.b16 %v1016, %v1016
    %1021 = vst [vmem:[#allocation27] sm:$0xf] %v1017
    %1022 = vst [vmem:[#allocation27 + $0xc] sm:$0xf] %v1018
    %1023 = vst [vmem:[#allocation2] sm:$0xff] %v641
    %v1024 = vld [vmem:[#allocation6] sm:$0xf]
    %v1025 = vld [vmem:[#allocation6 + $0x4] sm:$0xf]
    %v1028 = vunpack.c.l.b16 %v1024
    %v1029 = vunpack.c.l.b16 %v1025
    %v1030 = vpack.c.b16 %v1029, %v1028
    %1032 = vst [vmem:[#allocation2 + $0x8] sm:$0xff] %v1030
    %v1033 = vld [vmem:[#allocation2] sm:$0xff]
    %v1034 = vld [vmem:[#allocation2 + $0x8] sm:$0xff]
    %v1035 = vld [vmem:[#allocation20] sm:$0xf]
    %v1036 = vld [vmem:[#allocation20 + $0x4] sm:$0xf]
    %v1037 = vld [vmem:[#allocation20 + $0x8] sm:$0xf]
    %v1038 = vld [vmem:[#allocation20 + $0xc] sm:$0xf]
    %v1039 = vld [vmem:[#allocation20 + $0x10] sm:$0xf]
    %v1040 = vld [vmem:[#allocation20 + $0x14] sm:$0xf]
    %v1041 = vld [vmem:[#allocation20 + $0x18] sm:$0xf]
    %v1042 = vld [vmem:[#allocation20 + $0x1c] sm:$0xf]
    %v1043 = vld [vmem:[#allocation20 + $0x20] sm:$0xf]
    %v1044 = vld [vmem:[#allocation20 + $0x24] sm:$0xf]
    %v1045 = vld [vmem:[#allocation20 + $0x28] sm:$0xf]
    %v1046 = vld [vmem:[#allocation20 + $0x2c] sm:$0xf]
    %v1047 = vld [vmem:[#allocation20 + $0x30] sm:$0xf]
    %v1048 = vld [vmem:[#allocation20 + $0x34] sm:$0xf]
    %v1049 = vld [vmem:[#allocation20 + $0x38] sm:$0xf]
    %v1050 = vld [vmem:[#allocation20 + $0x3c] sm:$0xf]
    %v1051 = vld [vmem:[#allocation20 + $0x40] sm:$0xf]
    %v1052 = vld [vmem:[#allocation20 + $0x44] sm:$0xf]
    %v1053 = vld [vmem:[#allocation20 + $0x48] sm:$0xf]
    %v1054 = vld [vmem:[#allocation20 + $0x4c] sm:$0xf]
    %v1055 = vld [vmem:[#allocation20 + $0x50] sm:$0xf]
    %v1056 = vld [vmem:[#allocation20 + $0x54] sm:$0xf]
    %v1057 = vld [vmem:[#allocation20 + $0x58] sm:$0xf]
    %v1058 = vld [vmem:[#allocation20 + $0x5c] sm:$0xf]
    %v1059 = vld [vmem:[#allocation20 + $0x60] sm:$0xf]
    %v1060 = vld [vmem:[#allocation20 + $0x64] sm:$0xf]
    %v1061 = vld [vmem:[#allocation20 + $0x68] sm:$0xf]
    %v1062 = vld [vmem:[#allocation20 + $0x6c] sm:$0xf]
    %v1063 = vld [vmem:[#allocation20 + $0x70] sm:$0xf]
    %v1064 = vld [vmem:[#allocation20 + $0x74] sm:$0xf]
    %v1065 = vld [vmem:[#allocation20 + $0x78] sm:$0xf]
    %v1066 = vld [vmem:[#allocation20 + $0x7c] sm:$0xf]
    %v1067 = vld [vmem:[#allocation21] sm:$0x1]
    %v1069 = vlaneseq
    %v1070 = vshrl.u32 %v1069, 7
    %v1071 = vsub.s32 0, %v1070
    %v1072 = vrot.slane %v1067, %v1071
    %v1106 = vunpack.c.l.b16 %v1035
    %v1107 = vunpack.c.l.b16 %v1036
    %v1108 = vunpack.c.l.b16 %v1037
    %v1109 = vunpack.c.l.b16 %v1038
    %v1110 = vunpack.c.l.b16 %v1039
    %v1111 = vunpack.c.l.b16 %v1040
    %v1112 = vunpack.c.l.b16 %v1041
    %v1113 = vunpack.c.l.b16 %v1042
    %v1114 = vunpack.c.l.b16 %v1043
    %v1115 = vunpack.c.l.b16 %v1044
    %v1116 = vunpack.c.l.b16 %v1045
    %v1117 = vunpack.c.l.b16 %v1046
    %v1118 = vunpack.c.l.b16 %v1047
    %v1119 = vunpack.c.l.b16 %v1048
    %v1120 = vunpack.c.l.b16 %v1049
    %v1121 = vunpack.c.l.b16 %v1050
    %v1122 = vunpack.c.l.b16 %v1051
    %v1123 = vunpack.c.l.b16 %v1052
    %v1124 = vunpack.c.l.b16 %v1053
    %v1125 = vunpack.c.l.b16 %v1054
    %v1126 = vunpack.c.l.b16 %v1055
    %v1127 = vunpack.c.l.b16 %v1056
    %v1128 = vunpack.c.l.b16 %v1057
    %v1129 = vunpack.c.l.b16 %v1058
    %v1130 = vunpack.c.l.b16 %v1059
    %v1131 = vunpack.c.l.b16 %v1060
    %v1132 = vunpack.c.l.b16 %v1061
    %v1133 = vunpack.c.l.b16 %v1062
    %v1134 = vunpack.c.l.b16 %v1063
    %v1135 = vunpack.c.l.b16 %v1064
    %v1136 = vunpack.c.l.b16 %v1065
    %v1137 = vunpack.c.l.b16 %v1066
    %v1138 = vpack.c.b16 %v1107, %v1106
    %v1139 = vpack.c.b16 %v1109, %v1108
    %v1140 = vpack.c.b16 %v1111, %v1110
    %v1141 = vpack.c.b16 %v1113, %v1112
    %v1142 = vpack.c.b16 %v1115, %v1114
    %v1143 = vpack.c.b16 %v1117, %v1116
    %v1144 = vpack.c.b16 %v1119, %v1118
    %v1145 = vpack.c.b16 %v1121, %v1120
    %v1146 = vpack.c.b16 %v1123, %v1122
    %v1147 = vpack.c.b16 %v1125, %v1124
    %v1148 = vpack.c.b16 %v1127, %v1126
    %v1149 = vpack.c.b16 %v1129, %v1128
    %v1150 = vpack.c.b16 %v1131, %v1130
    %v1151 = vpack.c.b16 %v1133, %v1132
    %v1152 = vpack.c.b16 %v1135, %v1134
    %v1153 = vpack.c.b16 %v1137, %v1136
    %1170 = vmatprep.subr.bf16.mxu0 0
    %1171 = vmatpush1.bf16.msra.mxu0 %v1138
    %1172 = vmatprep.subr.bf16.mxu0 0
    %1173 = vmatpush1.bf16.msra.mxu0 %v1139
    %1174 = vmatprep.subr.bf16.mxu0 0
    %1175 = vmatpush1.bf16.msra.mxu0 %v1140
    %1176 = vmatprep.subr.bf16.mxu0 0
    %1177 = vmatpush1.bf16.msra.mxu0 %v1141
    %1178 = vmatprep.subr.bf16.mxu0 0
    %1179 = vmatpush1.bf16.msra.mxu0 %v1142
    %1180 = vmatprep.subr.bf16.mxu0 0
    %1181 = vmatpush1.bf16.msra.mxu0 %v1143
    %1182 = vmatprep.subr.bf16.mxu0 0
    %1183 = vmatpush1.bf16.msra.mxu0 %v1144
    %1184 = vmatprep.subr.bf16.mxu0 0
    %1185 = vmatpush1.bf16.msra.mxu0 %v1145
    %1186 = vmatprep.subr.bf16.mxu0 0
    %1187 = vmatpush1.bf16.msra.mxu0 %v1146
    %1188 = vmatprep.subr.bf16.mxu0 0
    %1189 = vmatpush1.bf16.msra.mxu0 %v1147
    %1190 = vmatprep.subr.bf16.mxu0 0
    %1191 = vmatpush1.bf16.msra.mxu0 %v1148
    %1192 = vmatprep.subr.bf16.mxu0 0
    %1193 = vmatpush1.bf16.msra.mxu0 %v1149
    %1194 = vmatprep.subr.bf16.mxu0 0
    %1195 = vmatpush1.bf16.msra.mxu0 %v1150
    %1196 = vmatprep.subr.bf16.mxu0 0
    %1197 = vmatpush1.bf16.msra.mxu0 %v1151
    %1198 = vmatprep.subr.bf16.mxu0 0
    %1199 = vmatpush1.bf16.msra.mxu0 %v1152
    %1200 = vmatprep.subr.bf16.mxu0 0
    %1201 = vmatpush1.bf16.msra.mxu0 %v1153
    %1202 = vmatprep.mubr.bf16.mxu0 %v1034
    %1203 = vmatmul.mubr.bf16.gmra.mrb[0].mxu0 %v1033
    %v1204 = vpop.f32.mrb[0].mxu0
    %v1205 = vadd.f32 %v1072, %v1204
    %v1206 = vpop.f32.mrb[0].mxu0
    %v1207 = vpop.f32.mrb[0].mxu0
    %v1208 = vadd.f32 %v1072, %v1207
    %v1209 = vpop.f32.mrb[0].mxu0
    %1210 = vdwg.mxu0
    %v1211 = vxor.u32 %v1205, 2147483648
    %v1212 = vxor.u32 %v1208, 2147483648
    %v1213 = vmul.f32 %v1211, 1.442695
    %v1214 = vpow.pop %v1213
    %v1215 = vmul.f32 %v1212, 1.442695
    %v1216 = vpow.pop %v1215
    %v1217 = vadd.f32 %v1214, 1.0
    %v1218 = vadd.f32 %v1216, 1.0
    %v1219 = vrcp.pop %v1217
    %v1220 = vmul.f32 1.0, %v1219
    %v1221 = vrcp.pop %v1218
    %v1222 = vmul.f32 1.0, %v1221
    %v1223 = vpack.c.bf16 %v1222, %v1220
    %v1224 = vld [vmem:[#allocation23] sm:$0xf]
    %v1225 = vld [vmem:[#allocation23 + $0x4] sm:$0xf]
    %v1226 = vld [vmem:[#allocation23 + $0x8] sm:$0xf]
    %v1227 = vld [vmem:[#allocation23 + $0xc] sm:$0xf]
    %v1228 = vld [vmem:[#allocation23 + $0x10] sm:$0xf]
    %v1229 = vld [vmem:[#allocation23 + $0x14] sm:$0xf]
    %v1230 = vld [vmem:[#allocation23 + $0x18] sm:$0xf]
    %v1231 = vld [vmem:[#allocation23 + $0x1c] sm:$0xf]
    %v1232 = vld [vmem:[#allocation23 + $0x20] sm:$0xf]
    %v1233 = vld [vmem:[#allocation23 + $0x24] sm:$0xf]
    %v1234 = vld [vmem:[#allocation23 + $0x28] sm:$0xf]
    %v1235 = vld [vmem:[#allocation23 + $0x2c] sm:$0xf]
    %v1236 = vld [vmem:[#allocation23 + $0x30] sm:$0xf]
    %v1237 = vld [vmem:[#allocation23 + $0x34] sm:$0xf]
    %v1238 = vld [vmem:[#allocation23 + $0x38] sm:$0xf]
    %v1239 = vld [vmem:[#allocation23 + $0x3c] sm:$0xf]
    %v1240 = vld [vmem:[#allocation24] sm:$0x1]
    %v1242 = vlaneseq
    %v1243 = vshrl.u32 %v1242, 7
    %v1244 = vsub.s32 0, %v1243
    %v1245 = vrot.slane %v1240, %v1244
    %v1263 = vunpack.c.l.b16 %v1224
    %v1264 = vunpack.c.l.b16 %v1225
    %v1265 = vunpack.c.l.b16 %v1226
    %v1266 = vunpack.c.l.b16 %v1227
    %v1267 = vunpack.c.l.b16 %v1228
    %v1268 = vunpack.c.l.b16 %v1229
    %v1269 = vunpack.c.l.b16 %v1230
    %v1270 = vunpack.c.l.b16 %v1231
    %v1271 = vunpack.c.l.b16 %v1232
    %v1272 = vunpack.c.l.b16 %v1233
    %v1273 = vunpack.c.l.b16 %v1234
    %v1274 = vunpack.c.l.b16 %v1235
    %v1275 = vunpack.c.l.b16 %v1236
    %v1276 = vunpack.c.l.b16 %v1237
    %v1277 = vunpack.c.l.b16 %v1238
    %v1278 = vunpack.c.l.b16 %v1239
    %v1279 = vpack.c.b16 %v1264, %v1263
    %v1280 = vpack.c.b16 %v1266, %v1265
    %v1281 = vpack.c.b16 %v1268, %v1267
    %v1282 = vpack.c.b16 %v1270, %v1269
    %v1283 = vpack.c.b16 %v1272, %v1271
    %v1284 = vpack.c.b16 %v1274, %v1273
    %v1285 = vpack.c.b16 %v1276, %v1275
    %v1286 = vpack.c.b16 %v1278, %v1277
    %1295 = vmatprep.subr.bf16.mxu0 0
    %1296 = vmatpush1.bf16.msra.mxu0 %v1279
    %1297 = vmatprep.subr.bf16.mxu0 0
    %1298 = vmatpush1.bf16.msra.mxu0 %v1280
    %1299 = vmatprep.subr.bf16.mxu0 0
    %1300 = vmatpush1.bf16.msra.mxu0 %v1281
    %1301 = vmatprep.subr.bf16.mxu0 0
    %1302 = vmatpush1.bf16.msra.mxu0 %v1282
    %1303 = vmatprep.subr.bf16.mxu0 0
    %1304 = vmatpush1.bf16.msra.mxu0 %v1283
    %1305 = vmatprep.subr.bf16.mxu0 0
    %1306 = vmatpush1.bf16.msra.mxu0 %v1284
    %1307 = vmatprep.subr.bf16.mxu0 0
    %1308 = vmatpush1.bf16.msra.mxu0 %v1285
    %1309 = vmatprep.subr.bf16.mxu0 0
    %1310 = vmatpush1.bf16.msra.mxu0 %v1286
    %1311 = vmatprep.subr.bf16.mxu0 0
    %1312 = vmatpush1.bf16.msra.mxu0 0
    %1313 = vmatprep.subr.bf16.mxu0 0
    %1314 = vmatpush1.bf16.msra.mxu0 0
    %1315 = vmatprep.subr.bf16.mxu0 0
    %1316 = vmatpush1.bf16.msra.mxu0 0
    %1317 = vmatprep.subr.bf16.mxu0 0
    %1318 = vmatpush1.bf16.msra.mxu0 0
    %1319 = vmatprep.subr.bf16.mxu0 0
    %1320 = vmatpush1.bf16.msra.mxu0 0
    %1321 = vmatprep.subr.bf16.mxu0 0
    %1322 = vmatpush1.bf16.msra.mxu0 0
    %1323 = vmatprep.subr.bf16.mxu0 0
    %1324 = vmatpush1.bf16.msra.mxu0 0
    %1325 = vmatprep.subr.bf16.mxu0 0
    %1326 = vmatpush1.bf16.msra.mxu0 0
    %1327 = vmatprep.mubr.bf16.mxu0 0
    %1328 = vmatmul.mubr.bf16.gmra.mrb[0].mxu0 %v1223
    %v1329 = vpop.f32.mrb[0].mxu0
    %v1330 = vadd.f32 %v1245, %v1329
    %v1331 = vpop.f32.mrb[0].mxu0
    %v1332 = vpop.f32.mrb[0].mxu0
    %v1333 = vadd.f32 %v1245, %v1332
    %v1334 = vpop.f32.mrb[0].mxu0
    %1335 = vdwg.mxu0
    %v1336 = vxor.u32 %v1330, 2147483648
    %v1337 = vxor.u32 %v1333, 2147483648
    %v1338 = vmul.f32 %v1336, 1.442695
    %v1339 = vpow.pop %v1338
    %v1340 = vmul.f32 %v1337, 1.442695
    %v1341 = vpow.pop %v1340
    %v1342 = vadd.f32 %v1339, 1.0
    %v1343 = vadd.f32 %v1341, 1.0
    %v1344 = vrcp.pop %v1342
    %v1345 = vmul.f32 1.0, %v1344
    %v1346 = vrcp.pop %v1343
    %v1347 = vmul.f32 1.0, %v1346
    %v1348 = vpack.c.bf16 %v1347, %v1345
    %v1349 = vld [vmem:[%s18] sm:$0xf]
    %v1350 = vld [vmem:[%s18 + $0x4] sm:$0xf]
    %v1351 = vld [vmem:[%s18 + $0x8] sm:$0xf]
    %v1352 = vld [vmem:[%s18 + $0xc] sm:$0xf]
    %v1353 = vld [vmem:[%s18 + $0x10] sm:$0xf]
    %v1354 = vld [vmem:[%s18 + $0x14] sm:$0xf]
    %v1355 = vld [vmem:[%s18 + $0x18] sm:$0xf]
    %v1356 = vld [vmem:[%s18 + $0x1c] sm:$0xf]
    %v1357 = vld [vmem:[%s18 + $0x20] sm:$0xf]
    %v1358 = vld [vmem:[%s18 + $0x24] sm:$0xf]
    %v1359 = vld [vmem:[%s18 + $0x28] sm:$0xf]
    %v1360 = vld [vmem:[%s18 + $0x2c] sm:$0xf]
    %v1361 = vld [vmem:[%s18 + $0x30] sm:$0xf]
    %v1362 = vld [vmem:[%s18 + $0x34] sm:$0xf]
    %v1363 = vld [vmem:[%s18 + $0x38] sm:$0xf]
    %v1364 = vld [vmem:[%s18 + $0x3c] sm:$0xf]
    %v1365 = vld [vmem:[%s19] sm:$0x1]
    %v1367 = vlaneseq
    %v1368 = vshrl.u32 %v1367, 7
    %v1369 = vsub.s32 0, %v1368
    %v1370 = vrot.slane %v1365, %v1369
    %v1388 = vunpack.c.l.b16 %v1349
    %v1389 = vunpack.c.l.b16 %v1350
    %v1390 = vunpack.c.l.b16 %v1351
    %v1391 = vunpack.c.l.b16 %v1352
    %v1392 = vunpack.c.l.b16 %v1353
    %v1393 = vunpack.c.l.b16 %v1354
    %v1394 = vunpack.c.l.b16 %v1355
    %v1395 = vunpack.c.l.b16 %v1356
    %v1396 = vunpack.c.l.b16 %v1357
    %v1397 = vunpack.c.l.b16 %v1358
    %v1398 = vunpack.c.l.b16 %v1359
    %v1399 = vunpack.c.l.b16 %v1360
    %v1400 = vunpack.c.l.b16 %v1361
    %v1401 = vunpack.c.l.b16 %v1362
    %v1402 = vunpack.c.l.b16 %v1363
    %v1403 = vunpack.c.l.b16 %v1364
    %v1404 = vpack.c.b16 %v1389, %v1388
    %v1405 = vpack.c.b16 %v1391, %v1390
    %v1406 = vpack.c.b16 %v1393, %v1392
    %v1407 = vpack.c.b16 %v1395, %v1394
    %v1408 = vpack.c.b16 %v1397, %v1396
    %v1409 = vpack.c.b16 %v1399, %v1398
    %v1410 = vpack.c.b16 %v1401, %v1400
    %v1411 = vpack.c.b16 %v1403, %v1402
    %1420 = vmatprep.subr.bf16.mxu0 0
    %1421 = vmatpush1.bf16.msra.mxu0 %v1404
    %1422 = vmatprep.subr.bf16.mxu0 0
    %1423 = vmatpush1.bf16.msra.mxu0 %v1405
    %1424 = vmatprep.subr.bf16.mxu0 0
    %1425 = vmatpush1.bf16.msra.mxu0 %v1406
    %1426 = vmatprep.subr.bf16.mxu0 0
    %1427 = vmatpush1.bf16.msra.mxu0 %v1407
    %1428 = vmatprep.subr.bf16.mxu0 0
    %1429 = vmatpush1.bf16.msra.mxu0 %v1408
    %1430 = vmatprep.subr.bf16.mxu0 0
    %1431 = vmatpush1.bf16.msra.mxu0 %v1409
    %1432 = vmatprep.subr.bf16.mxu0 0
    %1433 = vmatpush1.bf16.msra.mxu0 %v1410
    %1434 = vmatprep.subr.bf16.mxu0 0
    %1435 = vmatpush1.bf16.msra.mxu0 %v1411
    %1436 = vmatprep.subr.bf16.mxu0 0
    %1437 = vmatpush1.bf16.msra.mxu0 0
    %1438 = vmatprep.subr.bf16.mxu0 0
    %1439 = vmatpush1.bf16.msra.mxu0 0
    %1440 = vmatprep.subr.bf16.mxu0 0
    %1441 = vmatpush1.bf16.msra.mxu0 0
    %1442 = vmatprep.subr.bf16.mxu0 0
    %1443 = vmatpush1.bf16.msra.mxu0 0
    %1444 = vmatprep.subr.bf16.mxu0 0
    %1445 = vmatpush1.bf16.msra.mxu0 0
    %1446 = vmatprep.subr.bf16.mxu0 0
    %1447 = vmatpush1.bf16.msra.mxu0 0
    %1448 = vmatprep.subr.bf16.mxu0 0
    %1449 = vmatpush1.bf16.msra.mxu0 0
    %1450 = vmatprep.subr.bf16.mxu0 0
    %1451 = vmatpush1.bf16.msra.mxu0 0
    %1452 = vmatprep.mubr.bf16.mxu0 0
    %1453 = vmatmul.mubr.bf16.gmra.mrb[0].mxu0 %v1348
    %v1454 = vpop.f32.mrb[0].mxu0
    %v1455 = vadd.f32 %v1370, %v1454
    %v1456 = vpop.f32.mrb[0].mxu0
    %v1457 = vpop.f32.mrb[0].mxu0
    %v1458 = vadd.f32 %v1370, %v1457
    %v1459 = vpop.f32.mrb[0].mxu0
    %1460 = vdwg.mxu0
    %v1461 = vpack.c.bf16 %v1458, %v1455
    %v1463 = vunpack.c.l.b16 %v1461
    %v1464 = vunpack.c.h.b16 %v1461
    %v1465 = vpack.c.b16 %v1463, %v1463
    %v1466 = vpack.c.b16 %v1464, %v1464
    %1469 = vst [vmem:[#allocation27 + $0x8] sm:$0xf] %v1465
    %1470 = vst [vmem:[#allocation27 + $0x14] sm:$0xf] %v1466
    %v1471 = vmul.f32 %v1455, %v1455
    %v1472 = vmul.f32 %v1458, %v1458
    %1473 = vadd.xlane.f32.xlu0 %v1471
    %v1474 = vpop.xlane.xlu0 %1473
    %1475 = vadd.xlane.f32.xlu0 %v1472
    %v1476 = vpop.xlane.xlu0 %1475
    %v1477 = vld [vmem:[#allocation26] sm:$0xff]
    %v1478 = vld [vmem:[#allocation26 + $0x8] sm:$0xff]
    %v1479 = vld [vmem:[#allocation26 + $0x10] sm:$0xff]
    %v1480 = vld [vmem:[#allocation26 + $0x18] sm:$0xff]
    %v1481 = vld [vmem:[#allocation26 + $0x20] sm:$0xff]
    %v1482 = vld [vmem:[#allocation26 + $0x28] sm:$0xff]
    %v1483 = vld [vmem:[#allocation26 + $0x30] sm:$0xff]
    %v1484 = vld [vmem:[#allocation26 + $0x38] sm:$0xff]
    %v1485 = vld [vmem:[#allocation26 + $0x40] sm:$0xff]
    %v1486 = vld [vmem:[#allocation26 + $0x48] sm:$0xff]
    %v1487 = vld [vmem:[#allocation26 + $0x50] sm:$0xff]
    %v1488 = vld [vmem:[#allocation26 + $0x58] sm:$0xff]
    %v1489 = vld [vmem:[#allocation26 + $0x60] sm:$0xff]
    %v1490 = vld [vmem:[#allocation26 + $0x68] sm:$0xff]
    %v1491 = vld [vmem:[#allocation26 + $0x70] sm:$0xff]
    %v1492 = vld [vmem:[#allocation26 + $0x78] sm:$0xff]
    %1493 = vmatprep.subr.mxu0 0.0
    %1494 = vmatpush1.xpose.msra.mxu0 %v1477
    %1495 = vmatprep.subr.mxu0 0.0
    %1496 = vmatpush1.xpose.msra.mxu0 %v1478
    %1497 = vmatprep.subr.mxu0 0.0
    %1498 = vmatpush1.xpose.msra.mxu0 %v1479
    %1499 = vmatprep.subr.mxu0 0.0
    %1500 = vmatpush1.xpose.msra.mxu0 %v1480
    %1501 = vmatprep.subr.mxu0 0.0
    %1502 = vmatpush1.xpose.msra.mxu0 %v1481
    %1503 = vmatprep.subr.mxu0 0.0
    %1504 = vmatpush1.xpose.msra.mxu0 %v1482
    %1505 = vmatprep.subr.mxu0 0.0
    %1506 = vmatpush1.xpose.msra.mxu0 %v1483
    %1507 = vmatprep.subr.mxu0 0.0
    %1508 = vmatpush1.xpose.msra.mxu0 %v1484
    %1509 = vmatprep.subr.mxu0 0.0
    %1510 = vmatpush1.xpose.msra.mxu0 %v1485
    %1511 = vmatprep.subr.mxu0 0.0
    %1512 = vmatpush1.xpose.msra.mxu0 %v1486
    %1513 = vmatprep.subr.mxu0 0.0
    %1514 = vmatpush1.xpose.msra.mxu0 %v1487
    %1515 = vmatprep.subr.mxu0 0.0
    %1516 = vmatpush1.xpose.msra.mxu0 %v1488
    %1517 = vmatprep.subr.mxu0 0.0
    %1518 = vmatpush1.xpose.msra.mxu0 %v1489
    %1519 = vmatprep.subr.mxu0 0.0
    %1520 = vmatpush1.xpose.msra.mxu0 %v1490
    %1521 = vmatprep.subr.mxu0 0.0
    %1522 = vmatpush1.xpose.msra.mxu0 %v1491
    %1523 = vmatprep.subr.mxu0 0.0
    %1524 = vmatpush1.xpose.msra.mxu0 %v1492
    %1525 = vmatprep.subr.mxu0 0.0
    %1526 = vmatpush1.xpose.msra.mxu0 0.0
    %1527 = vmatprep.subr.mxu0 0.0
    %1528 = vmatpush1.xpose.msra.mxu0 0.0
    %1529 = vmatprep.subr.mxu0 0.0
    %1530 = vmatpush1.xpose.msra.mxu0 0.0
    %1531 = vmatprep.subr.mxu0 0.0
    %1532 = vmatpush1.xpose.msra.mxu0 0.0
    %1533 = vmatprep.subr.mxu0 0.0
    %1534 = vmatpush1.xpose.msra.mxu0 0.0
    %1535 = vmatprep.subr.mxu0 0.0
    %1536 = vmatpush1.xpose.msra.mxu0 0.0
    %1537 = vmatprep.subr.mxu0 0.0
    %1538 = vmatpush1.xpose.msra.mxu0 0.0
    %1539 = vmatprep.subr.mxu0 0.0
    %1540 = vmatpush1.xpose.msra.mxu0 0.0
    %1541 = vmatprep.subr.mxu0 0.0
    %1542 = vmatpush1.xpose.msra.mxu0 0.0
    %1543 = vmatprep.subr.mxu0 0.0
    %1544 = vmatpush1.xpose.msra.mxu0 0.0
    %1545 = vmatprep.subr.mxu0 0.0
    %1546 = vmatpush1.xpose.msra.mxu0 0.0
    %1547 = vmatprep.subr.mxu0 0.0
    %1548 = vmatpush1.xpose.msra.mxu0 0.0
    %1549 = vmatprep.subr.mxu0 0.0
    %1550 = vmatpush1.xpose.msra.mxu0 0.0
    %1551 = vmatprep.subr.mxu0 0.0
    %1552 = vmatpush1.xpose.msra.mxu0 0.0
    %1553 = vmatprep.subr.mxu0 0.0
    %1554 = vmatpush1.xpose.msra.mxu0 0.0
    %1555 = vmatprep.subr.mxu0 0.0
    %1556 = vmatpush1.xpose.msra.mxu0 0.0
    %1557 = vmatprep.mubr.f32.mxu0 0.0
    %1558 = vmatmul.mubr.f32.gmra.mrb[0].mxu0 %v1455
    %v1559 = vpop.f32.mrb[0].mxu0
    %v1560 = vadd.f32 0.0, %v1559
    %v1561 = vpop.f32.mrb[0].mxu0
    %1562 = vmatprep.mubr.f32.mxu0 0.0
    %1563 = vmatmul.mubr.f32.gmra.mrb[0].mxu0 %v1458
    %v1564 = vpop.f32.mrb[0].mxu0
    %v1565 = vadd.f32 0.0, %v1564
    %v1566 = vpop.f32.mrb[0].mxu0
    %1567 = vdwg.mxu0
    %v1568 = vld [vmem:[%s21] sm:$0x1]
    %v1570 = vlaneseq
    %v1571 = vshrl.u32 %v1570, 7
    %v1572 = vsub.s32 0, %v1571
    %v1573 = vrot.slane %v1568, %v1572
    %v1575 = vadd.f32 %v1474, %v1573
    %v1576 = vadd.f32 %v1476, %v1573
    %v1577 = vmul.f32 %v1560, 2.0
    %v1578 = vmul.f32 %v1565, 2.0
    %v1579 = vsub.f32 %v1575, %v1577
    %v1580 = vsub.f32 %v1576, %v1578
    %v1581 = vmax.f32 %v1579, 0.0
    %v1582 = vmax.f32 %v1580, 0.0
    %v1583 = vadd.f32 %v1581, 1.0
    %v1584 = vadd.f32 %v1582, 1.0
    %v1585 = vrcp.pop %v1583
    %v1586 = vmul.f32 1.0, %v1585
    %v1587 = vrcp.pop %v1584
    %v1588 = vmul.f32 1.0, %v1587
    %1589 = vadd.xlane.f32.xlu0 %v1586
    %v1590 = vpop.xlane.xlu0 %1589
    %1591 = vadd.xlane.f32.xlu0 %v1588
    %v1592 = vpop.xlane.xlu0 %1591
    %v1593 = vrcp.pop %v1590
    %v1594 = vrcp.pop %v1592
    %v1595 = vmul.f32 %v1586, %v1593
    %v1596 = vmul.f32 %v1588, %v1594
    %1597 = vst [vmem:[#allocation28] sm:$0xff] %v1595
    %1598 = vst [vmem:[#allocation28 + $0x8] sm:$0xff] %v1596
    // Predicated region
    $region150: #{tpu_custom_call.1} parent=1 // pred_check
      _
    $region151: #{tpu_custom_call.1} parent=1 // pred_check_branch
      %1600 = sbr.rel (0) target = $region153
    $region152: #{tpu_custom_call.1} parent=1 // pred_region
      %s1602 = ssub.s32 384, 384
      %1603 = vsyncadd [#allocation5], %s1602
      %s1604 = sshll.u32 [#allocation27], 4
      %s1605 = int_to_ptr.vmem [resolvable:$true] %s1604
      %1610 = dma.vmem_to_hbm [thread:$0]  %s1605, 384, %s22, [#allocation5], 192, 192, 12
    $region153: #{tpu_custom_call.1} parent=1 // pred_fallthru
      _
    // Predicated region
    $region154: #{tpu_custom_call.1} parent=1 // pred_check
      _
    $region155: #{tpu_custom_call.1} parent=1 // pred_check_branch
      %1612 = sbr.rel (0) target = $region157
    $region156: #{tpu_custom_call.1} parent=1 // pred_region
      %s1614 = ssub.s32 256, 256
      %1615 = vsyncadd [#allocation29], %s1614
      %s1616 = sshll.u32 [#allocation28], 4
      %s1617 = int_to_ptr.vmem [resolvable:$true] %s1616
      %1622 = dma.vmem_to_hbm [thread:$0]  %s1617, 256, %s23, [#allocation29], 128, 128, 8
    $region157: #{tpu_custom_call.1} parent=1 // pred_fallthru
      _
    // Predicated region
    $region158: #{tpu_custom_call.1} parent=1 // pred_check
      _
    $region159: #{tpu_custom_call.1} parent=1 // pred_check_branch
      %1624 = sbr.rel (0) target = $region161
    $region160: #{tpu_custom_call.1} parent=1 // pred_region
      %1625 = dma.done [#allocation5], 384
    $region161: #{tpu_custom_call.1} parent=1 // pred_fallthru
      _
    // Predicated region
    $region162: #{tpu_custom_call.1} parent=1 // pred_check
      _
    $region163: #{tpu_custom_call.1} parent=1 // pred_check_branch
      %1627 = sbr.rel (0) target = $region165
    $region164: #{tpu_custom_call.1} parent=1 // pred_region
      %1628 = dma.done [#allocation29], 256
    $region165: #{tpu_custom_call.1} parent=1 // pred_fallthru
      _
    %1629 = vsyncpa [#allocation4], 1
    %1630 = vsyncpa [#allocation7], 1
    %1631 = vsyncpa [#allocation10], 1
    %1632 = vsyncpa [#allocation13], 1
    %1633 = vsyncpa [#allocation16], 1
    %1634 = vsyncpa [#allocation19], 1
    %1635 = vsyncpa [#allocation22], 1
    %1636 = vsyncpa [#allocation25], 1
    %1637 = vsyncpa [#allocation5], 1
    %1638 = vsyncpa [#allocation29], 1

// kernel: tpu_custom_call.1
$region0: #{tpu_custom_call.1}
  #allocation0 [shape = 'u32[]', space=smem, size = 0x4, offset = 0x4, fixed_abs, tag = 'smem constant byte address 0x4 - core index']
  #allocation1 [shape = 'u32[144,128]{1,0:T(1,128)}', space=vmem, size = 0x12000, scoped, tag = 'internal scratch']
  #allocation2 [shape = 'bf16[16,256]{1,0:T(16,128)(2,1)}', space=vmem, size = 0x2000, scoped, tag = 'scratch operand']
  %s0 = inlined_call_operand.hbm [shape: bf16[16,128], index: 0, kind: input, shape index: {}]
  %s1 = inlined_call_operand.hbm [shape: bf16[16,128], index: 1, kind: input, shape index: {}]
  %s2 = inlined_call_operand.hbm [shape: bf16[128,128], index: 2, kind: input, shape index: {}]
  %s3 = inlined_call_operand.vmem [shape: f32[1,128], index: 3, kind: input, shape index: {}]
  %s4 = inlined_call_operand.hbm [shape: bf16[128,128], index: 4, kind: input, shape index: {}]
  %s5 = inlined_call_operand.vmem [shape: f32[1,128], index: 5, kind: input, shape index: {}]
  %s6 = inlined_call_operand.hbm [shape: bf16[128,128], index: 6, kind: input, shape index: {}]
  %s7 = inlined_call_operand.vmem [shape: f32[1,128], index: 7, kind: input, shape index: {}]
  %s8 = inlined_call_operand.hbm [shape: bf16[128,128], index: 8, kind: input, shape index: {}]
  %s9 = inlined_call_operand.vmem [shape: f32[1,128], index: 9, kind: input, shape index: {}]
  %s10 = inlined_call_operand.hbm [shape: bf16[128,128], index: 10, kind: input, shape index: {}]
  %s11 = inlined_call_operand.hbm [shape: f32[1,128], index: 11, kind: input, shape index: {}]
  %s12 = inlined_call_operand.hbm [shape: bf16[128,128], index: 12, kind: input, shape index: {}]
  %s13 = inlined_call_operand.hbm [shape: f32[1,128], index: 13, kind: input, shape index: {}]
  %s14 = inlined_call_operand.hbm [shape: bf16[256,128], index: 14, kind: input, shape index: {}]
  %s15 = inlined_call_operand.hbm [shape: f32[1,128], index: 15, kind: input, shape index: {}]
  %s16 = inlined_call_operand.hbm [shape: bf16[128,128], index: 16, kind: input, shape index: {}]
  %s17 = inlined_call_operand.hbm [shape: f32[1,128], index: 17, kind: input, shape index: {}]
  %s18 = inlined_call_operand.vmem [shape: bf16[128,128], index: 18, kind: input, shape index: {}]
  %s19 = inlined_call_operand.vmem [shape: f32[1,128], index: 19, kind: input, shape index: {}]
  %s20 = inlined_call_operand.hbm [shape: f32[128,128], index: 20, kind: input, shape index: {}]
  %s21 = inlined_call_operand.vmem [shape: f32[1,128], index: 21, kind: input, shape index: {}]
  %s22 = inlined_call_operand.hbm [shape: bf16[16,384], index: 22, kind: output, shape index: {0}]
  %s23 = inlined_call_operand.hbm [shape: f32[16,128], index: 23, kind: output, shape index: {1}]
  %24 = xla_tuple %s22, %s23
  %s25 = sld [smem:[#allocation0]]
  $region166: #{tpu_custom_call.1} parent=0
    _
  %s27 = ssub.s32 1, %s25
  %s28 = scalar_select 0, %s27, %s25
  $region1: #{tpu_custom_call.1} parent=0
    #allocation3 [shape = 'u8[4096]{0}', space=vmem, size = 0x1000, scoped, tag = 'input window, operand 0, single buffered']
    #allocation4 [shape = 's32[1]{0}', space=sflag, size = 0x4, scoped, tag = 'scoped memory for tpu_custom_call.1']
    #allocation5 [shape = 's32[1]{0}', space=sflag, size = 0x4, scoped, tag = 'scoped memory for tpu_custom_call.1']
    #allocation6 [shape = 'u8[4096]{0}', space=vmem, size = 0x1000, scoped, tag = 'input window, operand 1, single buffered']
    #allocation7 [shape = 's32[1]{0}', space=sflag, size = 0x4, scoped, tag = 'scoped memory for tpu_custom_call.1']
    #allocation8 [shape = 'u8[32768]{0}', space=vmem, size = 0x8000, scoped, tag = 'input window, operand 2, single buffered']
    #allocation9 [shape = 'u8[32768]{0}', space=vmem, size = 0x8000, scoped, tag = 'input window, operand 4, single buffered']
    #allocation10 [shape = 's32[1]{0}', space=sflag, size = 0x4, scoped, tag = 'scoped memory for tpu_custom_call.1']
    #allocation11 [shape = 'u8[32768]{0}', space=vmem, size = 0x8000, scoped, tag = 'input window, operand 6, single buffered']
    #allocation12 [shape = 'u8[32768]{0}', space=vmem, size = 0x8000, scoped, tag = 'input window, operand 8, single buffered']
    #allocation13 [shape = 's32[1]{0}', space=sflag, size = 0x4, scoped, tag = 'scoped memory for tpu_custom_call.1']
    #allocation14 [shape = 'u8[32768]{0}', space=vmem, size = 0x8000, scoped, tag = 'input window, operand 10, single buffered']
    #allocation15 [shape = 'u8[512]{0}', space=vmem, size = 0x400, scoped, tag = 'input window, operand 11, single buffered']
    #allocation16 [shape = 's32[1]{0}', space=sflag, size = 0x4, scoped, tag = 'scoped memory for tpu_custom_call.1']
    #allocation17 [shape = 'u8[32768]{0}', space=vmem, size = 0x8000, scoped, tag = 'input window, operand 12, single buffered']
    #allocation18 [shape = 'u8[512]{0}', space=vmem, size = 0x400, scoped, tag = 'input window, operand 13, single buffered']
    #allocation19 [shape = 's32[1]{0}', space=sflag, size = 0x4, scoped, tag = 'scoped memory for tpu_custom_call.1']
    #allocation20 [shape = 'u8[65536]{0}', space=vmem, size = 0x10000, scoped, tag = 'input window, operand 14, single buffered']
    #allocation21 [shape = 'u8[512]{0}', space=vmem, size = 0x400, scoped, tag = 'input window, operand 15, single buffered']
    #allocation22 [shape = 's32[1]{0}', space=sflag, size = 0x4, scoped, tag = 'scoped memory for tpu_custom_call.1']
    #allocation23 [shape = 'u8[32768]{0}', space=vmem, size = 0x8000, scoped, tag = 'input window, operand 16, single buffered']
    #allocation24 [shape = 'u8[512]{0}', space=vmem, size = 0x400, scoped, tag = 'input window, operand 17, single buffered']
    #allocation25 [shape = 's32[1]{0}', space=sflag, size = 0x4, scoped, tag = 'scoped memory for tpu_custom_call.1']
    #allocation26 [shape = 'u8[65536]{0}', space=vmem, size = 0x10000, scoped, tag = 'input window, operand 20, single buffered']
    #allocation27 [shape = 'u8[12288]{0}', space=vmem, size = 0x3000, scoped, tag = 'output window, operand 0, single buffered']
    #allocation28 [shape = 'u8[8192]{0}', space=vmem, size = 0x2000, scoped, tag = 'output window, operand 1, single buffered']
    #allocation29 [shape = 's32[1]{0}', space=sflag, size = 0x4, scoped, tag = 'scoped memory for tpu_custom_call.1']
    %29 = vsyncpa [#allocation4], 0
    %30 = vsyncpa [#allocation7], 0
    %31 = vsyncpa [#allocation10], 0
    %32 = vsyncpa [#allocation13], 0
    %33 = vsyncpa [#allocation16], 0
    %34 = vsyncpa [#allocation19], 0
    %35 = vsyncpa [#allocation22], 0
    %36 = vsyncpa [#allocation25], 0
    %37 = vsyncpa [#allocation5], 0
    %38 = vsyncpa [#allocation29], 0
    // Predicated region
    $region2: #{tpu_custom_call.1} parent=1 // pred_check
      _
    $region3: #{tpu_custom_call.1} parent=1 // pred_check_branch
      %40 = sbr.rel (0) target = $region5
    $region4: #{tpu_custom_call.1} parent=1 // pred_region
      %s42 = ssub.s32 128, 128
      %43 = vsyncadd [#allocation4], %s42
      %s44 = sshll.u32 [#allocation3], 4
      %s45 = int_to_ptr.vmem [resolvable:$true] %s44
      %50 = dma.hbm_to_vmem [thread:$0]  %s0, 128, %s45, [#allocation4], 64, 64, 4
    $region5: #{tpu_custom_call.1} parent=1 // pred_fallthru
      _
    // Predicated region
    $region6: #{tpu_custom_call.1} parent=1 // pred_check
      _
    $region7: #{tpu_custom_call.1} parent=1 // pred_check_branch
      %52 = sbr.rel (0) target = $region9
    $region8: #{tpu_custom_call.1} parent=1 // pred_region
      %s54 = ssub.s32 128, 128
      %55 = vsyncadd [#allocation7], %s54
      %s56 = sshll.u32 [#allocation6], 4
      %s57 = int_to_ptr.vmem [resolvable:$true] %s56
      %62 = dma.hbm_to_vmem [thread:$0]  %s1, 128, %s57, [#allocation7], 64, 64, 4
    $region9: #{tpu_custom_call.1} parent=1 // pred_fallthru
      _
    // Predicated region
    $region10: #{tpu_custom_call.1} parent=1 // pred_check
      _
    $region11: #{tpu_custom_call.1} parent=1 // pred_check_branch
      %64 = sbr.rel (0) target = $region13
    $region12: #{tpu_custom_call.1} parent=1 // pred_region
      %s66 = ssub.s32 1024, 1024
      %67 = vsyncadd [#allocation7], %s66
      %s68 = sshll.u32 [#allocation8], 4
      %s69 = int_to_ptr.vmem [resolvable:$true] %s68
      %74 = dma.hbm_to_vmem [thread:$0]  %s2, 1024, %s69, [#allocation7], 64, 64, 4
    $region13: #{tpu_custom_call.1} parent=1 // pred_fallthru
      _
    // Predicated region
    $region14: #{tpu_custom_call.1} parent=1 // pred_check
      _
    $region15: #{tpu_custom_call.1} parent=1 // pred_check_branch
      %76 = sbr.rel (0) target = $region17
    $region16: #{tpu_custom_call.1} parent=1 // pred_region
      _
    $region17: #{tpu_custom_call.1} parent=1 // pred_fallthru
      _
    // Predicated region
    $region18: #{tpu_custom_call.1} parent=1 // pred_check
      _
    $region19: #{tpu_custom_call.1} parent=1 // pred_check_branch
      %78 = sbr.rel (0) target = $region21
    $region20: #{tpu_custom_call.1} parent=1 // pred_region
      %s80 = ssub.s32 1024, 1024
      %81 = vsyncadd [#allocation10], %s80
      %s82 = sshll.u32 [#allocation9], 4
      %s83 = int_to_ptr.vmem [resolvable:$true] %s82
      %88 = dma.hbm_to_vmem [thread:$0]  %s4, 1024, %s83, [#allocation10], 64, 64, 4
    $region21: #{tpu_custom_call.1} parent=1 // pred_fallthru
      _
    // Predicated region
    $region22: #{tpu_custom_call.1} parent=1 // pred_check
      _
    $region23: #{tpu_custom_call.1} parent=1 // pred_check_branch
      %90 = sbr.rel (0) target = $region25
    $region24: #{tpu_custom_call.1} parent=1 // pred_region
      _
    $region25: #{tpu_custom_call.1} parent=1 // pred_fallthru
      _
    // Predicated region
    $region26: #{tpu_custom_call.1} parent=1 // pred_check
      _
    $region27: #{tpu_custom_call.1} parent=1 // pred_check_branch
      %92 = sbr.rel (0) target = $region29
    $region28: #{tpu_custom_call.1} parent=1 // pred_region
      %s94 = ssub.s32 1024, 1024
      %95 = vsyncadd [#allocation10], %s94
      %s96 = sshll.u32 [#allocation11], 4
      %s97 = int_to_ptr.vmem [resolvable:$true] %s96
      %102 = dma.hbm_to_vmem [thread:$0]  %s6, 1024, %s97, [#allocation10], 64, 64, 4
    $region29: #{tpu_custom_call.1} parent=1 // pred_fallthru
      _
    // Predicated region
    $region30: #{tpu_custom_call.1} parent=1 // pred_check
      _
    $region31: #{tpu_custom_call.1} parent=1 // pred_check_branch
      %104 = sbr.rel (0) target = $region33
    $region32: #{tpu_custom_call.1} parent=1 // pred_region
      _
    $region33: #{tpu_custom_call.1} parent=1 // pred_fallthru
      _
    // Predicated region
    $region34: #{tpu_custom_call.1} parent=1 // pred_check
      _
    $region35: #{tpu_custom_call.1} parent=1 // pred_check_branch
      %106 = sbr.rel (0) target = $region37
    $region36: #{tpu_custom_call.1} parent=1 // pred_region
      %s108 = ssub.s32 1024, 1024
      %109 = vsyncadd [#allocation13], %s108
      %s110 = sshll.u32 [#allocation12], 4
      %s111 = int_to_ptr.vmem [resolvable:$true] %s110
      %116 = dma.hbm_to_vmem [thread:$0]  %s8, 1024, %s111, [#allocation13], 64, 64, 4
    $region37: #{tpu_custom_call.1} parent=1 // pred_fallthru
      _
    // Predicated region
    $region38: #{tpu_custom_call.1} parent=1 // pred_check
      _
    $region39: #{tpu_custom_call.1} parent=1 // pred_check_branch
      %118 = sbr.rel (0) target = $region41
    $region40: #{tpu_custom_call.1} parent=1 // pred_region
      _
    $region41: #{tpu_custom_call.1} parent=1 // pred_fallthru
      _
    // Predicated region
    $region42: #{tpu_custom_call.1} parent=1 // pred_check
      _
    $region43: #{tpu_custom_call.1} parent=1 // pred_check_branch
      %120 = sbr.rel (0) target = $region45
    $region44: #{tpu_custom_call.1} parent=1 // pred_region
      %s122 = ssub.s32 1024, 1024
      %123 = vsyncadd [#allocation13], %s122
      %s124 = sshll.u32 [#allocation14], 4
      %s125 = int_to_ptr.vmem [resolvable:$true] %s124
      %130 = dma.hbm_to_vmem [thread:$0]  %s10, 1024, %s125, [#allocation13], 64, 64, 4
    $region45: #{tpu_custom_call.1} parent=1 // pred_fallthru
      _
    // Predicated region
    $region46: #{tpu_custom_call.1} parent=1 // pred_check
      _
    $region47: #{tpu_custom_call.1} parent=1 // pred_check_branch
      %132 = sbr.rel (0) target = $region49
    $region48: #{tpu_custom_call.1} parent=1 // pred_region
      %s134 = ssub.s32 16, 16
      %135 = vsyncadd [#allocation16], %s134
      %s137 = sshll.u32 [#allocation15], 4
      %s138 = int_to_ptr.vmem [resolvable:$true] %s137
      %140 = dma.hbm_to_vmem [thread:$0]  %s11, 16, %s138, [#allocation16]
    $region49: #{tpu_custom_call.1} parent=1 // pred_fallthru
      _
    // Predicated region
    $region50: #{tpu_custom_call.1} parent=1 // pred_check
      _
    $region51: #{tpu_custom_call.1} parent=1 // pred_check_branch
      %142 = sbr.rel (0) target = $region53
    $region52: #{tpu_custom_call.1} parent=1 // pred_region
      %s144 = ssub.s32 1024, 1024
      %145 = vsyncadd [#allocation16], %s144
      %s146 = sshll.u32 [#allocation17], 4
      %s147 = int_to_ptr.vmem [resolvable:$true] %s146
      %152 = dma.hbm_to_vmem [thread:$0]  %s12, 1024, %s147, [#allocation16], 64, 64, 4
    $region53: #{tpu_custom_call.1} parent=1 // pred_fallthru
      _
    // Predicated region
    $region54: #{tpu_custom_call.1} parent=1 // pred_check
      _
    $region55: #{tpu_custom_call.1} parent=1 // pred_check_branch
      %154 = sbr.rel (0) target = $region57
    $region56: #{tpu_custom_call.1} parent=1 // pred_region
      %s156 = ssub.s32 16, 16
      %157 = vsyncadd [#allocation19], %s156
      %s159 = sshll.u32 [#allocation18], 4
      %s160 = int_to_ptr.vmem [resolvable:$true] %s159
      %162 = dma.hbm_to_vmem [thread:$0]  %s13, 16, %s160, [#allocation19]
    $region57: #{tpu_custom_call.1} parent=1 // pred_fallthru
      _
    // Predicated region
    $region58: #{tpu_custom_call.1} parent=1 // pred_check
      _
    $region59: #{tpu_custom_call.1} parent=1 // pred_check_branch
      %164 = sbr.rel (0) target = $region61
    $region60: #{tpu_custom_call.1} parent=1 // pred_region
      %s166 = ssub.s32 2048, 2048
      %167 = vsyncadd [#allocation19], %s166
      %s168 = sshll.u32 [#allocation20], 4
      %s169 = int_to_ptr.vmem [resolvable:$true] %s168
      %174 = dma.hbm_to_vmem [thread:$0]  %s14, 2048, %s169, [#allocation19], 64, 64, 4
    $region61: #{tpu_custom_call.1} parent=1 // pred_fallthru
      _
    // Predicated region
    $region62: #{tpu_custom_call.1} parent=1 // pred_check
      _
    $region63: #{tpu_custom_call.1} parent=1 // pred_check_branch
      %176 = sbr.rel (0) target = $region65
    $region64: #{tpu_custom_call.1} parent=1 // pred_region
      %s178 = ssub.s32 16, 16
      %179 = vsyncadd [#allocation22], %s178
      %s181 = sshll.u32 [#allocation21], 4
      %s182 = int_to_ptr.vmem [resolvable:$true] %s181
      %184 = dma.hbm_to_vmem [thread:$0]  %s15, 16, %s182, [#allocation22]
    $region65: #{tpu_custom_call.1} parent=1 // pred_fallthru
      _
    // Predicated region
    $region66: #{tpu_custom_call.1} parent=1 // pred_check
      _
    $region67: #{tpu_custom_call.1} parent=1 // pred_check_branch
      %186 = sbr.rel (0) target = $region69
    $region68: #{tpu_custom_call.1} parent=1 // pred_region
      %s188 = ssub.s32 1024, 1024
      %189 = vsyncadd [#allocation22], %s188
      %s190 = sshll.u32 [#allocation23], 4
      %s191 = int_to_ptr.vmem [resolvable:$true] %s190
      %196 = dma.hbm_to_vmem [thread:$0]  %s16, 1024, %s191, [#allocation22], 64, 64, 4
    $region69: #{tpu_custom_call.1} parent=1 // pred_fallthru
      _
    // Predicated region
    $region70: #{tpu_custom_call.1} parent=1 // pred_check
      _
    $region71: #{tpu_custom_call.1} parent=1 // pred_check_branch
      %198 = sbr.rel (0) target = $region73
    $region72: #{tpu_custom_call.1} parent=1 // pred_region
      %s200 = ssub.s32 16, 16
      %201 = vsyncadd [#allocation25], %s200
      %s203 = sshll.u32 [#allocation24], 4
      %s204 = int_to_ptr.vmem [resolvable:$true] %s203
      %206 = dma.hbm_to_vmem [thread:$0]  %s17, 16, %s204, [#allocation25]
    $region73: #{tpu_custom_call.1} parent=1 // pred_fallthru
      _
    // Predicated region
    $region74: #{tpu_custom_call.1} parent=1 // pred_check
      _
    $region75: #{tpu_custom_call.1} parent=1 // pred_check_branch
      %208 = sbr.rel (0) target = $region77
    $region76: #{tpu_custom_call.1} parent=1 // pred_region
      _
    $region77: #{tpu_custom_call.1} parent=1 // pred_fallthru
      _
    // Predicated region
    $region78: #{tpu_custom_call.1} parent=1 // pred_check
      _
    $region79: #{tpu_custom_call.1} parent=1 // pred_check_branch
      %210 = sbr.rel (0) target = $region81
    $region80: #{tpu_custom_call.1} parent=1 // pred_region
      _
    $region81: #{tpu_custom_call.1} parent=1 // pred_fallthru
      _
    // Predicated region
    $region82: #{tpu_custom_call.1} parent=1 // pred_check
      _
    $region83: #{tpu_custom_call.1} parent=1 // pred_check_branch
      %212 = sbr.rel (0) target = $region85
    $region84: #{tpu_custom_call.1} parent=1 // pred_region
      %s214 = ssub.s32 2048, 2048
      %215 = vsyncadd [#allocation25], %s214
      %s216 = sshll.u32 [#allocation26], 4
      %s217 = int_to_ptr.vmem [resolvable:$true] %s216
      %222 = dma.hbm_to_vmem [thread:$0]  %s20, 2048, %s217, [#allocation25], 128, 128, 8
    $region85: #{tpu_custom_call.1} parent=1 // pred_fallthru
      _
    // Predicated region
    $region86: #{tpu_custom_call.1} parent=1 // pred_check
      _
    $region87: #{tpu_custom_call.1} parent=1 // pred_check_branch
      %224 = sbr.rel (0) target = $region89
    $region88: #{tpu_custom_call.1} parent=1 // pred_region
      _
    $region89: #{tpu_custom_call.1} parent=1 // pred_fallthru
      _
    // Predicated region
    $region90: #{tpu_custom_call.1} parent=1 // pred_check
      _
    $region91: #{tpu_custom_call.1} parent=1 // pred_check_branch
      %226 = sbr.rel (0) target = $region93
    $region92: #{tpu_custom_call.1} parent=1 // pred_region
      %227 = dma.done [#allocation4], 128
    $region93: #{tpu_custom_call.1} parent=1 // pred_fallthru
      _
    // Predicated region
    $region94: #{tpu_custom_call.1} parent=1 // pred_check
      _
    $region95: #{tpu_custom_call.1} parent=1 // pred_check_branch
      %229 = sbr.rel (0) target = $region97
    $region96: #{tpu_custom_call.1} parent=1 // pred_region
      %230 = dma.done [#allocation7], 128
    $region97: #{tpu_custom_call.1} parent=1 // pred_fallthru
      _
    // Predicated region
    $region98: #{tpu_custom_call.1} parent=1 // pred_check
      _
    $region99: #{tpu_custom_call.1} parent=1 // pred_check_branch
      %232 = sbr.rel (0) target = $region101
    $region100: #{tpu_custom_call.1} parent=1 // pred_region
      %233 = dma.done [#allocation7], 1024
    $region101: #{tpu_custom_call.1} parent=1 // pred_fallthru
      _
    // Predicated region
    $region102: #{tpu_custom_call.1} parent=1 // pred_check
      _
    $region103: #{tpu_custom_call.1} parent=1 // pred_check_branch
      %235 = sbr.rel (0) target = $region105
    $region104: #{tpu_custom_call.1} parent=1 // pred_region
      %236 = dma.done [#allocation10], 1024
    $region105: #{tpu_custom_call.1} parent=1 // pred_fallthru
      _
    // Predicated region
    $region106: #{tpu_custom_call.1} parent=1 // pred_check
      _
    $region107: #{tpu_custom_call.1} parent=1 // pred_check_branch
      %238 = sbr.rel (0) target = $region109
    $region108: #{tpu_custom_call.1} parent=1 // pred_region
      %239 = dma.done [#allocation10], 1024
    $region109: #{tpu_custom_call.1} parent=1 // pred_fallthru
      _
    // Predicated region
    $region110: #{tpu_custom_call.1} parent=1 // pred_check
      _
    $region111: #{tpu_custom_call.1} parent=1 // pred_check_branch
      %241 = sbr.rel (0) target = $region113
    $region112: #{tpu_custom_call.1} parent=1 // pred_region
      %242 = dma.done [#allocation13], 1024
    $region113: #{tpu_custom_call.1} parent=1 // pred_fallthru
      _
    // Predicated region
    $region114: #{tpu_custom_call.1} parent=1 // pred_check
      _
    $region115: #{tpu_custom_call.1} parent=1 // pred_check_branch
      %244 = sbr.rel (0) target = $region117
    $region116: #{tpu_custom_call.1} parent=1 // pred_region
      %245 = dma.done [#allocation13], 1024
    $region117: #{tpu_custom_call.1} parent=1 // pred_fallthru
      _
    // Predicated region
    $region118: #{tpu_custom_call.1} parent=1 // pred_check
      _
    $region119: #{tpu_custom_call.1} parent=1 // pred_check_branch
      %247 = sbr.rel (0) target = $region121
    $region120: #{tpu_custom_call.1} parent=1 // pred_region
      %248 = dma.done [#allocation16], 16
    $region121: #{tpu_custom_call.1} parent=1 // pred_fallthru
      _
    // Predicated region
    $region122: #{tpu_custom_call.1} parent=1 // pred_check
      _
    $region123: #{tpu_custom_call.1} parent=1 // pred_check_branch
      %250 = sbr.rel (0) target = $region125
    $region124: #{tpu_custom_call.1} parent=1 // pred_region
      %251 = dma.done [#allocation16], 1024
    $region125: #{tpu_custom_call.1} parent=1 // pred_fallthru
      _
    // Predicated region
    $region126: #{tpu_custom_call.1} parent=1 // pred_check
      _
    $region127: #{tpu_custom_call.1} parent=1 // pred_check_branch
      %253 = sbr.rel (0) target = $region129
    $region128: #{tpu_custom_call.1} parent=1 // pred_region
      %254 = dma.done [#allocation19], 16
    $region129: #{tpu_custom_call.1} parent=1 // pred_fallthru
      _
    // Predicated region
    $region130: #{tpu_custom_call.1} parent=1 // pred_check
      _
    $region131: #{tpu_custom_call.1} parent=1 // pred_check_branch
      %256 = sbr.rel (0) target = $region133
    $region132: #{tpu_custom_call.1} parent=1 // pred_region
      %257 = dma.done [#allocation19], 2048
    $region133: #{tpu_custom_call.1} parent=1 // pred_fallthru
      _
    // Predicated region
    $region134: #{tpu_custom_call.1} parent=1 // pred_check
      _
    $region135: #{tpu_custom_call.1} parent=1 // pred_check_branch
      %259 = sbr.rel (0) target = $region137
    $region136: #{tpu_custom_call.1} parent=1 // pred_region
      %260 = dma.done [#allocation22], 16
    $region137: #{tpu_custom_call.1} parent=1 // pred_fallthru
      _
    // Predicated region
    $region138: #{tpu_custom_call.1} parent=1 // pred_check
      _
    $region139: #{tpu_custom_call.1} parent=1 // pred_check_branch
      %262 = sbr.rel (0) target = $region141
    $region140: #{tpu_custom_call.1} parent=1 // pred_region
      %263 = dma.done [#allocation22], 1024
    $region141: #{tpu_custom_call.1} parent=1 // pred_fallthru
      _
    // Predicated region
    $region142: #{tpu_custom_call.1} parent=1 // pred_check
      _
    $region143: #{tpu_custom_call.1} parent=1 // pred_check_branch
      %265 = sbr.rel (0) target = $region145
    $region144: #{tpu_custom_call.1} parent=1 // pred_region
      %266 = dma.done [#allocation25], 16
    $region145: #{tpu_custom_call.1} parent=1 // pred_fallthru
      _
    // Predicated region
    $region146: #{tpu_custom_call.1} parent=1 // pred_check
      _
    $region147: #{tpu_custom_call.1} parent=1 // pred_check_branch
      %268 = sbr.rel (0) target = $region149
    $region148: #{tpu_custom_call.1} parent=1 // pred_region
      %269 = dma.done [#allocation25], 2048
    $region149: #{tpu_custom_call.1} parent=1 // pred_fallthru
      _
    %v271 = vld [vmem:[#allocation3] sm:$0xf]
    %v272 = vld [vmem:[#allocation3 + $0x4] sm:$0xf]
    %v273 = vld [vmem:[#allocation8] sm:$0xf]
    %v274 = vld [vmem:[#allocation8 + $0x4] sm:$0xf]
    %v275 = vld [vmem:[#allocation8 + $0x8] sm:$0xf]
    %v276 = vld [vmem:[#allocation8 + $0xc] sm:$0xf]
    %v277 = vld [vmem:[#allocation8 + $0x10] sm:$0xf]
    %v278 = vld [vmem:[#allocation8 + $0x14] sm:$0xf]
    %v279 = vld [vmem:[#allocation8 + $0x18] sm:$0xf]
    %v280 = vld [vmem:[#allocation8 + $0x1c] sm:$0xf]
    %v281 = vld [vmem:[#allocation8 + $0x20] sm:$0xf]
    %v282 = vld [vmem:[#allocation8 + $0x24] sm:$0xf]
    %v283 = vld [vmem:[#allocation8 + $0x28] sm:$0xf]
    %v284 = vld [vmem:[#allocation8 + $0x2c] sm:$0xf]
    %v285 = vld [vmem:[#allocation8 + $0x30] sm:$0xf]
    %v286 = vld [vmem:[#allocation8 + $0x34] sm:$0xf]
    %v287 = vld [vmem:[#allocation8 + $0x38] sm:$0xf]
    %v288 = vld [vmem:[#allocation8 + $0x3c] sm:$0xf]
    %v289 = vld [vmem:[%s3] sm:$0x1]
    %v291 = vlaneseq
    %v292 = vshrl.u32 %v291, 7
    %v293 = vsub.s32 0, %v292
    %v294 = vrot.slane %v289, %v293
    %v298 = vunpack.c.l.b16 %v271
    %v299 = vunpack.c.l.b16 %v272
    %v300 = vpack.c.b16 %v299, %v298
    %v318 = vunpack.c.l.b16 %v273
    %v319 = vunpack.c.l.b16 %v274
    %v320 = vunpack.c.l.b16 %v275
    %v321 = vunpack.c.l.b16 %v276
    %v322 = vunpack.c.l.b16 %v277
    %v323 = vunpack.c.l.b16 %v278
    %v324 = vunpack.c.l.b16 %v279
    %v325 = vunpack.c.l.b16 %v280
    %v326 = vunpack.c.l.b16 %v281
    %v327 = vunpack.c.l.b16 %v282
    %v328 = vunpack.c.l.b16 %v283
    %v329 = vunpack.c.l.b16 %v284
    %v330 = vunpack.c.l.b16 %v285
    %v331 = vunpack.c.l.b16 %v286
    %v332 = vunpack.c.l.b16 %v287
    %v333 = vunpack.c.l.b16 %v288
    %v334 = vpack.c.b16 %v319, %v318
    %v335 = vpack.c.b16 %v321, %v320
    %v336 = vpack.c.b16 %v323, %v322
    %v337 = vpack.c.b16 %v325, %v324
    %v338 = vpack.c.b16 %v327, %v326
    %v339 = vpack.c.b16 %v329, %v328
    %v340 = vpack.c.b16 %v331, %v330
    %v341 = vpack.c.b16 %v333, %v332
    %350 = vmatprep.subr.bf16.mxu0 0
    %351 = vmatpush1.bf16.msra.mxu0 %v334
    %352 = vmatprep.subr.bf16.mxu0 0
    %353 = vmatpush1.bf16.msra.mxu0 %v335
    %354 = vmatprep.subr.bf16.mxu0 0
    %355 = vmatpush1.bf16.msra.mxu0 %v336
    %356 = vmatprep.subr.bf16.mxu0 0
    %357 = vmatpush1.bf16.msra.mxu0 %v337
    %358 = vmatprep.subr.bf16.mxu0 0
    %359 = vmatpush1.bf16.msra.mxu0 %v338
    %360 = vmatprep.subr.bf16.mxu0 0
    %361 = vmatpush1.bf16.msra.mxu0 %v339
    %362 = vmatprep.subr.bf16.mxu0 0
    %363 = vmatpush1.bf16.msra.mxu0 %v340
    %364 = vmatprep.subr.bf16.mxu0 0
    %365 = vmatpush1.bf16.msra.mxu0 %v341
    %366 = vmatprep.subr.bf16.mxu0 0
    %367 = vmatpush1.bf16.msra.mxu0 0
    %368 = vmatprep.subr.bf16.mxu0 0
    %369 = vmatpush1.bf16.msra.mxu0 0
    %370 = vmatprep.subr.bf16.mxu0 0
    %371 = vmatpush1.bf16.msra.mxu0 0
    %372 = vmatprep.subr.bf16.mxu0 0
    %373 = vmatpush1.bf16.msra.mxu0 0
    %374 = vmatprep.subr.bf16.mxu0 0
    %375 = vmatpush1.bf16.msra.mxu0 0
    %376 = vmatprep.subr.bf16.mxu0 0
    %377 = vmatpush1.bf16.msra.mxu0 0
    %378 = vmatprep.subr.bf16.mxu0 0
    %379 = vmatpush1.bf16.msra.mxu0 0
    %380 = vmatprep.subr.bf16.mxu0 0
    %381 = vmatpush1.bf16.msra.mxu0 0
    %382 = vmatprep.mubr.bf16.mxu0 0
    %383 = vmatmul.mubr.bf16.gmra.mrb[0].mxu0 %v300
    %v384 = vpop.f32.mrb[0].mxu0
    %v385 = vadd.f32 %v294, %v384
    %v386 = vpop.f32.mrb[0].mxu0
    %v387 = vpop.f32.mrb[0].mxu0
    %v388 = vadd.f32 %v294, %v387
    %v389 = vpop.f32.mrb[0].mxu0
    %390 = vdwg.mxu0
    %v391 = vxor.u32 %v385, 2147483648
    %v392 = vxor.u32 %v388, 2147483648
    %v393 = vmul.f32 %v391, 1.442695
    %v394 = vpow.pop %v393
    %v395 = vmul.f32 %v392, 1.442695
    %v396 = vpow.pop %v395
    %v397 = vadd.f32 %v394, 1.0
    %v398 = vadd.f32 %v396, 1.0
    %v399 = vrcp.pop %v397
    %v400 = vmul.f32 1.0, %v399
    %v401 = vrcp.pop %v398
    %v402 = vmul.f32 1.0, %v401
    %v403 = vpack.c.bf16 %v402, %v400
    %v404 = vld [vmem:[#allocation9] sm:$0xf]
    %v405 = vld [vmem:[#allocation9 + $0x4] sm:$0xf]
    %v406 = vld [vmem:[#allocation9 + $0x8] sm:$0xf]
    %v407 = vld [vmem:[#allocation9 + $0xc] sm:$0xf]
    %v408 = vld [vmem:[#allocation9 + $0x10] sm:$0xf]
    %v409 = vld [vmem:[#allocation9 + $0x14] sm:$0xf]
    %v410 = vld [vmem:[#allocation9 + $0x18] sm:$0xf]
    %v411 = vld [vmem:[#allocation9 + $0x1c] sm:$0xf]
    %v412 = vld [vmem:[#allocation9 + $0x20] sm:$0xf]
    %v413 = vld [vmem:[#allocation9 + $0x24] sm:$0xf]
    %v414 = vld [vmem:[#allocation9 + $0x28] sm:$0xf]
    %v415 = vld [vmem:[#allocation9 + $0x2c] sm:$0xf]
    %v416 = vld [vmem:[#allocation9 + $0x30] sm:$0xf]
    %v417 = vld [vmem:[#allocation9 + $0x34] sm:$0xf]
    %v418 = vld [vmem:[#allocation9 + $0x38] sm:$0xf]
    %v419 = vld [vmem:[#allocation9 + $0x3c] sm:$0xf]
    %v420 = vld [vmem:[%s5] sm:$0x1]
    %v422 = vlaneseq
    %v423 = vshrl.u32 %v422, 7
    %v424 = vsub.s32 0, %v423
    %v425 = vrot.slane %v420, %v424
    %v443 = vunpack.c.l.b16 %v404
    %v444 = vunpack.c.l.b16 %v405
    %v445 = vunpack.c.l.b16 %v406
    %v446 = vunpack.c.l.b16 %v407
    %v447 = vunpack.c.l.b16 %v408
    %v448 = vunpack.c.l.b16 %v409
    %v449 = vunpack.c.l.b16 %v410
    %v450 = vunpack.c.l.b16 %v411
    %v451 = vunpack.c.l.b16 %v412
    %v452 = vunpack.c.l.b16 %v413
    %v453 = vunpack.c.l.b16 %v414
    %v454 = vunpack.c.l.b16 %v415
    %v455 = vunpack.c.l.b16 %v416
    %v456 = vunpack.c.l.b16 %v417
    %v457 = vunpack.c.l.b16 %v418
    %v458 = vunpack.c.l.b16 %v419
    %v459 = vpack.c.b16 %v444, %v443
    %v460 = vpack.c.b16 %v446, %v445
    %v461 = vpack.c.b16 %v448, %v447
    %v462 = vpack.c.b16 %v450, %v449
    %v463 = vpack.c.b16 %v452, %v451
    %v464 = vpack.c.b16 %v454, %v453
    %v465 = vpack.c.b16 %v456, %v455
    %v466 = vpack.c.b16 %v458, %v457
    %475 = vmatprep.subr.bf16.mxu0 0
    %476 = vmatpush1.bf16.msra.mxu0 %v459
    %477 = vmatprep.subr.bf16.mxu0 0
    %478 = vmatpush1.bf16.msra.mxu0 %v460
    %479 = vmatprep.subr.bf16.mxu0 0
    %480 = vmatpush1.bf16.msra.mxu0 %v461
    %481 = vmatprep.subr.bf16.mxu0 0
    %482 = vmatpush1.bf16.msra.mxu0 %v462
    %483 = vmatprep.subr.bf16.mxu0 0
    %484 = vmatpush1.bf16.msra.mxu0 %v463
    %485 = vmatprep.subr.bf16.mxu0 0
    %486 = vmatpush1.bf16.msra.mxu0 %v464
    %487 = vmatprep.subr.bf16.mxu0 0
    %488 = vmatpush1.bf16.msra.mxu0 %v465
    %489 = vmatprep.subr.bf16.mxu0 0
    %490 = vmatpush1.bf16.msra.mxu0 %v466
    %491 = vmatprep.subr.bf16.mxu0 0
    %492 = vmatpush1.bf16.msra.mxu0 0
    %493 = vmatprep.subr.bf16.mxu0 0
    %494 = vmatpush1.bf16.msra.mxu0 0
    %495 = vmatprep.subr.bf16.mxu0 0
    %496 = vmatpush1.bf16.msra.mxu0 0
    %497 = vmatprep.subr.bf16.mxu0 0
    %498 = vmatpush1.bf16.msra.mxu0 0
    %499 = vmatprep.subr.bf16.mxu0 0
    %500 = vmatpush1.bf16.msra.mxu0 0
    %501 = vmatprep.subr.bf16.mxu0 0
    %502 = vmatpush1.bf16.msra.mxu0 0
    %503 = vmatprep.subr.bf16.mxu0 0
    %504 = vmatpush1.bf16.msra.mxu0 0
    %505 = vmatprep.subr.bf16.mxu0 0
    %506 = vmatpush1.bf16.msra.mxu0 0
    %507 = vmatprep.mubr.bf16.mxu0 0
    %508 = vmatmul.mubr.bf16.gmra.mrb[0].mxu0 %v403
    %v509 = vpop.f32.mrb[0].mxu0
    %v510 = vadd.f32 %v425, %v509
    %v511 = vpop.f32.mrb[0].mxu0
    %v512 = vpop.f32.mrb[0].mxu0
    %v513 = vadd.f32 %v425, %v512
    %v514 = vpop.f32.mrb[0].mxu0
    %515 = vdwg.mxu0
    %v516 = vxor.u32 %v510, 2147483648
    %v517 = vxor.u32 %v513, 2147483648
    %v518 = vmul.f32 %v516, 1.442695
    %v519 = vpow.pop %v518
    %v520 = vmul.f32 %v517, 1.442695
    %v521 = vpow.pop %v520
    %v522 = vadd.f32 %v519, 1.0
    %v523 = vadd.f32 %v521, 1.0
    %v524 = vrcp.pop %v522
    %v525 = vmul.f32 1.0, %v524
    %v526 = vrcp.pop %v523
    %v527 = vmul.f32 1.0, %v526
    %v528 = vpack.c.bf16 %v527, %v525
    %v529 = vld [vmem:[#allocation11] sm:$0xf]
    %v530 = vld [vmem:[#allocation11 + $0x4] sm:$0xf]
    %v531 = vld [vmem:[#allocation11 + $0x8] sm:$0xf]
    %v532 = vld [vmem:[#allocation11 + $0xc] sm:$0xf]
    %v533 = vld [vmem:[#allocation11 + $0x10] sm:$0xf]
    %v534 = vld [vmem:[#allocation11 + $0x14] sm:$0xf]
    %v535 = vld [vmem:[#allocation11 + $0x18] sm:$0xf]
    %v536 = vld [vmem:[#allocation11 + $0x1c] sm:$0xf]
    %v537 = vld [vmem:[#allocation11 + $0x20] sm:$0xf]
    %v538 = vld [vmem:[#allocation11 + $0x24] sm:$0xf]
    %v539 = vld [vmem:[#allocation11 + $0x28] sm:$0xf]
    %v540 = vld [vmem:[#allocation11 + $0x2c] sm:$0xf]
    %v541 = vld [vmem:[#allocation11 + $0x30] sm:$0xf]
    %v542 = vld [vmem:[#allocation11 + $0x34] sm:$0xf]
    %v543 = vld [vmem:[#allocation11 + $0x38] sm:$0xf]
    %v544 = vld [vmem:[#allocation11 + $0x3c] sm:$0xf]
    %v545 = vld [vmem:[%s7] sm:$0x1]
    %v547 = vlaneseq
    %v548 = vshrl.u32 %v547, 7
    %v549 = vsub.s32 0, %v548
    %v550 = vrot.slane %v545, %v549
    %v568 = vunpack.c.l.b16 %v529
    %v569 = vunpack.c.l.b16 %v530
    %v570 = vunpack.c.l.b16 %v531
    %v571 = vunpack.c.l.b16 %v532
    %v572 = vunpack.c.l.b16 %v533
    %v573 = vunpack.c.l.b16 %v534
    %v574 = vunpack.c.l.b16 %v535
    %v575 = vunpack.c.l.b16 %v536
    %v576 = vunpack.c.l.b16 %v537
    %v577 = vunpack.c.l.b16 %v538
    %v578 = vunpack.c.l.b16 %v539
    %v579 = vunpack.c.l.b16 %v540
    %v580 = vunpack.c.l.b16 %v541
    %v581 = vunpack.c.l.b16 %v542
    %v582 = vunpack.c.l.b16 %v543
    %v583 = vunpack.c.l.b16 %v544
    %v584 = vpack.c.b16 %v569, %v568
    %v585 = vpack.c.b16 %v571, %v570
    %v586 = vpack.c.b16 %v573, %v572
    %v587 = vpack.c.b16 %v575, %v574
    %v588 = vpack.c.b16 %v577, %v576
    %v589 = vpack.c.b16 %v579, %v578
    %v590 = vpack.c.b16 %v581, %v580
    %v591 = vpack.c.b16 %v583, %v582
    %600 = vmatprep.subr.bf16.mxu0 0
    %601 = vmatpush1.bf16.msra.mxu0 %v584
    %602 = vmatprep.subr.bf16.mxu0 0
    %603 = vmatpush1.bf16.msra.mxu0 %v585
    %604 = vmatprep.subr.bf16.mxu0 0
    %605 = vmatpush1.bf16.msra.mxu0 %v586
    %606 = vmatprep.subr.bf16.mxu0 0
    %607 = vmatpush1.bf16.msra.mxu0 %v587
    %608 = vmatprep.subr.bf16.mxu0 0
    %609 = vmatpush1.bf16.msra.mxu0 %v588
    %610 = vmatprep.subr.bf16.mxu0 0
    %611 = vmatpush1.bf16.msra.mxu0 %v589
    %612 = vmatprep.subr.bf16.mxu0 0
    %613 = vmatpush1.bf16.msra.mxu0 %v590
    %614 = vmatprep.subr.bf16.mxu0 0
    %615 = vmatpush1.bf16.msra.mxu0 %v591
    %616 = vmatprep.subr.bf16.mxu0 0
    %617 = vmatpush1.bf16.msra.mxu0 0
    %618 = vmatprep.subr.bf16.mxu0 0
    %619 = vmatpush1.bf16.msra.mxu0 0
    %620 = vmatprep.subr.bf16.mxu0 0
    %621 = vmatpush1.bf16.msra.mxu0 0
    %622 = vmatprep.subr.bf16.mxu0 0
    %623 = vmatpush1.bf16.msra.mxu0 0
    %624 = vmatprep.subr.bf16.mxu0 0
    %625 = vmatpush1.bf16.msra.mxu0 0
    %626 = vmatprep.subr.bf16.mxu0 0
    %627 = vmatpush1.bf16.msra.mxu0 0
    %628 = vmatprep.subr.bf16.mxu0 0
    %629 = vmatpush1.bf16.msra.mxu0 0
    %630 = vmatprep.subr.bf16.mxu0 0
    %631 = vmatpush1.bf16.msra.mxu0 0
    %632 = vmatprep.mubr.bf16.mxu0 0
    %633 = vmatmul.mubr.bf16.gmra.mrb[0].mxu0 %v528
    %v634 = vpop.f32.mrb[0].mxu0
    %v635 = vadd.f32 %v550, %v634
    %v636 = vpop.f32.mrb[0].mxu0
    %v637 = vpop.f32.mrb[0].mxu0
    %v638 = vadd.f32 %v550, %v637
    %v639 = vpop.f32.mrb[0].mxu0
    %640 = vdwg.mxu0
    %v641 = vpack.c.bf16 %v638, %v635
    %v643 = vunpack.c.l.b16 %v641
    %v644 = vunpack.c.h.b16 %v641
    %v645 = vpack.c.b16 %v643, %v643
    %v646 = vpack.c.b16 %v644, %v644
    %649 = vst [vmem:[#allocation27 + $0x4] sm:$0xf] %v645
    %650 = vst [vmem:[#allocation27 + $0x10] sm:$0xf] %v646
    %v651 = vld [vmem:[#allocation12] sm:$0xf]
    %v652 = vld [vmem:[#allocation12 + $0x4] sm:$0xf]
    %v653 = vld [vmem:[#allocation12 + $0x8] sm:$0xf]
    %v654 = vld [vmem:[#allocation12 + $0xc] sm:$0xf]
    %v655 = vld [vmem:[#allocation12 + $0x10] sm:$0xf]
    %v656 = vld [vmem:[#allocation12 + $0x14] sm:$0xf]
    %v657 = vld [vmem:[#allocation12 + $0x18] sm:$0xf]
    %v658 = vld [vmem:[#allocation12 + $0x1c] sm:$0xf]
    %v659 = vld [vmem:[#allocation12 + $0x20] sm:$0xf]
    %v660 = vld [vmem:[#allocation12 + $0x24] sm:$0xf]
    %v661 = vld [vmem:[#allocation12 + $0x28] sm:$0xf]
    %v662 = vld [vmem:[#allocation12 + $0x2c] sm:$0xf]
    %v663 = vld [vmem:[#allocation12 + $0x30] sm:$0xf]
    %v664 = vld [vmem:[#allocation12 + $0x34] sm:$0xf]
    %v665 = vld [vmem:[#allocation12 + $0x38] sm:$0xf]
    %v666 = vld [vmem:[#allocation12 + $0x3c] sm:$0xf]
    %v667 = vld [vmem:[%s9] sm:$0x1]
    %v669 = vlaneseq
    %v670 = vshrl.u32 %v669, 7
    %v671 = vsub.s32 0, %v670
    %v672 = vrot.slane %v667, %v671
    %v690 = vunpack.c.l.b16 %v651
    %v691 = vunpack.c.l.b16 %v652
    %v692 = vunpack.c.l.b16 %v653
    %v693 = vunpack.c.l.b16 %v654
    %v694 = vunpack.c.l.b16 %v655
    %v695 = vunpack.c.l.b16 %v656
    %v696 = vunpack.c.l.b16 %v657
    %v697 = vunpack.c.l.b16 %v658
    %v698 = vunpack.c.l.b16 %v659
    %v699 = vunpack.c.l.b16 %v660
    %v700 = vunpack.c.l.b16 %v661
    %v701 = vunpack.c.l.b16 %v662
    %v702 = vunpack.c.l.b16 %v663
    %v703 = vunpack.c.l.b16 %v664
    %v704 = vunpack.c.l.b16 %v665
    %v705 = vunpack.c.l.b16 %v666
    %v706 = vpack.c.b16 %v691, %v690
    %v707 = vpack.c.b16 %v693, %v692
    %v708 = vpack.c.b16 %v695, %v694
    %v709 = vpack.c.b16 %v697, %v696
    %v710 = vpack.c.b16 %v699, %v698
    %v711 = vpack.c.b16 %v701, %v700
    %v712 = vpack.c.b16 %v703, %v702
    %v713 = vpack.c.b16 %v705, %v704
    %722 = vmatprep.subr.bf16.mxu0 0
    %723 = vmatpush1.bf16.msra.mxu0 %v706
    %724 = vmatprep.subr.bf16.mxu0 0
    %725 = vmatpush1.bf16.msra.mxu0 %v707
    %726 = vmatprep.subr.bf16.mxu0 0
    %727 = vmatpush1.bf16.msra.mxu0 %v708
    %728 = vmatprep.subr.bf16.mxu0 0
    %729 = vmatpush1.bf16.msra.mxu0 %v709
    %730 = vmatprep.subr.bf16.mxu0 0
    %731 = vmatpush1.bf16.msra.mxu0 %v710
    %732 = vmatprep.subr.bf16.mxu0 0
    %733 = vmatpush1.bf16.msra.mxu0 %v711
    %734 = vmatprep.subr.bf16.mxu0 0
    %735 = vmatpush1.bf16.msra.mxu0 %v712
    %736 = vmatprep.subr.bf16.mxu0 0
    %737 = vmatpush1.bf16.msra.mxu0 %v713
    %738 = vmatprep.subr.bf16.mxu0 0
    %739 = vmatpush1.bf16.msra.mxu0 0
    %740 = vmatprep.subr.bf16.mxu0 0
    %741 = vmatpush1.bf16.msra.mxu0 0
    %742 = vmatprep.subr.bf16.mxu0 0
    %743 = vmatpush1.bf16.msra.mxu0 0
    %744 = vmatprep.subr.bf16.mxu0 0
    %745 = vmatpush1.bf16.msra.mxu0 0
    %746 = vmatprep.subr.bf16.mxu0 0
    %747 = vmatpush1.bf16.msra.mxu0 0
    %748 = vmatprep.subr.bf16.mxu0 0
    %749 = vmatpush1.bf16.msra.mxu0 0
    %750 = vmatprep.subr.bf16.mxu0 0
    %751 = vmatpush1.bf16.msra.mxu0 0
    %752 = vmatprep.subr.bf16.mxu0 0
    %753 = vmatpush1.bf16.msra.mxu0 0
    %754 = vmatprep.mubr.bf16.mxu0 0
    %755 = vmatmul.mubr.bf16.gmra.mrb[0].mxu0 %v641
    %v756 = vpop.f32.mrb[0].mxu0
    %v757 = vadd.f32 %v672, %v756
    %v758 = vpop.f32.mrb[0].mxu0
    %v759 = vpop.f32.mrb[0].mxu0
    %v760 = vadd.f32 %v672, %v759
    %v761 = vpop.f32.mrb[0].mxu0
    %762 = vdwg.mxu0
    %v763 = vxor.u32 %v757, 2147483648
    %v764 = vxor.u32 %v760, 2147483648
    %v765 = vmul.f32 %v763, 1.442695
    %v766 = vpow.pop %v765
    %v767 = vmul.f32 %v764, 1.442695
    %v768 = vpow.pop %v767
    %v769 = vadd.f32 %v766, 1.0
    %v770 = vadd.f32 %v768, 1.0
    %v771 = vrcp.pop %v769
    %v772 = vmul.f32 1.0, %v771
    %v773 = vrcp.pop %v770
    %v774 = vmul.f32 1.0, %v773
    %v775 = vpack.c.bf16 %v774, %v772
    %v776 = vld [vmem:[#allocation14] sm:$0xf]
    %v777 = vld [vmem:[#allocation14 + $0x4] sm:$0xf]
    %v778 = vld [vmem:[#allocation14 + $0x8] sm:$0xf]
    %v779 = vld [vmem:[#allocation14 + $0xc] sm:$0xf]
    %v780 = vld [vmem:[#allocation14 + $0x10] sm:$0xf]
    %v781 = vld [vmem:[#allocation14 + $0x14] sm:$0xf]
    %v782 = vld [vmem:[#allocation14 + $0x18] sm:$0xf]
    %v783 = vld [vmem:[#allocation14 + $0x1c] sm:$0xf]
    %v784 = vld [vmem:[#allocation14 + $0x20] sm:$0xf]
    %v785 = vld [vmem:[#allocation14 + $0x24] sm:$0xf]
    %v786 = vld [vmem:[#allocation14 + $0x28] sm:$0xf]
    %v787 = vld [vmem:[#allocation14 + $0x2c] sm:$0xf]
    %v788 = vld [vmem:[#allocation14 + $0x30] sm:$0xf]
    %v789 = vld [vmem:[#allocation14 + $0x34] sm:$0xf]
    %v790 = vld [vmem:[#allocation14 + $0x38] sm:$0xf]
    %v791 = vld [vmem:[#allocation14 + $0x3c] sm:$0xf]
    %v792 = vld [vmem:[#allocation15] sm:$0x1]
    %v794 = vlaneseq
    %v795 = vshrl.u32 %v794, 7
    %v796 = vsub.s32 0, %v795
    %v797 = vrot.slane %v792, %v796
    %v815 = vunpack.c.l.b16 %v776
    %v816 = vunpack.c.l.b16 %v777
    %v817 = vunpack.c.l.b16 %v778
    %v818 = vunpack.c.l.b16 %v779
    %v819 = vunpack.c.l.b16 %v780
    %v820 = vunpack.c.l.b16 %v781
    %v821 = vunpack.c.l.b16 %v782
    %v822 = vunpack.c.l.b16 %v783
    %v823 = vunpack.c.l.b16 %v784
    %v824 = vunpack.c.l.b16 %v785
    %v825 = vunpack.c.l.b16 %v786
    %v826 = vunpack.c.l.b16 %v787
    %v827 = vunpack.c.l.b16 %v788
    %v828 = vunpack.c.l.b16 %v789
    %v829 = vunpack.c.l.b16 %v790
    %v830 = vunpack.c.l.b16 %v791
    %v831 = vpack.c.b16 %v816, %v815
    %v832 = vpack.c.b16 %v818, %v817
    %v833 = vpack.c.b16 %v820, %v819
    %v834 = vpack.c.b16 %v822, %v821
    %v835 = vpack.c.b16 %v824, %v823
    %v836 = vpack.c.b16 %v826, %v825
    %v837 = vpack.c.b16 %v828, %v827
    %v838 = vpack.c.b16 %v830, %v829
    %847 = vmatprep.subr.bf16.mxu0 0
    %848 = vmatpush1.bf16.msra.mxu0 %v831
    %849 = vmatprep.subr.bf16.mxu0 0
    %850 = vmatpush1.bf16.msra.mxu0 %v832
    %851 = vmatprep.subr.bf16.mxu0 0
    %852 = vmatpush1.bf16.msra.mxu0 %v833
    %853 = vmatprep.subr.bf16.mxu0 0
    %854 = vmatpush1.bf16.msra.mxu0 %v834
    %855 = vmatprep.subr.bf16.mxu0 0
    %856 = vmatpush1.bf16.msra.mxu0 %v835
    %857 = vmatprep.subr.bf16.mxu0 0
    %858 = vmatpush1.bf16.msra.mxu0 %v836
    %859 = vmatprep.subr.bf16.mxu0 0
    %860 = vmatpush1.bf16.msra.mxu0 %v837
    %861 = vmatprep.subr.bf16.mxu0 0
    %862 = vmatpush1.bf16.msra.mxu0 %v838
    %863 = vmatprep.subr.bf16.mxu0 0
    %864 = vmatpush1.bf16.msra.mxu0 0
    %865 = vmatprep.subr.bf16.mxu0 0
    %866 = vmatpush1.bf16.msra.mxu0 0
    %867 = vmatprep.subr.bf16.mxu0 0
    %868 = vmatpush1.bf16.msra.mxu0 0
    %869 = vmatprep.subr.bf16.mxu0 0
    %870 = vmatpush1.bf16.msra.mxu0 0
    %871 = vmatprep.subr.bf16.mxu0 0
    %872 = vmatpush1.bf16.msra.mxu0 0
    %873 = vmatprep.subr.bf16.mxu0 0
    %874 = vmatpush1.bf16.msra.mxu0 0
    %875 = vmatprep.subr.bf16.mxu0 0
    %876 = vmatpush1.bf16.msra.mxu0 0
    %877 = vmatprep.subr.bf16.mxu0 0
    %878 = vmatpush1.bf16.msra.mxu0 0
    %879 = vmatprep.mubr.bf16.mxu0 0
    %880 = vmatmul.mubr.bf16.gmra.mrb[0].mxu0 %v775
    %v881 = vpop.f32.mrb[0].mxu0
    %v882 = vadd.f32 %v797, %v881
    %v883 = vpop.f32.mrb[0].mxu0
    %v884 = vpop.f32.mrb[0].mxu0
    %v885 = vadd.f32 %v797, %v884
    %v886 = vpop.f32.mrb[0].mxu0
    %887 = vdwg.mxu0
    %v888 = vxor.u32 %v882, 2147483648
    %v889 = vxor.u32 %v885, 2147483648
    %v890 = vmul.f32 %v888, 1.442695
    %v891 = vpow.pop %v890
    %v892 = vmul.f32 %v889, 1.442695
    %v893 = vpow.pop %v892
    %v894 = vadd.f32 %v891, 1.0
    %v895 = vadd.f32 %v893, 1.0
    %v896 = vrcp.pop %v894
    %v897 = vmul.f32 1.0, %v896
    %v898 = vrcp.pop %v895
    %v899 = vmul.f32 1.0, %v898
    %v900 = vpack.c.bf16 %v899, %v897
    %v901 = vld [vmem:[#allocation17] sm:$0xf]
    %v902 = vld [vmem:[#allocation17 + $0x4] sm:$0xf]
    %v903 = vld [vmem:[#allocation17 + $0x8] sm:$0xf]
    %v904 = vld [vmem:[#allocation17 + $0xc] sm:$0xf]
    %v905 = vld [vmem:[#allocation17 + $0x10] sm:$0xf]
    %v906 = vld [vmem:[#allocation17 + $0x14] sm:$0xf]
    %v907 = vld [vmem:[#allocation17 + $0x18] sm:$0xf]
    %v908 = vld [vmem:[#allocation17 + $0x1c] sm:$0xf]
    %v909 = vld [vmem:[#allocation17 + $0x20] sm:$0xf]
    %v910 = vld [vmem:[#allocation17 + $0x24] sm:$0xf]
    %v911 = vld [vmem:[#allocation17 + $0x28] sm:$0xf]
    %v912 = vld [vmem:[#allocation17 + $0x2c] sm:$0xf]
    %v913 = vld [vmem:[#allocation17 + $0x30] sm:$0xf]
    %v914 = vld [vmem:[#allocation17 + $0x34] sm:$0xf]
    %v915 = vld [vmem:[#allocation17 + $0x38] sm:$0xf]
    %v916 = vld [vmem:[#allocation17 + $0x3c] sm:$0xf]
    %v917 = vld [vmem:[#allocation18] sm:$0x1]
    %v919 = vlaneseq
    %v920 = vshrl.u32 %v919, 7
    %v921 = vsub.s32 0, %v920
    %v922 = vrot.slane %v917, %v921
    %v940 = vunpack.c.l.b16 %v901
    %v941 = vunpack.c.l.b16 %v902
    %v942 = vunpack.c.l.b16 %v903
    %v943 = vunpack.c.l.b16 %v904
    %v944 = vunpack.c.l.b16 %v905
    %v945 = vunpack.c.l.b16 %v906
    %v946 = vunpack.c.l.b16 %v907
    %v947 = vunpack.c.l.b16 %v908
    %v948 = vunpack.c.l.b16 %v909
    %v949 = vunpack.c.l.b16 %v910
    %v950 = vunpack.c.l.b16 %v911
    %v951 = vunpack.c.l.b16 %v912
    %v952 = vunpack.c.l.b16 %v913
    %v953 = vunpack.c.l.b16 %v914
    %v954 = vunpack.c.l.b16 %v915
    %v955 = vunpack.c.l.b16 %v916
    %v956 = vpack.c.b16 %v941, %v940
    %v957 = vpack.c.b16 %v943, %v942
    %v958 = vpack.c.b16 %v945, %v944
    %v959 = vpack.c.b16 %v947, %v946
    %v960 = vpack.c.b16 %v949, %v948
    %v961 = vpack.c.b16 %v951, %v950
    %v962 = vpack.c.b16 %v953, %v952
    %v963 = vpack.c.b16 %v955, %v954
    %972 = vmatprep.subr.bf16.mxu0 0
    %973 = vmatpush1.bf16.msra.mxu0 %v956
    %974 = vmatprep.subr.bf16.mxu0 0
    %975 = vmatpush1.bf16.msra.mxu0 %v957
    %976 = vmatprep.subr.bf16.mxu0 0
    %977 = vmatpush1.bf16.msra.mxu0 %v958
    %978 = vmatprep.subr.bf16.mxu0 0
    %979 = vmatpush1.bf16.msra.mxu0 %v959
    %980 = vmatprep.subr.bf16.mxu0 0
    %981 = vmatpush1.bf16.msra.mxu0 %v960
    %982 = vmatprep.subr.bf16.mxu0 0
    %983 = vmatpush1.bf16.msra.mxu0 %v961
    %984 = vmatprep.subr.bf16.mxu0 0
    %985 = vmatpush1.bf16.msra.mxu0 %v962
    %986 = vmatprep.subr.bf16.mxu0 0
    %987 = vmatpush1.bf16.msra.mxu0 %v963
    %988 = vmatprep.subr.bf16.mxu0 0
    %989 = vmatpush1.bf16.msra.mxu0 0
    %990 = vmatprep.subr.bf16.mxu0 0
    %991 = vmatpush1.bf16.msra.mxu0 0
    %992 = vmatprep.subr.bf16.mxu0 0
    %993 = vmatpush1.bf16.msra.mxu0 0
    %994 = vmatprep.subr.bf16.mxu0 0
    %995 = vmatpush1.bf16.msra.mxu0 0
    %996 = vmatprep.subr.bf16.mxu0 0
    %997 = vmatpush1.bf16.msra.mxu0 0
    %998 = vmatprep.subr.bf16.mxu0 0
    %999 = vmatpush1.bf16.msra.mxu0 0
    %1000 = vmatprep.subr.bf16.mxu0 0
    %1001 = vmatpush1.bf16.msra.mxu0 0
    %1002 = vmatprep.subr.bf16.mxu0 0
    %1003 = vmatpush1.bf16.msra.mxu0 0
    %1004 = vmatprep.mubr.bf16.mxu0 0
    %1005 = vmatmul.mubr.bf16.gmra.mrb[0].mxu0 %v900
    %v1006 = vpop.f32.mrb[0].mxu0
    %v1007 = vadd.f32 %v922, %v1006
    %v1008 = vpop.f32.mrb[0].mxu0
    %v1009 = vpop.f32.mrb[0].mxu0
    %v1010 = vadd.f32 %v922, %v1009
    %v1011 = vpop.f32.mrb[0].mxu0
    %1012 = vdwg.mxu0
    %v1013 = vpack.c.bf16 %v1010, %v1007
    %v1015 = vunpack.c.l.b16 %v1013
    %v1016 = vunpack.c.h.b16 %v1013
    %v1017 = vpack.c.b16 %v1015, %v1015
    %v1018 = vpack.c.b16 %v1016, %v1016
    %1021 = vst [vmem:[#allocation27] sm:$0xf] %v1017
    %1022 = vst [vmem:[#allocation27 + $0xc] sm:$0xf] %v1018
    %1023 = vst [vmem:[#allocation2] sm:$0xff] %v641
    %v1024 = vld [vmem:[#allocation6] sm:$0xf]
    %v1025 = vld [vmem:[#allocation6 + $0x4] sm:$0xf]
    %v1028 = vunpack.c.l.b16 %v1024
    %v1029 = vunpack.c.l.b16 %v1025
    %v1030 = vpack.c.b16 %v1029, %v1028
    %1032 = vst [vmem:[#allocation2 + $0x8] sm:$0xff] %v1030
    %v1033 = vld [vmem:[#allocation2] sm:$0xff]
    %v1034 = vld [vmem:[#allocation2 + $0x8] sm:$0xff]
    %v1035 = vld [vmem:[#allocation20] sm:$0xf]
    %v1036 = vld [vmem:[#allocation20 + $0x4] sm:$0xf]
    %v1037 = vld [vmem:[#allocation20 + $0x8] sm:$0xf]
    %v1038 = vld [vmem:[#allocation20 + $0xc] sm:$0xf]
    %v1039 = vld [vmem:[#allocation20 + $0x10] sm:$0xf]
    %v1040 = vld [vmem:[#allocation20 + $0x14] sm:$0xf]
    %v1041 = vld [vmem:[#allocation20 + $0x18] sm:$0xf]
    %v1042 = vld [vmem:[#allocation20 + $0x1c] sm:$0xf]
    %v1043 = vld [vmem:[#allocation20 + $0x20] sm:$0xf]
    %v1044 = vld [vmem:[#allocation20 + $0x24] sm:$0xf]
    %v1045 = vld [vmem:[#allocation20 + $0x28] sm:$0xf]
    %v1046 = vld [vmem:[#allocation20 + $0x2c] sm:$0xf]
    %v1047 = vld [vmem:[#allocation20 + $0x30] sm:$0xf]
    %v1048 = vld [vmem:[#allocation20 + $0x34] sm:$0xf]
    %v1049 = vld [vmem:[#allocation20 + $0x38] sm:$0xf]
    %v1050 = vld [vmem:[#allocation20 + $0x3c] sm:$0xf]
    %v1051 = vld [vmem:[#allocation20 + $0x40] sm:$0xf]
    %v1052 = vld [vmem:[#allocation20 + $0x44] sm:$0xf]
    %v1053 = vld [vmem:[#allocation20 + $0x48] sm:$0xf]
    %v1054 = vld [vmem:[#allocation20 + $0x4c] sm:$0xf]
    %v1055 = vld [vmem:[#allocation20 + $0x50] sm:$0xf]
    %v1056 = vld [vmem:[#allocation20 + $0x54] sm:$0xf]
    %v1057 = vld [vmem:[#allocation20 + $0x58] sm:$0xf]
    %v1058 = vld [vmem:[#allocation20 + $0x5c] sm:$0xf]
    %v1059 = vld [vmem:[#allocation20 + $0x60] sm:$0xf]
    %v1060 = vld [vmem:[#allocation20 + $0x64] sm:$0xf]
    %v1061 = vld [vmem:[#allocation20 + $0x68] sm:$0xf]
    %v1062 = vld [vmem:[#allocation20 + $0x6c] sm:$0xf]
    %v1063 = vld [vmem:[#allocation20 + $0x70] sm:$0xf]
    %v1064 = vld [vmem:[#allocation20 + $0x74] sm:$0xf]
    %v1065 = vld [vmem:[#allocation20 + $0x78] sm:$0xf]
    %v1066 = vld [vmem:[#allocation20 + $0x7c] sm:$0xf]
    %v1067 = vld [vmem:[#allocation21] sm:$0x1]
    %v1069 = vlaneseq
    %v1070 = vshrl.u32 %v1069, 7
    %v1071 = vsub.s32 0, %v1070
    %v1072 = vrot.slane %v1067, %v1071
    %v1106 = vunpack.c.l.b16 %v1035
    %v1107 = vunpack.c.l.b16 %v1036
    %v1108 = vunpack.c.l.b16 %v1037
    %v1109 = vunpack.c.l.b16 %v1038
    %v1110 = vunpack.c.l.b16 %v1039
    %v1111 = vunpack.c.l.b16 %v1040
    %v1112 = vunpack.c.l.b16 %v1041
    %v1113 = vunpack.c.l.b16 %v1042
    %v1114 = vunpack.c.l.b16 %v1043
    %v1115 = vunpack.c.l.b16 %v1044
    %v1116 = vunpack.c.l.b16 %v1045
    %v1117 = vunpack.c.l.b16 %v1046
    %v1118 = vunpack.c.l.b16 %v1047
    %v1119 = vunpack.c.l.b16 %v1048
    %v1120 = vunpack.c.l.b16 %v1049
    %v1121 = vunpack.c.l.b16 %v1050
    %v1122 = vunpack.c.l.b16 %v1051
    %v1123 = vunpack.c.l.b16 %v1052
    %v1124 = vunpack.c.l.b16 %v1053
    %v1125 = vunpack.c.l.b16 %v1054
    %v1126 = vunpack.c.l.b16 %v1055
    %v1127 = vunpack.c.l.b16 %v1056
    %v1128 = vunpack.c.l.b16 %v1057
    %v1129 = vunpack.c.l.b16 %v1058
    %v1130 = vunpack.c.l.b16 %v1059
    %v1131 = vunpack.c.l.b16 %v1060
    %v1132 = vunpack.c.l.b16 %v1061
    %v1133 = vunpack.c.l.b16 %v1062
    %v1134 = vunpack.c.l.b16 %v1063
    %v1135 = vunpack.c.l.b16 %v1064
    %v1136 = vunpack.c.l.b16 %v1065
    %v1137 = vunpack.c.l.b16 %v1066
    %v1138 = vpack.c.b16 %v1107, %v1106
    %v1139 = vpack.c.b16 %v1109, %v1108
    %v1140 = vpack.c.b16 %v1111, %v1110
    %v1141 = vpack.c.b16 %v1113, %v1112
    %v1142 = vpack.c.b16 %v1115, %v1114
    %v1143 = vpack.c.b16 %v1117, %v1116
    %v1144 = vpack.c.b16 %v1119, %v1118
    %v1145 = vpack.c.b16 %v1121, %v1120
    %v1146 = vpack.c.b16 %v1123, %v1122
    %v1147 = vpack.c.b16 %v1125, %v1124
    %v1148 = vpack.c.b16 %v1127, %v1126
    %v1149 = vpack.c.b16 %v1129, %v1128
    %v1150 = vpack.c.b16 %v1131, %v1130
    %v1151 = vpack.c.b16 %v1133, %v1132
    %v1152 = vpack.c.b16 %v1135, %v1134
    %v1153 = vpack.c.b16 %v1137, %v1136
    %1170 = vmatprep.subr.bf16.mxu0 0
    %1171 = vmatpush1.bf16.msra.mxu0 %v1138
    %1172 = vmatprep.subr.bf16.mxu0 0
    %1173 = vmatpush1.bf16.msra.mxu0 %v1139
    %1174 = vmatprep.subr.bf16.mxu0 0
    %1175 = vmatpush1.bf16.msra.mxu0 %v1140
    %1176 = vmatprep.subr.bf16.mxu0 0
    %1177 = vmatpush1.bf16.msra.mxu0 %v1141
    %1178 = vmatprep.subr.bf16.mxu0 0
    %1179 = vmatpush1.bf16.msra.mxu0 %v1142
    %1180 = vmatprep.subr.bf16.mxu0 0
    %1181 = vmatpush1.bf16.msra.mxu0 %v1143
    %1182 = vmatprep.subr.bf16.mxu0 0
    %1183 = vmatpush1.bf16.msra.mxu0 %v1144
    %1184 = vmatprep.subr.bf16.mxu0 0
    %1185 = vmatpush1.bf16.msra.mxu0 %v1145
    %1186 = vmatprep.subr.bf16.mxu0 0
    %1187 = vmatpush1.bf16.msra.mxu0 %v1146
    %1188 = vmatprep.subr.bf16.mxu0 0
    %1189 = vmatpush1.bf16.msra.mxu0 %v1147
    %1190 = vmatprep.subr.bf16.mxu0 0
    %1191 = vmatpush1.bf16.msra.mxu0 %v1148
    %1192 = vmatprep.subr.bf16.mxu0 0
    %1193 = vmatpush1.bf16.msra.mxu0 %v1149
    %1194 = vmatprep.subr.bf16.mxu0 0
    %1195 = vmatpush1.bf16.msra.mxu0 %v1150
    %1196 = vmatprep.subr.bf16.mxu0 0
    %1197 = vmatpush1.bf16.msra.mxu0 %v1151
    %1198 = vmatprep.subr.bf16.mxu0 0
    %1199 = vmatpush1.bf16.msra.mxu0 %v1152
    %1200 = vmatprep.subr.bf16.mxu0 0
    %1201 = vmatpush1.bf16.msra.mxu0 %v1153
    %1202 = vmatprep.mubr.bf16.mxu0 %v1034
    %1203 = vmatmul.mubr.bf16.gmra.mrb[0].mxu0 %v1033
    %v1204 = vpop.f32.mrb[0].mxu0
    %v1205 = vadd.f32 %v1072, %v1204
    %v1206 = vpop.f32.mrb[0].mxu0
    %v1207 = vpop.f32.mrb[0].mxu0
    %v1208 = vadd.f32 %v1072, %v1207
    %v1209 = vpop.f32.mrb[0].mxu0
    %1210 = vdwg.mxu0
    %v1211 = vxor.u32 %v1205, 2147483648
    %v1212 = vxor.u32 %v1208, 2147483648
    %v1213 = vmul.f32 %v1211, 1.442695
    %v1214 = vpow.pop %v1213
    %v1215 = vmul.f32 %v1212, 1.442695
    %v1216 = vpow.pop %v1215
    %v1217 = vadd.f32 %v1214, 1.0
    %v1218 = vadd.f32 %v1216, 1.0
    %v1219 = vrcp.pop %v1217
    %v1220 = vmul.f32 1.0, %v1219
    %v1221 = vrcp.pop %v1218
    %v1222 = vmul.f32 1.0, %v1221
    %v1223 = vpack.c.bf16 %v1222, %v1220
    %v1224 = vld [vmem:[#allocation23] sm:$0xf]
    %v1225 = vld [vmem:[#allocation23 + $0x4] sm:$0xf]
    %v1226 = vld [vmem:[#allocation23 + $0x8] sm:$0xf]
    %v1227 = vld [vmem:[#allocation23 + $0xc] sm:$0xf]
    %v1228 = vld [vmem:[#allocation23 + $0x10] sm:$0xf]
    %v1229 = vld [vmem:[#allocation23 + $0x14] sm:$0xf]
    %v1230 = vld [vmem:[#allocation23 + $0x18] sm:$0xf]
    %v1231 = vld [vmem:[#allocation23 + $0x1c] sm:$0xf]
    %v1232 = vld [vmem:[#allocation23 + $0x20] sm:$0xf]
    %v1233 = vld [vmem:[#allocation23 + $0x24] sm:$0xf]
    %v1234 = vld [vmem:[#allocation23 + $0x28] sm:$0xf]
    %v1235 = vld [vmem:[#allocation23 + $0x2c] sm:$0xf]
    %v1236 = vld [vmem:[#allocation23 + $0x30] sm:$0xf]
    %v1237 = vld [vmem:[#allocation23 + $0x34] sm:$0xf]
    %v1238 = vld [vmem:[#allocation23 + $0x38] sm:$0xf]
    %v1239 = vld [vmem:[#allocation23 + $0x3c] sm:$0xf]
    %v1240 = vld [vmem:[#allocation24] sm:$0x1]
    %v1242 = vlaneseq
    %v1243 = vshrl.u32 %v1242, 7
    %v1244 = vsub.s32 0, %v1243
    %v1245 = vrot.slane %v1240, %v1244
    %v1263 = vunpack.c.l.b16 %v1224
    %v1264 = vunpack.c.l.b16 %v1225
    %v1265 = vunpack.c.l.b16 %v1226
    %v1266 = vunpack.c.l.b16 %v1227
    %v1267 = vunpack.c.l.b16 %v1228
    %v1268 = vunpack.c.l.b16 %v1229
    %v1269 = vunpack.c.l.b16 %v1230
    %v1270 = vunpack.c.l.b16 %v1231
    %v1271 = vunpack.c.l.b16 %v1232
    %v1272 = vunpack.c.l.b16 %v1233
    %v1273 = vunpack.c.l.b16 %v1234
    %v1274 = vunpack.c.l.b16 %v1235
    %v1275 = vunpack.c.l.b16 %v1236
    %v1276 = vunpack.c.l.b16 %v1237
    %v1277 = vunpack.c.l.b16 %v1238
    %v1278 = vunpack.c.l.b16 %v1239
    %v1279 = vpack.c.b16 %v1264, %v1263
    %v1280 = vpack.c.b16 %v1266, %v1265
    %v1281 = vpack.c.b16 %v1268, %v1267
    %v1282 = vpack.c.b16 %v1270, %v1269
    %v1283 = vpack.c.b16 %v1272, %v1271
    %v1284 = vpack.c.b16 %v1274, %v1273
    %v1285 = vpack.c.b16 %v1276, %v1275
    %v1286 = vpack.c.b16 %v1278, %v1277
    %1295 = vmatprep.subr.bf16.mxu0 0
    %1296 = vmatpush1.bf16.msra.mxu0 %v1279
    %1297 = vmatprep.subr.bf16.mxu0 0
    %1298 = vmatpush1.bf16.msra.mxu0 %v1280
    %1299 = vmatprep.subr.bf16.mxu0 0
    %1300 = vmatpush1.bf16.msra.mxu0 %v1281
    %1301 = vmatprep.subr.bf16.mxu0 0
    %1302 = vmatpush1.bf16.msra.mxu0 %v1282
    %1303 = vmatprep.subr.bf16.mxu0 0
    %1304 = vmatpush1.bf16.msra.mxu0 %v1283
    %1305 = vmatprep.subr.bf16.mxu0 0
    %1306 = vmatpush1.bf16.msra.mxu0 %v1284
    %1307 = vmatprep.subr.bf16.mxu0 0
    %1308 = vmatpush1.bf16.msra.mxu0 %v1285
    %1309 = vmatprep.subr.bf16.mxu0 0
    %1310 = vmatpush1.bf16.msra.mxu0 %v1286
    %1311 = vmatprep.subr.bf16.mxu0 0
    %1312 = vmatpush1.bf16.msra.mxu0 0
    %1313 = vmatprep.subr.bf16.mxu0 0
    %1314 = vmatpush1.bf16.msra.mxu0 0
    %1315 = vmatprep.subr.bf16.mxu0 0
    %1316 = vmatpush1.bf16.msra.mxu0 0
    %1317 = vmatprep.subr.bf16.mxu0 0
    %1318 = vmatpush1.bf16.msra.mxu0 0
    %1319 = vmatprep.subr.bf16.mxu0 0
    %1320 = vmatpush1.bf16.msra.mxu0 0
    %1321 = vmatprep.subr.bf16.mxu0 0
    %1322 = vmatpush1.bf16.msra.mxu0 0
    %1323 = vmatprep.subr.bf16.mxu0 0
    %1324 = vmatpush1.bf16.msra.mxu0 0
    %1325 = vmatprep.subr.bf16.mxu0 0
    %1326 = vmatpush1.bf16.msra.mxu0 0
    %1327 = vmatprep.mubr.bf16.mxu0 0
    %1328 = vmatmul.mubr.bf16.gmra.mrb[0].mxu0 %v1223
    %v1329 = vpop.f32.mrb[0].mxu0
    %v1330 = vadd.f32 %v1245, %v1329
    %v1331 = vpop.f32.mrb[0].mxu0
    %v1332 = vpop.f32.mrb[0].mxu0
    %v1333 = vadd.f32 %v1245, %v1332
    %v1334 = vpop.f32.mrb[0].mxu0
    %1335 = vdwg.mxu0
    %v1336 = vxor.u32 %v1330, 2147483648
    %v1337 = vxor.u32 %v1333, 2147483648
    %v1338 = vmul.f32 %v1336, 1.442695
    %v1339 = vpow.pop %v1338
    %v1340 = vmul.f32 %v1337, 1.442695
    %v1341 = vpow.pop %v1340
    %v1342 = vadd.f32 %v1339, 1.0
    %v1343 = vadd.f32 %v1341, 1.0
    %v1344 = vrcp.pop %v1342
    %v1345 = vmul.f32 1.0, %v1344
    %v1346 = vrcp.pop %v1343
    %v1347 = vmul.f32 1.0, %v1346
    %v1348 = vpack.c.bf16 %v1347, %v1345
    %v1349 = vld [vmem:[%s18] sm:$0xf]
    %v1350 = vld [vmem:[%s18 + $0x4] sm:$0xf]
    %v1351 = vld [vmem:[%s18 + $0x8] sm:$0xf]
    %v1352 = vld [vmem:[%s18 + $0xc] sm:$0xf]
    %v1353 = vld [vmem:[%s18 + $0x10] sm:$0xf]
    %v1354 = vld [vmem:[%s18 + $0x14] sm:$0xf]
    %v1355 = vld [vmem:[%s18 + $0x18] sm:$0xf]
    %v1356 = vld [vmem:[%s18 + $0x1c] sm:$0xf]
    %v1357 = vld [vmem:[%s18 + $0x20] sm:$0xf]
    %v1358 = vld [vmem:[%s18 + $0x24] sm:$0xf]
    %v1359 = vld [vmem:[%s18 + $0x28] sm:$0xf]
    %v1360 = vld [vmem:[%s18 + $0x2c] sm:$0xf]
    %v1361 = vld [vmem:[%s18 + $0x30] sm:$0xf]
    %v1362 = vld [vmem:[%s18 + $0x34] sm:$0xf]
    %v1363 = vld [vmem:[%s18 + $0x38] sm:$0xf]
    %v1364 = vld [vmem:[%s18 + $0x3c] sm:$0xf]
    %v1365 = vld [vmem:[%s19] sm:$0x1]
    %v1367 = vlaneseq
    %v1368 = vshrl.u32 %v1367, 7
    %v1369 = vsub.s32 0, %v1368
    %v1370 = vrot.slane %v1365, %v1369
    %v1388 = vunpack.c.l.b16 %v1349
    %v1389 = vunpack.c.l.b16 %v1350
    %v1390 = vunpack.c.l.b16 %v1351
    %v1391 = vunpack.c.l.b16 %v1352
    %v1392 = vunpack.c.l.b16 %v1353
    %v1393 = vunpack.c.l.b16 %v1354
    %v1394 = vunpack.c.l.b16 %v1355
    %v1395 = vunpack.c.l.b16 %v1356
    %v1396 = vunpack.c.l.b16 %v1357
    %v1397 = vunpack.c.l.b16 %v1358
    %v1398 = vunpack.c.l.b16 %v1359
    %v1399 = vunpack.c.l.b16 %v1360
    %v1400 = vunpack.c.l.b16 %v1361
    %v1401 = vunpack.c.l.b16 %v1362
    %v1402 = vunpack.c.l.b16 %v1363
    %v1403 = vunpack.c.l.b16 %v1364
    %v1404 = vpack.c.b16 %v1389, %v1388
    %v1405 = vpack.c.b16 %v1391, %v1390
    %v1406 = vpack.c.b16 %v1393, %v1392
    %v1407 = vpack.c.b16 %v1395, %v1394
    %v1408 = vpack.c.b16 %v1397, %v1396
    %v1409 = vpack.c.b16 %v1399, %v1398
    %v1410 = vpack.c.b16 %v1401, %v1400
    %v1411 = vpack.c.b16 %v1403, %v1402
    %1420 = vmatprep.subr.bf16.mxu0 0
    %1421 = vmatpush1.bf16.msra.mxu0 %v1404
    %1422 = vmatprep.subr.bf16.mxu0 0
    %1423 = vmatpush1.bf16.msra.mxu0 %v1405
    %1424 = vmatprep.subr.bf16.mxu0 0
    %1425 = vmatpush1.bf16.msra.mxu0 %v1406
    %1426 = vmatprep.subr.bf16.mxu0 0
    %1427 = vmatpush1.bf16.msra.mxu0 %v1407
    %1428 = vmatprep.subr.bf16.mxu0 0
    %1429 = vmatpush1.bf16.msra.mxu0 %v1408
    %1430 = vmatprep.subr.bf16.mxu0 0
    %1431 = vmatpush1.bf16.msra.mxu0 %v1409
    %1432 = vmatprep.subr.bf16.mxu0 0
    %1433 = vmatpush1.bf16.msra.mxu0 %v1410
    %1434 = vmatprep.subr.bf16.mxu0 0
    %1435 = vmatpush1.bf16.msra.mxu0 %v1411
    %1436 = vmatprep.subr.bf16.mxu0 0
    %1437 = vmatpush1.bf16.msra.mxu0 0
    %1438 = vmatprep.subr.bf16.mxu0 0
    %1439 = vmatpush1.bf16.msra.mxu0 0
    %1440 = vmatprep.subr.bf16.mxu0 0
    %1441 = vmatpush1.bf16.msra.mxu0 0
    %1442 = vmatprep.subr.bf16.mxu0 0
    %1443 = vmatpush1.bf16.msra.mxu0 0
    %1444 = vmatprep.subr.bf16.mxu0 0
    %1445 = vmatpush1.bf16.msra.mxu0 0
    %1446 = vmatprep.subr.bf16.mxu0 0
    %1447 = vmatpush1.bf16.msra.mxu0 0
    %1448 = vmatprep.subr.bf16.mxu0 0
    %1449 = vmatpush1.bf16.msra.mxu0 0
    %1450 = vmatprep.subr.bf16.mxu0 0
    %1451 = vmatpush1.bf16.msra.mxu0 0
    %1452 = vmatprep.mubr.bf16.mxu0 0
    %1453 = vmatmul.mubr.bf16.gmra.mrb[0].mxu0 %v1348
    %v1454 = vpop.f32.mrb[0].mxu0
    %v1455 = vadd.f32 %v1370, %v1454
    %v1456 = vpop.f32.mrb[0].mxu0
    %v1457 = vpop.f32.mrb[0].mxu0
    %v1458 = vadd.f32 %v1370, %v1457
    %v1459 = vpop.f32.mrb[0].mxu0
    %1460 = vdwg.mxu0
    %v1461 = vpack.c.bf16 %v1458, %v1455
    %v1463 = vunpack.c.l.b16 %v1461
    %v1464 = vunpack.c.h.b16 %v1461
    %v1465 = vpack.c.b16 %v1463, %v1463
    %v1466 = vpack.c.b16 %v1464, %v1464
    %1469 = vst [vmem:[#allocation27 + $0x8] sm:$0xf] %v1465
    %1470 = vst [vmem:[#allocation27 + $0x14] sm:$0xf] %v1466
    %v1471 = vmul.f32 %v1455, %v1455
    %v1472 = vmul.f32 %v1458, %v1458
    %1473 = vadd.xlane.f32.xlu0 %v1471
    %v1474 = vpop.xlane.xlu0 %1473
    %1475 = vadd.xlane.f32.xlu0 %v1472
    %v1476 = vpop.xlane.xlu0 %1475
    %v1477 = vld [vmem:[#allocation26] sm:$0xff]
    %v1478 = vld [vmem:[#allocation26 + $0x8] sm:$0xff]
    %v1479 = vld [vmem:[#allocation26 + $0x10] sm:$0xff]
    %v1480 = vld [vmem:[#allocation26 + $0x18] sm:$0xff]
    %v1481 = vld [vmem:[#allocation26 + $0x20] sm:$0xff]
    %v1482 = vld [vmem:[#allocation26 + $0x28] sm:$0xff]
    %v1483 = vld [vmem:[#allocation26 + $0x30] sm:$0xff]
    %v1484 = vld [vmem:[#allocation26 + $0x38] sm:$0xff]
    %v1485 = vld [vmem:[#allocation26 + $0x40] sm:$0xff]
    %v1486 = vld [vmem:[#allocation26 + $0x48] sm:$0xff]
    %v1487 = vld [vmem:[#allocation26 + $0x50] sm:$0xff]
    %v1488 = vld [vmem:[#allocation26 + $0x58] sm:$0xff]
    %v1489 = vld [vmem:[#allocation26 + $0x60] sm:$0xff]
    %v1490 = vld [vmem:[#allocation26 + $0x68] sm:$0xff]
    %v1491 = vld [vmem:[#allocation26 + $0x70] sm:$0xff]
    %v1492 = vld [vmem:[#allocation26 + $0x78] sm:$0xff]
    %1493 = vmatprep.subr.mxu0 0.0
    %1494 = vmatpush1.xpose.msra.mxu0 %v1477
    %1495 = vmatprep.subr.mxu0 0.0
    %1496 = vmatpush1.xpose.msra.mxu0 %v1478
    %1497 = vmatprep.subr.mxu0 0.0
    %1498 = vmatpush1.xpose.msra.mxu0 %v1479
    %1499 = vmatprep.subr.mxu0 0.0
    %1500 = vmatpush1.xpose.msra.mxu0 %v1480
    %1501 = vmatprep.subr.mxu0 0.0
    %1502 = vmatpush1.xpose.msra.mxu0 %v1481
    %1503 = vmatprep.subr.mxu0 0.0
    %1504 = vmatpush1.xpose.msra.mxu0 %v1482
    %1505 = vmatprep.subr.mxu0 0.0
    %1506 = vmatpush1.xpose.msra.mxu0 %v1483
    %1507 = vmatprep.subr.mxu0 0.0
    %1508 = vmatpush1.xpose.msra.mxu0 %v1484
    %1509 = vmatprep.subr.mxu0 0.0
    %1510 = vmatpush1.xpose.msra.mxu0 %v1485
    %1511 = vmatprep.subr.mxu0 0.0
    %1512 = vmatpush1.xpose.msra.mxu0 %v1486
    %1513 = vmatprep.subr.mxu0 0.0
    %1514 = vmatpush1.xpose.msra.mxu0 %v1487
    %1515 = vmatprep.subr.mxu0 0.0
    %1516 = vmatpush1.xpose.msra.mxu0 %v1488
    %1517 = vmatprep.subr.mxu0 0.0
    %1518 = vmatpush1.xpose.msra.mxu0 %v1489
    %1519 = vmatprep.subr.mxu0 0.0
    %1520 = vmatpush1.xpose.msra.mxu0 %v1490
    %1521 = vmatprep.subr.mxu0 0.0
    %1522 = vmatpush1.xpose.msra.mxu0 %v1491
    %1523 = vmatprep.subr.mxu0 0.0
    %1524 = vmatpush1.xpose.msra.mxu0 %v1492
    %1525 = vmatprep.subr.mxu0 0.0
    %1526 = vmatpush1.xpose.msra.mxu0 0.0
    %1527 = vmatprep.subr.mxu0 0.0
    %1528 = vmatpush1.xpose.msra.mxu0 0.0
    %1529 = vmatprep.subr.mxu0 0.0
    %1530 = vmatpush1.xpose.msra.mxu0 0.0
    %1531 = vmatprep.subr.mxu0 0.0
    %1532 = vmatpush1.xpose.msra.mxu0 0.0
    %1533 = vmatprep.subr.mxu0 0.0
    %1534 = vmatpush1.xpose.msra.mxu0 0.0
    %1535 = vmatprep.subr.mxu0 0.0
    %1536 = vmatpush1.xpose.msra.mxu0 0.0
    %1537 = vmatprep.subr.mxu0 0.0
    %1538 = vmatpush1.xpose.msra.mxu0 0.0
    %1539 = vmatprep.subr.mxu0 0.0
    %1540 = vmatpush1.xpose.msra.mxu0 0.0
    %1541 = vmatprep.subr.mxu0 0.0
    %1542 = vmatpush1.xpose.msra.mxu0 0.0
    %1543 = vmatprep.subr.mxu0 0.0
    %1544 = vmatpush1.xpose.msra.mxu0 0.0
    %1545 = vmatprep.subr.mxu0 0.0
    %1546 = vmatpush1.xpose.msra.mxu0 0.0
    %1547 = vmatprep.subr.mxu0 0.0
    %1548 = vmatpush1.xpose.msra.mxu0 0.0
    %1549 = vmatprep.subr.mxu0 0.0
    %1550 = vmatpush1.xpose.msra.mxu0 0.0
    %1551 = vmatprep.subr.mxu0 0.0
    %1552 = vmatpush1.xpose.msra.mxu0 0.0
    %1553 = vmatprep.subr.mxu0 0.0
    %1554 = vmatpush1.xpose.msra.mxu0 0.0
    %1555 = vmatprep.subr.mxu0 0.0
    %1556 = vmatpush1.xpose.msra.mxu0 0.0
    %1557 = vmatprep.mubr.f32.mxu0 0.0
    %1558 = vmatmul.mubr.f32.gmra.mrb[0].mxu0 %v1455
    %v1559 = vpop.f32.mrb[0].mxu0
    %v1560 = vadd.f32 0.0, %v1559
    %v1561 = vpop.f32.mrb[0].mxu0
    %1562 = vmatprep.mubr.f32.mxu0 0.0
    %1563 = vmatmul.mubr.f32.gmra.mrb[0].mxu0 %v1458
    %v1564 = vpop.f32.mrb[0].mxu0
    %v1565 = vadd.f32 0.0, %v1564
    %v1566 = vpop.f32.mrb[0].mxu0
    %1567 = vdwg.mxu0
    %v1568 = vld [vmem:[%s21] sm:$0x1]
    %v1570 = vlaneseq
    %v1571 = vshrl.u32 %v1570, 7
    %v1572 = vsub.s32 0, %v1571
    %v1573 = vrot.slane %v1568, %v1572
    %v1575 = vadd.f32 %v1474, %v1573
    %v1576 = vadd.f32 %v1476, %v1573
    %v1577 = vmul.f32 %v1560, 2.0
    %v1578 = vmul.f32 %v1565, 2.0
    %v1579 = vsub.f32 %v1575, %v1577
    %v1580 = vsub.f32 %v1576, %v1578
    %v1581 = vmax.f32 %v1579, 0.0
    %v1582 = vmax.f32 %v1580, 0.0
    %v1583 = vadd.f32 %v1581, 1.0
    %v1584 = vadd.f32 %v1582, 1.0
    %v1585 = vrcp.pop %v1583
    %v1586 = vmul.f32 1.0, %v1585
    %v1587 = vrcp.pop %v1584
    %v1588 = vmul.f32 1.0, %v1587
    %1589 = vadd.xlane.f32.xlu0 %v1586
    %v1590 = vpop.xlane.xlu0 %1589
    %1591 = vadd.xlane.f32.xlu0 %v1588
    %v1592 = vpop.xlane.xlu0 %1591
    %v1593 = vrcp.pop %v1590
    %v1594 = vrcp.pop %v1592
    %v1595 = vmul.f32 %v1586, %v1593
    %v1596 = vmul.f32 %v1588, %v1594
    %1597 = vst [vmem:[#allocation28] sm:$0xff] %v1595
    %1598 = vst [vmem:[#allocation28 + $0x8] sm:$0xff] %v1596
    // Predicated region
    $region150: #{tpu_custom_call.1} parent=1 // pred_check
      _
    $region151: #{tpu_custom_call.1} parent=1 // pred_check_branch
      %1600 = sbr.rel (0) target = $region153
    $region152: #{tpu_custom_call.1} parent=1 // pred_region
      %s1602 = ssub.s32 384, 384
      %1603 = vsyncadd [#allocation5], %s1602
      %s1604 = sshll.u32 [#allocation27], 4
      %s1605 = int_to_ptr.vmem [resolvable:$true] %s1604
      %1610 = dma.vmem_to_hbm [thread:$0]  %s1605, 384, %s22, [#allocation5], 192, 192, 12
    $region153: #{tpu_custom_call.1} parent=1 // pred_fallthru
      _
    // Predicated region
    $region154: #{tpu_custom_call.1} parent=1 // pred_check
      _
    $region155: #{tpu_custom_call.1} parent=1 // pred_check_branch
      %1612 = sbr.rel (0) target = $region157
    $region156: #{tpu_custom_call.1} parent=1 // pred_region
      %s1614 = ssub.s32 256, 256
      %1615 = vsyncadd [#allocation29], %s1614
      %s1616 = sshll.u32 [#allocation28], 4
      %s1617 = int_to_ptr.vmem [resolvable:$true] %s1616
      %1622 = dma.vmem_to_hbm [thread:$0]  %s1617, 256, %s23, [#allocation29], 128, 128, 8
    $region157: #{tpu_custom_call.1} parent=1 // pred_fallthru
      _
    // Predicated region
    $region158: #{tpu_custom_call.1} parent=1 // pred_check
      _
    $region159: #{tpu_custom_call.1} parent=1 // pred_check_branch
      %1624 = sbr.rel (0) target = $region161
    $region160: #{tpu_custom_call.1} parent=1 // pred_region
      %1625 = dma.done [#allocation5], 384
    $region161: #{tpu_custom_call.1} parent=1 // pred_fallthru
      _
    // Predicated region
    $region162: #{tpu_custom_call.1} parent=1 // pred_check
      _
    $region163: #{tpu_custom_call.1} parent=1 // pred_check_branch
      %1627 = sbr.rel (0) target = $region165
    $region164: #{tpu_custom_call.1} parent=1 // pred_region
      %1628 = dma.done [#allocation29], 256
    $region165: #{tpu_custom_call.1} parent=1 // pred_fallthru
      _
    %1629 = vsyncpa [#allocation4], 1
    %1630 = vsyncpa [#allocation7], 1
    %1631 = vsyncpa [#allocation10], 1
    %1632 = vsyncpa [#allocation13], 1
    %1633 = vsyncpa [#allocation16], 1
    %1634 = vsyncpa [#allocation19], 1
    %1635 = vsyncpa [#allocation22], 1
    %1636 = vsyncpa [#allocation25], 1
    %1637 = vsyncpa [#allocation5], 1
    %1638 = vsyncpa [#allocation29], 1

</llo_original>
